<compile_context>
chip_gen: v6e
topology: v6e:2x2x1
jax: 0.10.0
libtpu: 0.0.40
codegen_flags: <defaults>
</compile_context>

<pallas_src>
import functools

import jax
import jax.numpy as jnp
from jax import lax
from jax.experimental import pallas as pl
from jax.experimental.pallas import tpu as pltpu


# --------------------------------------------------------------------- utils
def _round_up(x, m):
    return ((x + m - 1) // m) * m


def _pick_divisor(dim, target, align):
    """Largest divisor of `dim` <= target that is a multiple of `align`, or None."""
    for cand in range(min(dim, target), 0, -1):
        if dim % cand == 0 and cand % align == 0:
            return cand
    return None


def _tile_and_pad(dim, target, align):
    """Tile size (multiple of align) plus padded dim (multiple of tile).

    Prefers an exact divisor (no padding); otherwise pads up instead of falling
    back to a full-dim block (which blows VMEM at real vocab sizes)."""
    t = _pick_divisor(dim, target, align)
    if t is not None:
        return t, dim
    if dim >= target:
        return target, _round_up(dim, target)
    t = _round_up(dim, align)
    return t, t


@functools.lru_cache(maxsize=None)
def _vmem_cap_bytes():
    try:
        return int(0.8 * pltpu.get_tpu_info().vmem_capacity_bytes)
    except Exception:
        return int(0.8 * (128 << 20))


@functools.lru_cache(maxsize=None)
def _is_v7x():
    try:
        return "v7" in jax.devices()[0].device_kind.lower()
    except Exception:
        return False


def _compiler_params(dims, resident_bytes):
    limit = max(int(1.5 * resident_bytes), 8 << 20)   # headroom over estimate
    limit = min(limit, _vmem_cap_bytes())             # per-generation cap
    return pltpu.CompilerParams(dimension_semantics=dims,
                                vmem_limit_bytes=limit)


# ------------------------------------------ hoisted input projection (x@Wih+b)
def _input_proj_kernel(x_ref, w_ref, b_ref, o_ref):
    z = (jnp.dot(x_ref[...], w_ref[...], preferred_element_type=jnp.float32)
         + b_ref[...].astype(jnp.float32))
    o_ref[...] = z.astype(o_ref.dtype)            # bf16 store (halves HBM traffic)


def input_projection(x2d, w_ih, b, *, tm_target=256, tg_target=2048):
    """x2d: (M, F) bf16, w_ih: (F, 4H) bf16, b: (1, 4H) f32 -> (M, 4H) bf16."""
    M, F = x2d.shape
    G = w_ih.shape[-1]
    tm, Mp = _tile_and_pad(M, tm_target, 16)      # bf16 out: 16-row sublane packs
    tg = _pick_divisor(G, tg_target, 128) or G    # G = 4H, normally 128-aligned
    if Mp != M:
        x2d = jnp.pad(x2d, ((0, Mp - M), (0, 0)))

    resident = 2 * (tm * F * 2 + F * tg * 2 + tg * 4 + tm * tg * 2)
    out = pl.pallas_call(
        _input_proj_kernel,
        out_shape=jax.ShapeDtypeStruct((Mp, G), jnp.bfloat16),
        grid_spec=pltpu.PrefetchScalarGridSpec(
            num_scalar_prefetch=0,
            grid=(Mp // tm, G // tg),
            in_specs=[
                pl.BlockSpec((tm, F), lambda i, j: (i, 0)),
                pl.BlockSpec((F, tg), lambda i, j: (0, j)),
                pl.BlockSpec((1, tg), lambda i, j: (0, j)),
            ],
            out_specs=pl.BlockSpec((tm, tg), lambda i, j: (i, j)),
        ),
        compiler_params=_compiler_params(("parallel", "parallel"), resident),
    )(x2d, w_ih, b)
    return out[:M] if Mp != M else out


# -------------------------------------------------- LSTM recurrence (h @ Whh)
def _lstm_recurrence_kernel(z_ref, h0_ref, c0_ref, whh_ref,
                            y_ref, hT_ref, cT_ref, h_sc, c_sc):
    t_blk = pl.program_id(1)

    @pl.when(t_blk == 0)
    def _():
        h_sc[...] = h0_ref[...].astype(jnp.float32)
        c_sc[...] = c0_ref[...].astype(jnp.float32)

    H = h_sc.shape[-1]
    t_block = y_ref.shape[0]
    w_hh = whh_ref[...]                           # (H, 4H) bf16, VMEM resident

    def step(tl, carry):
        h, c = carry
        # only the hidden-to-hidden matmul sits on the sequential path; the
        # x @ W_ih + b part was precomputed (bf16) in input_projection.
        z = (z_ref[tl].astype(jnp.float32)
             + jnp.dot(h.astype(w_hh.dtype), w_hh,
                       preferred_element_type=jnp.float32))
        # PyTorch gate order [i, f, g, o]; gate math kept in f32.
        i_g = jax.nn.sigmoid(z[:, 0 * H:1 * H])
        f_g = jax.nn.sigmoid(z[:, 1 * H:2 * H])
        g_g = jnp.tanh(z[:, 2 * H:3 * H])
        o_g = jax.nn.sigmoid(z[:, 3 * H:4 * H])
        c_new = f_g * c + i_g * g_g
        h_new = o_g * jnp.tanh(c_new)
        y_ref[tl] = h_new.astype(y_ref.dtype)
        return h_new, c_new

    h, c = lax.fori_loop(0, t_block, step, (h_sc[...], c_sc[...]), unroll=True)
    h_sc[...] = h
    c_sc[...] = c

    @pl.when(t_blk == pl.num_programs(1) - 1)
    def _():
        hT_ref[...] = h.astype(hT_ref.dtype)
        cT_ref[...] = c.astype(cT_ref.dtype)


def lstm_recurrence(z, h0, c0, w_hh, *, t_block=16, batch_splits=1):
    """z: (T, B, 4H) bf16 precomputed gates, h0/c0: (B, H) f32, w_hh: (H, 4H) bf16.
    Returns y (T, B, H) bf16, hT (B, H) f32, cT (B, H) f32."""
    T, B, G = z.shape
    H = w_hh.shape[0]
    tb = _pick_divisor(T, t_block, 1) or T

    # Only v7x has a 2nd TensorCore worth splitting the batch over, and only
    # when each half keeps >= 16 rows (bf16 sublane packing for the y store).
    if (batch_splits < 2 or not _is_v7x() or B % batch_splits != 0
            or (B // batch_splits) < 16 or (B // batch_splits) % 8 != 0):
        batch_splits = 1
    Bb = B // batch_splits

    resident = (2 * tb * Bb * G * 2            # z blocks (bf16, double buffered)
                + 2 * Bb * H * 4               # h0, c0 (single buffered)
                + H * G * 2                    # w_hh (bf16, single buffered)
                + 2 * tb * Bb * H * 2          # y blocks
                + 2 * 2 * Bb * H * 4           # hT, cT
                + 2 * Bb * H * 4)              # f32 scratch

    return pl.pallas_call(
        _lstm_recurrence_kernel,
        out_shape=(
            jax.ShapeDtypeStruct((T, B, H), jnp.bfloat16),
            jax.ShapeDtypeStruct((B, H), jnp.float32),
            jax.ShapeDtypeStruct((B, H), jnp.float32),
        ),
        grid_spec=pltpu.PrefetchScalarGridSpec(
            num_scalar_prefetch=0,
            grid=(batch_splits, T // tb),
            in_specs=[
                pl.BlockSpec((tb, Bb, G), lambda b, t: (t, b, 0)),
                # constant block index across the t axis -> single buffer
                pl.BlockSpec((Bb, H), lambda b, t: (b, 0),
                             pipeline_mode=pl.Buffered(1)),
                pl.BlockSpec((Bb, H), lambda b, t: (b, 0),
                             pipeline_mode=pl.Buffered(1)),
                pl.BlockSpec((H, G), lambda b, t: (0, 0),
                             pipeline_mode=pl.Buffered(1)),
            ],
            out_specs=[
                pl.BlockSpec((tb, Bb, H), lambda b, t: (t, b, 0)),
                pl.BlockSpec((Bb, H), lambda b, t: (b, 0)),
                pl.BlockSpec((Bb, H), lambda b, t: (b, 0)),
            ],
            scratch_shapes=[
                pltpu.VMEM((Bb, H), jnp.float32),
                pltpu.VMEM((Bb, H), jnp.float32),
            ],
        ),
        compiler_params=_compiler_params(("parallel", "arbitrary"), resident),
    )(z, h0, c0, w_hh)


# ------------------------------- decoder: tiled matmul + online logsumexp ----
def _logits_lse_kernel(x_ref, w_ref, b_ref, logits_ref, lse_ref, m_sc, s_sc):
    j = pl.program_id(1)

    @pl.when(j == 0)
    def _():
        m_sc[...] = jnp.full(m_sc.shape, -jnp.inf, jnp.float32)
        s_sc[...] = jnp.zeros(s_sc.shape, jnp.float32)

    logits = (jnp.dot(x_ref[...], w_ref[...],
                      preferred_element_type=jnp.float32)
              + b_ref[...].astype(jnp.float32))           # (tn, tv) f32
    logits_bf = logits.astype(logits_ref.dtype)
    logits_ref[...] = logits_bf                           # bf16 intermediate
    # LSE from the stored (rounded) values so log_softmax is exactly normalized.
    lg = logits_bf.astype(jnp.float32)

    m_prev = m_sc[...]
    m_new = jnp.maximum(m_prev, jnp.max(lg, axis=-1, keepdims=True))
    s_sc[...] = (s_sc[...] * jnp.exp(m_prev - m_new)
                 + jnp.sum(jnp.exp(lg - m_new), axis=-1, keepdims=True))
    m_sc[...] = m_new

    @pl.when(j == pl.num_programs(1) - 1)
    def _():
        lse_ref[...] = m_new + jnp.log(s_sc[...])


def _sub_lse_kernel(logits_ref, lse_ref, o_ref):
    o_ref[...] = logits_ref[...].astype(jnp.float32) - lse_ref[...]


def decode_log_softmax(x2d, w_dec_t, b_dec, *, tn_target=512, tv_target=2048):
    """x2d: (N, H) bf16, w_dec_t: (H, V) bf16, b_dec: (1, V) f32 -> (N, V) f32."""
    N, H = x2d.shape
    V = w_dec_t.shape[-1]
    tn, Np = _tile_and_pad(N, tn_target, 16)
    tv, Vp = _tile_and_pad(V, tv_target, 128)
    if Np != N:
        x2d = jnp.pad(x2d, ((0, Np - N), (0, 0)))
    if Vp != V:
        w_dec_t = jnp.pad(w_dec_t, ((0, 0), (0, Vp - V)))
        # pad-column bias is hugely negative -> exp() == 0, no LSE contribution
        b_dec = jnp.pad(b_dec, ((0, 0), (0, Vp - V)), constant_values=-1e30)

    resident1 = (2 * (tn * H * 2 + H * tv * 2 + tv * 4 + tn * tv * 2 + tn * 4)
                 + 2 * tn * 4)
    logits, lse = pl.pallas_call(
        _logits_lse_kernel,
        out_shape=(jax.ShapeDtypeStruct((Np, Vp), jnp.bfloat16),
                   jax.ShapeDtypeStruct((Np, 1), jnp.float32)),
        grid_spec=pltpu.PrefetchScalarGridSpec(
            num_scalar_prefetch=0,
            grid=(Np // tn, Vp // tv),
            in_specs=[
                pl.BlockSpec((tn, H), lambda i, j: (i, 0)),
                pl.BlockSpec((H, tv), lambda i, j: (0, j)),
                pl.BlockSpec((1, tv), lambda i, j: (0, j)),
            ],
            out_specs=[
                pl.BlockSpec((tn, tv), lambda i, j: (i, j)),
                pl.BlockSpec((tn, 1), lambda i, j: (i, 0)),
            ],
            scratch_shapes=[pltpu.VMEM((tn, 1), jnp.float32),
                            pltpu.VMEM((tn, 1), jnp.float32)],
        ),
        compiler_params=_compiler_params(("parallel", "arbitrary"), resident1),
    )(x2d, w_dec_t, b_dec)

    resident2 = 2 * (tn * tv * 2 + tn * 4 + tn * tv * 4)
    out = pl.pallas_call(
        _sub_lse_kernel,
        out_shape=jax.ShapeDtypeStruct((Np, Vp), jnp.float32),
        grid_spec=pltpu.PrefetchScalarGridSpec(
            num_scalar_prefetch=0,
            grid=(Np // tn, Vp // tv),
            in_specs=[
                pl.BlockSpec((tn, tv), lambda i, j: (i, j)),
                pl.BlockSpec((tn, 1), lambda i, j: (i, 0)),
            ],
            out_specs=pl.BlockSpec((tn, tv), lambda i, j: (i, j)),
        ),
        compiler_params=_compiler_params(("parallel", "parallel"), resident2),
    )(logits, lse)
    return out[:N, :V] if (Np != N or Vp != V) else out


# --------------------------------------------------------------- full forward
def rnn_model_forward(tokens, hidden, params, *, t_block=16, batch_splits=1,
                      dec_tn_target=512, dec_tv_target=2048):
    """tokens: (T, B) int32; hidden: (h0, c0) each (nlayers, B, nhid) f32."""
    h0, c0 = hidden
    x = params["encoder"][tokens]              # (T, B, ninp) bf16, XLA gather
    T, B, _ = x.shape

    hs, cs = [], []
    for layer, (w_ih, w_hh, b) in enumerate(params["lstm"]):
        F_in = x.shape[-1]
        # time-independent part hoisted out of the recurrence:
        z = input_projection(x.reshape(T * B, F_in), w_ih, b)
        z = z.reshape(T, B, w_ih.shape[-1])
        x, hT, cT = lstm_recurrence(z, h0[layer], c0[layer], w_hh,
                                    t_block=t_block, batch_splits=batch_splits)
        hs.append(hT)
        cs.append(cT)

    H = x.shape[-1]
    log_probs = decode_log_softmax(x.reshape(T * B, H),
                                   params["dec_w_t"], params["dec_b"],
                                   tn_target=dec_tn_target,
                                   tv_target=dec_tv_target)
    return log_probs, (jnp.stack(hs, axis=0), jnp.stack(cs, axis=0))


# --------------------------------------------------------- deterministic init
def init_params(key, ntoken, ninp, nhid, nlayers, wdtype=jnp.bfloat16):
    keys = jax.random.split(key, 2 + 4 * nlayers)
    initrange = 0.1
    enc = jax.random.uniform(keys[0], (ntoken, ninp), jnp.float32,
                             -initrange, initrange).astype(wdtype)
    dec_w = jax.random.uniform(keys[1], (ntoken, nhid), jnp.float32,
                               -initrange, initrange)
    dec_b = jnp.zeros((1, ntoken), jnp.float32)

    stdv = 1.0 / (nhid ** 0.5)                  # PyTorch nn.LSTM default init
    lstm = []
    for layer in range(nlayers):
        in_f = ninp if layer == 0 else nhid
        k = keys[2 + 4 * layer: 2 + 4 * (layer + 1)]
        w_ih = jax.random.uniform(k[0], (4 * nhid, in_f), jnp.float32, -stdv, stdv)
        w_hh = jax.random.uniform(k[1], (4 * nhid, nhid), jnp.float32, -stdv, stdv)
        b_ih = jax.random.uniform(k[2], (4 * nhid,), jnp.float32, -stdv, stdv)
        b_hh = jax.random.uniform(k[3], (4 * nhid,), jnp.float32, -stdv, stdv)
        lstm.append((w_ih.T.astype(wdtype),            # (in_f, 4H) bf16
                     w_hh.T.astype(wdtype),            # (H, 4H)  bf16
                     (b_ih + b_hh)[None, :]))          # (1, 4H)  f32

    return {"encoder": enc, "lstm": lstm,
            "dec_w_t": dec_w.T.astype(wdtype), "dec_b": dec_b}


# --------------------------------------------------- pure-JAX reference check
def reference_forward(tokens, hidden, params):
    h0, c0 = hidden
    x = params["encoder"][tokens]
    T, B, _ = x.shape
    hs, cs = [], []
    for layer, (w_ih, w_hh, b) in enumerate(params["lstm"]):
        H = w_hh.shape[0]
        z_x = (jnp.einsum("tbf,fg->tbg", x, w_ih,
                          preferred_element_type=jnp.float32) + b)
        h = h0[layer].astype(jnp.float32)
        c = c0[layer].astype(jnp.float32)
        ys = []
        for t in range(T):
            z = z_x[t] + jnp.dot(h.astype(w_hh.dtype), w_hh,
                                 preferred_element_type=jnp.float32)
            i_g = jax.nn.sigmoid(z[:, 0 * H:1 * H])
            f_g = jax.nn.sigmoid(z[:, 1 * H:2 * H])
            g_g = jnp.tanh(z[:, 2 * H:3 * H])
            o_g = jax.nn.sigmoid(z[:, 3 * H:4 * H])
            c = f_g * c + i_g * g_g
            h = o_g * jnp.tanh(c)
            ys.append(h.astype(jnp.bfloat16))
        x = jnp.stack(ys, axis=0)
        hs.append(h)
        cs.append(c)
    H = x.shape[-1]
    logits = (jnp.dot(x.reshape(T * B, H), params["dec_w_t"],
                      preferred_element_type=jnp.float32) + params["dec_b"])
    return (jax.nn.log_softmax(logits, axis=-1),
            (jnp.stack(hs, 0), jnp.stack(cs, 0)))


if __name__ == "__main__":
    # small demo sizes; ntoken=250 is deliberately NOT 128-aligned so the
    # decoder's V-padding path (the real-vocab fix) is exercised.
    ntoken, ninp, nhid, nlayers = 250, 128, 128, 2
    T, B = 8, 16

    key = jax.random.PRNGKey(0)
    k_par, k_tok = jax.random.split(key)
    params = init_params(k_par, ntoken, ninp, nhid, nlayers)

    tokens = jax.random.randint(k_tok, (T, B), 0, ntoken, dtype=jnp.int32)
    h0 = jnp.zeros((nlayers, B, nhid), jnp.float32)
    c0 = jnp.zeros((nlayers, B, nhid), jnp.float32)

    fwd = jax.jit(functools.partial(
        rnn_model_forward, params=params,
        t_block=4,            # 2 time-blocks -> exercises carried h/c scratch
        batch_splits=2,       # gets clamped to 1 unless on v7x with Bb >= 16
        dec_tv_target=128))   # 2 V-tiles -> exercises online logsumexp + V pad
    log_probs, (hN, cN) = fwd(tokens, (h0, c0))
    jax.block_until_ready((log_probs, hN, cN))

    assert log_probs.shape == (T * B, ntoken)
    assert hN.shape == (nlayers, B, nhid) and cN.shape == (nlayers, B, nhid)
    # log_softmax rows must sum to ~1 in prob space
    assert bool(jnp.allclose(jnp.exp(log_probs).sum(-1), 1.0, atol=1e-3))

    ref_lp, (ref_h, ref_c) = jax.jit(reference_forward)(tokens, (h0, c0), params)
    assert bool(jnp.allclose(log_probs, ref_lp, atol=1e-2, rtol=1e-2))
    assert bool(jnp.allclose(hN, ref_h, atol=1e-2, rtol=1e-2))
    assert bool(jnp.allclose(cN, ref_c, atol=1e-2, rtol=1e-2))

    print("KERNEL_OK")
</pallas_src>

<mosaic_0001>
module attributes {stable_mosaic.version = 11 : i64} {
  func.func @_lstm_recurrence_kernel(%arg0: i32, %arg1: i32, %arg2: memref<4x16x512xbf16, #tpu.memory_space<vmem>>, %arg3: memref<16x128xf32, #tpu.memory_space<vmem>>, %arg4: memref<16x128xf32, #tpu.memory_space<vmem>>, %arg5: memref<128x512xbf16, #tpu.memory_space<vmem>>, %arg6: memref<4x16x128xbf16, #tpu.memory_space<vmem>>, %arg7: memref<16x128xf32, #tpu.memory_space<vmem>>, %arg8: memref<16x128xf32, #tpu.memory_space<vmem>>, %arg9: memref<16x128xf32, #tpu.memory_space<vmem>>, %arg10: memref<16x128xf32, #tpu.memory_space<vmem>>) attributes {dimension_semantics = [#tpu.dimension_semantics<parallel>, #tpu.dimension_semantics<arbitrary>], iteration_bounds = array<i64: 1, 2>, scalar_prefetch = 0 : i64, scratch_operands = 2 : i64, tpu.core_type = #tpu.core_type<tc>, window_params = [{transform_indices = @transform_0, window_bounds = array<i64: 4, 16, 512>}, {pipeline_mode = #tpu.pipeline_mode<synchronous>, transform_indices = @transform_1, window_bounds = array<i64: 16, 128>}, {pipeline_mode = #tpu.pipeline_mode<synchronous>, transform_indices = @transform_2, window_bounds = array<i64: 16, 128>}, {pipeline_mode = #tpu.pipeline_mode<synchronous>, transform_indices = @transform_3, window_bounds = array<i64: 128, 512>}, {transform_indices = @transform_4, window_bounds = array<i64: 4, 16, 128>}, {transform_indices = @transform_5, window_bounds = array<i64: 16, 128>}, {transform_indices = @transform_6, window_bounds = array<i64: 16, 128>}]} {
    %c0_i32 = arith.constant 0 : i32
    %0 = arith.cmpi eq, %arg1, %c0_i32 : i32
    %1 = arith.extui %0 : i1 to i32
    %c0_i32_0 = arith.constant 0 : i32
    %2 = arith.cmpi ne, %1, %c0_i32_0 : i32
    scf.if %2 {
      %c0_44 = arith.constant 0 : index
      %c0_45 = arith.constant 0 : index
      %159 = vector.load %arg3[%c0_44, %c0_45] : memref<16x128xf32, #tpu.memory_space<vmem>>, vector<16x128xf32>
      %c0_46 = arith.constant 0 : index
      %c0_47 = arith.constant 0 : index
      %160 = vector.load %arg9[%c0_46, %c0_47] : memref<16x128xf32, #tpu.memory_space<vmem>>, vector<16x128xf32>
      tpu.vector_store %arg9[%c0_46, %c0_47], %159 {strides = array<i32>} : memref<16x128xf32, #tpu.memory_space<vmem>>, vector<16x128xf32>,
      %c0_48 = arith.constant 0 : index
      %c0_49 = arith.constant 0 : index
      %161 = vector.load %arg4[%c0_48, %c0_49] : memref<16x128xf32, #tpu.memory_space<vmem>>, vector<16x128xf32>
      %c0_50 = arith.constant 0 : index
      %c0_51 = arith.constant 0 : index
      %162 = vector.load %arg10[%c0_50, %c0_51] : memref<16x128xf32, #tpu.memory_space<vmem>>, vector<16x128xf32>
      tpu.vector_store %arg10[%c0_50, %c0_51], %161 {strides = array<i32>} : memref<16x128xf32, #tpu.memory_space<vmem>>, vector<16x128xf32>,
    } else {
    }
    %c0 = arith.constant 0 : index
    %c0_1 = arith.constant 0 : index
    %3 = vector.load %arg5[%c0, %c0_1] : memref<128x512xbf16, #tpu.memory_space<vmem>>, vector<128x512xbf16>
    %c0_2 = arith.constant 0 : index
    %c0_3 = arith.constant 0 : index
    %4 = vector.load %arg9[%c0_2, %c0_3] : memref<16x128xf32, #tpu.memory_space<vmem>>, vector<16x128xf32>
    %c0_4 = arith.constant 0 : index
    %c0_5 = arith.constant 0 : index
    %5 = vector.load %arg10[%c0_4, %c0_5] : memref<16x128xf32, #tpu.memory_space<vmem>>, vector<16x128xf32>
    %c0_i32_6 = arith.constant 0 : i32
    %6 = arith.index_cast %c0_i32_6 : i32 to index
    %c0_7 = arith.constant 0 : index
    %c0_8 = arith.constant 0 : index
    %7 = vector.load %arg2[%6, %c0_7, %c0_8] : memref<4x16x512xbf16, #tpu.memory_space<vmem>>, vector<1x16x512xbf16>
    %8 = vector.shape_cast %7 : vector<1x16x512xbf16> to vector<16x512xbf16>
    %9 = arith.extf %8 : vector<16x512xbf16> to vector<16x512xf32>
    %10 = arith.truncf %4 : vector<16x128xf32> to vector<16x128xbf16>
    %cst = arith.constant dense<0.000000e+00> : vector<16x512xf32>
    %11 = tpu.matmul %10, %3, %cst {dimension_numbers = #tpu.dot_dimension_numbers<[1], [0], [0], [1], [0, 0, 1, 1], [], []>} : vector<16x128xbf16>, vector<128x512xbf16>, vector<16x512xf32> -> vector<16x512xf32>
    %12 = arith.addf %9, %11 : vector<16x512xf32>
    %13 = vector.extract_strided_slice %12 {offsets = [0, 0], sizes = [16, 128], strides = [1, 1]} : vector<16x512xf32> to vector<16x128xf32>
    %14 = arith.negf %13 : vector<16x128xf32>
    %15 = math.exp %14 : vector<16x128xf32>
    %cst_9 = arith.constant 1.000000e+00 : f32
    %16 = vector.broadcast %cst_9 : f32 to vector<16x128xf32>
    %17 = arith.addf %16, %15 : vector<16x128xf32>
    %18 = arith.divf %16, %17 : vector<16x128xf32>
    %19 = vector.extract_strided_slice %12 {offsets = [0, 128], sizes = [16, 128], strides = [1, 1]} : vector<16x512xf32> to vector<16x128xf32>
    %20 = arith.negf %19 : vector<16x128xf32>
    %21 = math.exp %20 : vector<16x128xf32>
    %cst_10 = arith.constant 1.000000e+00 : f32
    %22 = vector.broadcast %cst_10 : f32 to vector<16x128xf32>
    %23 = arith.addf %22, %21 : vector<16x128xf32>
    %24 = arith.divf %22, %23 : vector<16x128xf32>
    %25 = vector.extract_strided_slice %12 {offsets = [0, 256], sizes = [16, 128], strides = [1, 1]} : vector<16x512xf32> to vector<16x128xf32>
    %26 = math.tanh %25 : vector<16x128xf32>
    %27 = vector.extract_strided_slice %12 {offsets = [0, 384], sizes = [16, 128], strides = [1, 1]} : vector<16x512xf32> to vector<16x128xf32>
    %28 = arith.negf %27 : vector<16x128xf32>
    %29 = math.exp %28 : vector<16x128xf32>
    %cst_11 = arith.constant 1.000000e+00 : f32
    %30 = vector.broadcast %cst_11 : f32 to vector<16x128xf32>
    %31 = arith.addf %30, %29 : vector<16x128xf32>
    %32 = arith.divf %30, %31 : vector<16x128xf32>
    %33 = arith.mulf %24, %5 : vector<16x128xf32>
    %34 = arith.mulf %18, %26 : vector<16x128xf32>
    %35 = arith.addf %33, %34 : vector<16x128xf32>
    %36 = math.tanh %35 : vector<16x128xf32>
    %37 = arith.mulf %32, %36 : vector<16x128xf32>
    %38 = arith.truncf %37 : vector<16x128xf32> to vector<16x128xbf16>
    %39 = arith.index_cast %c0_i32_6 : i32 to index
    %c0_12 = arith.constant 0 : index
    %c0_13 = arith.constant 0 : index
    %40 = vector.load %arg6[%39, %c0_12, %c0_13] : memref<4x16x128xbf16, #tpu.memory_space<vmem>>, vector<1x16x128xbf16>
    %41 = vector.shape_cast %40 : vector<1x16x128xbf16> to vector<16x128xbf16>
    %42 = vector.shape_cast %38 : vector<16x128xbf16> to vector<1x16x128xbf16>
    tpu.vector_store %arg6[%39, %c0_12, %c0_13], %42 {strides = array<i32>} : memref<4x16x128xbf16, #tpu.memory_space<vmem>>, vector<1x16x128xbf16>,
    %c1_i32 = arith.constant 1 : i32
    %43 = arith.index_cast %c1_i32 : i32 to index
    %c0_14 = arith.constant 0 : index
    %c0_15 = arith.constant 0 : index
    %44 = vector.load %arg2[%43, %c0_14, %c0_15] : memref<4x16x512xbf16, #tpu.memory_space<vmem>>, vector<1x16x512xbf16>
    %45 = vector.shape_cast %44 : vector<1x16x512xbf16> to vector<16x512xbf16>
    %46 = arith.extf %45 : vector<16x512xbf16> to vector<16x512xf32>
    %47 = arith.truncf %37 : vector<16x128xf32> to vector<16x128xbf16>
    %cst_16 = arith.constant dense<0.000000e+00> : vector<16x512xf32>
    %48 = tpu.matmul %47, %3, %cst_16 {dimension_numbers = #tpu.dot_dimension_numbers<[1], [0], [0], [1], [0, 0, 1, 1], [], []>} : vector<16x128xbf16>, vector<128x512xbf16>, vector<16x512xf32> -> vector<16x512xf32>
    %49 = arith.addf %46, %48 : vector<16x512xf32>
    %50 = vector.extract_strided_slice %49 {offsets = [0, 0], sizes = [16, 128], strides = [1, 1]} : vector<16x512xf32> to vector<16x128xf32>
    %51 = arith.negf %50 : vector<16x128xf32>
    %52 = math.exp %51 : vector<16x128xf32>
    %cst_17 = arith.constant 1.000000e+00 : f32
    %53 = vector.broadcast %cst_17 : f32 to vector<16x128xf32>
    %54 = arith.addf %53, %52 : vector<16x128xf32>
    %55 = arith.divf %53, %54 : vector<16x128xf32>
    %56 = vector.extract_strided_slice %49 {offsets = [0, 128], sizes = [16, 128], strides = [1, 1]} : vector<16x512xf32> to vector<16x128xf32>
    %57 = arith.negf %56 : vector<16x128xf32>
    %58 = math.exp %57 : vector<16x128xf32>
    %cst_18 = arith.constant 1.000000e+00 : f32
    %59 = vector.broadcast %cst_18 : f32 to vector<16x128xf32>
    %60 = arith.addf %59, %58 : vector<16x128xf32>
    %61 = arith.divf %59, %60 : vector<16x128xf32>
    %62 = vector.extract_strided_slice %49 {offsets = [0, 256], sizes = [16, 128], strides = [1, 1]} : vector<16x512xf32> to vector<16x128xf32>
    %63 = math.tanh %62 : vector<16x128xf32>
    %64 = vector.extract_strided_slice %49 {offsets = [0, 384], sizes = [16, 128], strides = [1, 1]} : vector<16x512xf32> to vector<16x128xf32>
    %65 = arith.negf %64 : vector<16x128xf32>
    %66 = math.exp %65 : vector<16x128xf32>
    %cst_19 = arith.constant 1.000000e+00 : f32
    %67 = vector.broadcast %cst_19 : f32 to vector<16x128xf32>
    %68 = arith.addf %67, %66 : vector<16x128xf32>
    %69 = arith.divf %67, %68 : vector<16x128xf32>
    %70 = arith.mulf %61, %35 : vector<16x128xf32>
    %71 = arith.mulf %55, %63 : vector<16x128xf32>
    %72 = arith.addf %70, %71 : vector<16x128xf32>
    %73 = math.tanh %72 : vector<16x128xf32>
    %74 = arith.mulf %69, %73 : vector<16x128xf32>
    %75 = arith.truncf %74 : vector<16x128xf32> to vector<16x128xbf16>
    %76 = arith.index_cast %c1_i32 : i32 to index
    %c0_20 = arith.constant 0 : index
    %c0_21 = arith.constant 0 : index
    %77 = vector.load %arg6[%76, %c0_20, %c0_21] : memref<4x16x128xbf16, #tpu.memory_space<vmem>>, vector<1x16x128xbf16>
    %78 = vector.shape_cast %77 : vector<1x16x128xbf16> to vector<16x128xbf16>
    %79 = vector.shape_cast %75 : vector<16x128xbf16> to vector<1x16x128xbf16>
    tpu.vector_store %arg6[%76, %c0_20, %c0_21], %79 {strides = array<i32>} : memref<4x16x128xbf16, #tpu.memory_space<vmem>>, vector<1x16x128xbf16>,
    %c2_i32 = arith.constant 2 : i32
    %80 = arith.index_cast %c2_i32 : i32 to index
    %c0_22 = arith.constant 0 : index
    %c0_23 = arith.constant 0 : index
    %81 = vector.load %arg2[%80, %c0_22, %c0_23] : memref<4x16x512xbf16, #tpu.memory_space<vmem>>, vector<1x16x512xbf16>
    %82 = vector.shape_cast %81 : vector<1x16x512xbf16> to vector<16x512xbf16>
    %83 = arith.extf %82 : vector<16x512xbf16> to vector<16x512xf32>
    %84 = arith.truncf %74 : vector<16x128xf32> to vector<16x128xbf16>
    %cst_24 = arith.constant dense<0.000000e+00> : vector<16x512xf32>
    %85 = tpu.matmul %84, %3, %cst_24 {dimension_numbers = #tpu.dot_dimension_numbers<[1], [0], [0], [1], [0, 0, 1, 1], [], []>} : vector<16x128xbf16>, vector<128x512xbf16>, vector<16x512xf32> -> vector<16x512xf32>
    %86 = arith.addf %83, %85 : vector<16x512xf32>
    %87 = vector.extract_strided_slice %86 {offsets = [0, 0], sizes = [16, 128], strides = [1, 1]} : vector<16x512xf32> to vector<16x128xf32>
    %88 = arith.negf %87 : vector<16x128xf32>
    %89 = math.exp %88 : vector<16x128xf32>
    %cst_25 = arith.constant 1.000000e+00 : f32
    %90 = vector.broadcast %cst_25 : f32 to vector<16x128xf32>
    %91 = arith.addf %90, %89 : vector<16x128xf32>
    %92 = arith.divf %90, %91 : vector<16x128xf32>
    %93 = vector.extract_strided_slice %86 {offsets = [0, 128], sizes = [16, 128], strides = [1, 1]} : vector<16x512xf32> to vector<16x128xf32>
    %94 = arith.negf %93 : vector<16x128xf32>
    %95 = math.exp %94 : vector<16x128xf32>
    %cst_26 = arith.constant 1.000000e+00 : f32
    %96 = vector.broadcast %cst_26 : f32 to vector<16x128xf32>
    %97 = arith.addf %96, %95 : vector<16x128xf32>
    %98 = arith.divf %96, %97 : vector<16x128xf32>
    %99 = vector.extract_strided_slice %86 {offsets = [0, 256], sizes = [16, 128], strides = [1, 1]} : vector<16x512xf32> to vector<16x128xf32>
    %100 = math.tanh %99 : vector<16x128xf32>
    %101 = vector.extract_strided_slice %86 {offsets = [0, 384], sizes = [16, 128], strides = [1, 1]} : vector<16x512xf32> to vector<16x128xf32>
    %102 = arith.negf %101 : vector<16x128xf32>
    %103 = math.exp %102 : vector<16x128xf32>
    %cst_27 = arith.constant 1.000000e+00 : f32
    %104 = vector.broadcast %cst_27 : f32 to vector<16x128xf32>
    %105 = arith.addf %104, %103 : vector<16x128xf32>
    %106 = arith.divf %104, %105 : vector<16x128xf32>
    %107 = arith.mulf %98, %72 : vector<16x128xf32>
    %108 = arith.mulf %92, %100 : vector<16x128xf32>
    %109 = arith.addf %107, %108 : vector<16x128xf32>
    %110 = math.tanh %109 : vector<16x128xf32>
    %111 = arith.mulf %106, %110 : vector<16x128xf32>
    %112 = arith.truncf %111 : vector<16x128xf32> to vector<16x128xbf16>
    %113 = arith.index_cast %c2_i32 : i32 to index
    %c0_28 = arith.constant 0 : index
    %c0_29 = arith.constant 0 : index
    %114 = vector.load %arg6[%113, %c0_28, %c0_29] : memref<4x16x128xbf16, #tpu.memory_space<vmem>>, vector<1x16x128xbf16>
    %115 = vector.shape_cast %114 : vector<1x16x128xbf16> to vector<16x128xbf16>
    %116 = vector.shape_cast %112 : vector<16x128xbf16> to vector<1x16x128xbf16>
    tpu.vector_store %arg6[%113, %c0_28, %c0_29], %116 {strides = array<i32>} : memref<4x16x128xbf16, #tpu.memory_space<vmem>>, vector<1x16x128xbf16>,
    %c3_i32 = arith.constant 3 : i32
    %117 = arith.index_cast %c3_i32 : i32 to index
    %c0_30 = arith.constant 0 : index
    %c0_31 = arith.constant 0 : index
    %118 = vector.load %arg2[%117, %c0_30, %c0_31] : memref<4x16x512xbf16, #tpu.memory_space<vmem>>, vector<1x16x512xbf16>
    %119 = vector.shape_cast %118 : vector<1x16x512xbf16> to vector<16x512xbf16>
    %120 = arith.extf %119 : vector<16x512xbf16> to vector<16x512xf32>
    %121 = arith.truncf %111 : vector<16x128xf32> to vector<16x128xbf16>
    %cst_32 = arith.constant dense<0.000000e+00> : vector<16x512xf32>
    %122 = tpu.matmul %121, %3, %cst_32 {dimension_numbers = #tpu.dot_dimension_numbers<[1], [0], [0], [1], [0, 0, 1, 1], [], []>} : vector<16x128xbf16>, vector<128x512xbf16>, vector<16x512xf32> -> vector<16x512xf32>
    %123 = arith.addf %120, %122 : vector<16x512xf32>
    %124 = vector.extract_strided_slice %123 {offsets = [0, 0], sizes = [16, 128], strides = [1, 1]} : vector<16x512xf32> to vector<16x128xf32>
    %125 = arith.negf %124 : vector<16x128xf32>
    %126 = math.exp %125 : vector<16x128xf32>
    %cst_33 = arith.constant 1.000000e+00 : f32
    %127 = vector.broadcast %cst_33 : f32 to vector<16x128xf32>
    %128 = arith.addf %127, %126 : vector<16x128xf32>
    %129 = arith.divf %127, %128 : vector<16x128xf32>
    %130 = vector.extract_strided_slice %123 {offsets = [0, 128], sizes = [16, 128], strides = [1, 1]} : vector<16x512xf32> to vector<16x128xf32>
    %131 = arith.negf %130 : vector<16x128xf32>
    %132 = math.exp %131 : vector<16x128xf32>
    %cst_34 = arith.constant 1.000000e+00 : f32
    %133 = vector.broadcast %cst_34 : f32 to vector<16x128xf32>
    %134 = arith.addf %133, %132 : vector<16x128xf32>
    %135 = arith.divf %133, %134 : vector<16x128xf32>
    %136 = vector.extract_strided_slice %123 {offsets = [0, 256], sizes = [16, 128], strides = [1, 1]} : vector<16x512xf32> to vector<16x128xf32>
    %137 = math.tanh %136 : vector<16x128xf32>
    %138 = vector.extract_strided_slice %123 {offsets = [0, 384], sizes = [16, 128], strides = [1, 1]} : vector<16x512xf32> to vector<16x128xf32>
    %139 = arith.negf %138 : vector<16x128xf32>
    %140 = math.exp %139 : vector<16x128xf32>
    %cst_35 = arith.constant 1.000000e+00 : f32
    %141 = vector.broadcast %cst_35 : f32 to vector<16x128xf32>
    %142 = arith.addf %141, %140 : vector<16x128xf32>
    %143 = arith.divf %141, %142 : vector<16x128xf32>
    %144 = arith.mulf %135, %109 : vector<16x128xf32>
    %145 = arith.mulf %129, %137 : vector<16x128xf32>
    %146 = arith.addf %144, %145 : vector<16x128xf32>
    %147 = math.tanh %146 : vector<16x128xf32>
    %148 = arith.mulf %143, %147 : vector<16x128xf32>
    %149 = arith.truncf %148 : vector<16x128xf32> to vector<16x128xbf16>
    %150 = arith.index_cast %c3_i32 : i32 to index
    %c0_36 = arith.constant 0 : index
    %c0_37 = arith.constant 0 : index
    %151 = vector.load %arg6[%150, %c0_36, %c0_37] : memref<4x16x128xbf16, #tpu.memory_space<vmem>>, vector<1x16x128xbf16>
    %152 = vector.shape_cast %151 : vector<1x16x128xbf16> to vector<16x128xbf16>
    %153 = vector.shape_cast %149 : vector<16x128xbf16> to vector<1x16x128xbf16>
    tpu.vector_store %arg6[%150, %c0_36, %c0_37], %153 {strides = array<i32>} : memref<4x16x128xbf16, #tpu.memory_space<vmem>>, vector<1x16x128xbf16>,
    %c4_i32 = arith.constant 4 : i32
    %c0_38 = arith.constant 0 : index
    %c0_39 = arith.constant 0 : index
    %154 = vector.load %arg9[%c0_38, %c0_39] : memref<16x128xf32, #tpu.memory_space<vmem>>, vector<16x128xf32>
    tpu.vector_store %arg9[%c0_38, %c0_39], %148 {strides = array<i32>} : memref<16x128xf32, #tpu.memory_space<vmem>>, vector<16x128xf32>,
    %c0_40 = arith.constant 0 : index
    %c0_41 = arith.constant 0 : index
    %155 = vector.load %arg10[%c0_40, %c0_41] : memref<16x128xf32, #tpu.memory_space<vmem>>, vector<16x128xf32>
    tpu.vector_store %arg10[%c0_40, %c0_41], %146 {strides = array<i32>} : memref<16x128xf32, #tpu.memory_space<vmem>>, vector<16x128xf32>,
    %c1_i32_42 = arith.constant 1 : i32
    %156 = arith.cmpi eq, %arg1, %c1_i32_42 : i32
    %157 = arith.extui %156 : i1 to i32
    %c0_i32_43 = arith.constant 0 : i32
    %158 = arith.cmpi ne, %157, %c0_i32_43 : i32
    scf.if %158 {
      %c0_44 = arith.constant 0 : index
      %c0_45 = arith.constant 0 : index
      %159 = vector.load %arg7[%c0_44, %c0_45] : memref<16x128xf32, #tpu.memory_space<vmem>>, vector<16x128xf32>
      tpu.vector_store %arg7[%c0_44, %c0_45], %148 {strides = array<i32>} : memref<16x128xf32, #tpu.memory_space<vmem>>, vector<16x128xf32>,
      %c0_46 = arith.constant 0 : index
      %c0_47 = arith.constant 0 : index
      %160 = vector.load %arg8[%c0_46, %c0_47] : memref<16x128xf32, #tpu.memory_space<vmem>>, vector<16x128xf32>
      tpu.vector_store %arg8[%c0_46, %c0_47], %146 {strides = array<i32>} : memref<16x128xf32, #tpu.memory_space<vmem>>, vector<16x128xf32>,
    } else {
    }
    return
  }
  func.func @transform_0(%arg0: i32, %arg1: i32) -> (i32, i32, i32) {
    %c0_i32 = arith.constant 0 : i32
    %c0_i32_0 = arith.constant 0 : i32
    return %arg1, %arg0, %c0_i32 : i32, i32, i32
  }
  func.func @transform_1(%arg0: i32, %arg1: i32) -> (i32, i32) {
    %c0_i32 = arith.constant 0 : i32
    %c0_i32_0 = arith.constant 0 : i32
    return %arg0, %c0_i32 : i32, i32
  }
  func.func @transform_2(%arg0: i32, %arg1: i32) -> (i32, i32) {
    %c0_i32 = arith.constant 0 : i32
    %c0_i32_0 = arith.constant 0 : i32
    return %arg0, %c0_i32 : i32, i32
  }
  func.func @transform_3(%arg0: i32, %arg1: i32) -> (i32, i32) {
    %c0_i32 = arith.constant 0 : i32
    %c0_i32_0 = arith.constant 0 : i32
    %c0_i32_1 = arith.constant 0 : i32
    return %c0_i32, %c0_i32_0 : i32, i32
  }
  func.func @transform_4(%arg0: i32, %arg1: i32) -> (i32, i32, i32) {
    %c0_i32 = arith.constant 0 : i32
    %c0_i32_0 = arith.constant 0 : i32
    return %arg1, %arg0, %c0_i32 : i32, i32, i32
  }
  func.func @transform_5(%arg0: i32, %arg1: i32) -> (i32, i32) {
    %c0_i32 = arith.constant 0 : i32
    %c0_i32_0 = arith.constant 0 : i32
    return %arg0, %c0_i32 : i32, i32
  }
  func.func @transform_6(%arg0: i32, %arg1: i32) -> (i32, i32) {
    %c0_i32 = arith.constant 0 : i32
    %c0_i32_0 = arith.constant 0 : i32
    return %arg0, %c0_i32 : i32, i32
  }
}

module attributes {stable_mosaic.version = 11 : i64} {
  func.func @_input_proj_kernel(%arg0: i32, %arg1: i32, %arg2: memref<128x128xbf16, #tpu.memory_space<vmem>>, %arg3: memref<128x512xbf16, #tpu.memory_space<vmem>>, %arg4: memref<1x512xf32, #tpu.memory_space<vmem>>, %arg5: memref<128x512xbf16, #tpu.memory_space<vmem>>) attributes {dimension_semantics = [#tpu.dimension_semantics<parallel>, #tpu.dimension_semantics<parallel>], iteration_bounds = array<i64: 1, 1>, scalar_prefetch = 0 : i64, scratch_operands = 0 : i64, tpu.core_type = #tpu.core_type<tc>, window_params = [{transform_indices = @transform_0, window_bounds = array<i64: 128, 128>}, {transform_indices = @transform_1, window_bounds = array<i64: 128, 512>}, {transform_indices = @transform_2, window_bounds = array<i64: 1, 512>}, {transform_indices = @transform_3, window_bounds = array<i64: 128, 512>}]} {
    %c0 = arith.constant 0 : index
    %c0_0 = arith.constant 0 : index
    %0 = vector.load %arg2[%c0, %c0_0] : memref<128x128xbf16, #tpu.memory_space<vmem>>, vector<128x128xbf16>
    %c0_1 = arith.constant 0 : index
    %c0_2 = arith.constant 0 : index
    %1 = vector.load %arg3[%c0_1, %c0_2] : memref<128x512xbf16, #tpu.memory_space<vmem>>, vector<128x512xbf16>
    %cst = arith.constant dense<0.000000e+00> : vector<128x512xf32>
    %2 = tpu.matmul %0, %1, %cst {dimension_numbers = #tpu.dot_dimension_numbers<[1], [0], [0], [1], [0, 0, 1, 1], [], []>} : vector<128x128xbf16>, vector<128x512xbf16>, vector<128x512xf32> -> vector<128x512xf32>
    %c0_3 = arith.constant 0 : index
    %c0_4 = arith.constant 0 : index
    %3 = vector.load %arg4[%c0_3, %c0_4] : memref<1x512xf32, #tpu.memory_space<vmem>>, vector<1x512xf32>
    %4 = vector.broadcast %3 : vector<1x512xf32> to vector<128x512xf32>
    %5 = arith.addf %2, %4 : vector<128x512xf32>
    %6 = arith.truncf %5 : vector<128x512xf32> to vector<128x512xbf16>
    %c0_5 = arith.constant 0 : index
    %c0_6 = arith.constant 0 : index
    %7 = vector.load %arg5[%c0_5, %c0_6] : memref<128x512xbf16, #tpu.memory_space<vmem>>, vector<128x512xbf16>
    tpu.vector_store %arg5[%c0_5, %c0_6], %6 {strides = array<i32>} : memref<128x512xbf16, #tpu.memory_space<vmem>>, vector<128x512xbf16>,
    return
  }
  func.func @transform_0(%arg0: i32, %arg1: i32) -> (i32, i32) {
    %c0_i32 = arith.constant 0 : i32
    %c0_i32_0 = arith.constant 0 : i32
    return %arg0, %c0_i32 : i32, i32
  }
  func.func @transform_1(%arg0: i32, %arg1: i32) -> (i32, i32) {
    %c0_i32 = arith.constant 0 : i32
    %c0_i32_0 = arith.constant 0 : i32
    return %c0_i32, %arg1 : i32, i32
  }
  func.func @transform_2(%arg0: i32, %arg1: i32) -> (i32, i32) {
    %c0_i32 = arith.constant 0 : i32
    %c0_i32_0 = arith.constant 0 : i32
    return %c0_i32, %arg1 : i32, i32
  }
  func.func @transform_3(%arg0: i32, %arg1: i32) -> (i32, i32) {
    %c0_i32 = arith.constant 0 : i32
    return %arg0, %arg1 : i32, i32
  }
}

module attributes {stable_mosaic.version = 11 : i64} {
  func.func @_logits_lse_kernel(%arg0: i32, %arg1: i32, %arg2: memref<128x128xbf16, #tpu.memory_space<vmem>>, %arg3: memref<128x128xbf16, #tpu.memory_space<vmem>>, %arg4: memref<1x128xf32, #tpu.memory_space<vmem>>, %arg5: memref<128x128xbf16, #tpu.memory_space<vmem>>, %arg6: memref<128x1xf32, #tpu.memory_space<vmem>>, %arg7: memref<128x1xf32, #tpu.memory_space<vmem>>, %arg8: memref<128x1xf32, #tpu.memory_space<vmem>>) attributes {dimension_semantics = [#tpu.dimension_semantics<parallel>, #tpu.dimension_semantics<arbitrary>], iteration_bounds = array<i64: 1, 2>, scalar_prefetch = 0 : i64, scratch_operands = 2 : i64, tpu.core_type = #tpu.core_type<tc>, window_params = [{transform_indices = @transform_0, window_bounds = array<i64: 128, 128>}, {transform_indices = @transform_1, window_bounds = array<i64: 128, 128>}, {transform_indices = @transform_2, window_bounds = array<i64: 1, 128>}, {transform_indices = @transform_3, window_bounds = array<i64: 128, 128>}, {transform_indices = @transform_4, window_bounds = array<i64: 128, 1>}]} {
    %c0_i32 = arith.constant 0 : i32
    %0 = arith.cmpi eq, %arg1, %c0_i32 : i32
    %1 = arith.extui %0 : i1 to i32
    %c0_i32_0 = arith.constant 0 : i32
    %2 = arith.cmpi ne, %1, %c0_i32_0 : i32
    scf.if %2 {
      %cst_19 = arith.constant 0xFF800000 : f32
      %31 = vector.broadcast %cst_19 : f32 to vector<128x1xf32>
      %c0_20 = arith.constant 0 : index
      %c0_21 = arith.constant 0 : index
      %32 = vector.load %arg7[%c0_20, %c0_21] : memref<128x1xf32, #tpu.memory_space<vmem>>, vector<128x1xf32>
      tpu.vector_store %arg7[%c0_20, %c0_21], %31 {strides = array<i32>} : memref<128x1xf32, #tpu.memory_space<vmem>>, vector<128x1xf32>,
      %cst_22 = arith.constant 0.000000e+00 : f32
      %33 = vector.broadcast %cst_22 : f32 to vector<128x1xf32>
      %c0_23 = arith.constant 0 : index
      %c0_24 = arith.constant 0 : index
      %34 = vector.load %arg8[%c0_23, %c0_24] : memref<128x1xf32, #tpu.memory_space<vmem>>, vector<128x1xf32>
      tpu.vector_store %arg8[%c0_23, %c0_24], %33 {strides = array<i32>} : memref<128x1xf32, #tpu.memory_space<vmem>>, vector<128x1xf32>,
    } else {
    }
    %c0 = arith.constant 0 : index
    %c0_1 = arith.constant 0 : index
    %3 = vector.load %arg2[%c0, %c0_1] : memref<128x128xbf16, #tpu.memory_space<vmem>>, vector<128x128xbf16>
    %c0_2 = arith.constant 0 : index
    %c0_3 = arith.constant 0 : index
    %4 = vector.load %arg3[%c0_2, %c0_3] : memref<128x128xbf16, #tpu.memory_space<vmem>>, vector<128x128xbf16>
    %cst = arith.constant dense<0.000000e+00> : vector<128x128xf32>
    %5 = tpu.matmul %3, %4, %cst {dimension_numbers = #tpu.dot_dimension_numbers<[1], [0], [0], [1], [0, 0, 1, 1], [], []>} : vector<128x128xbf16>, vector<128x128xbf16>, vector<128x128xf32> -> vector<128x128xf32>
    %c0_4 = arith.constant 0 : index
    %c0_5 = arith.constant 0 : index
    %6 = vector.load %arg4[%c0_4, %c0_5] : memref<1x128xf32, #tpu.memory_space<vmem>>, vector<1x128xf32>
    %7 = vector.broadcast %6 : vector<1x128xf32> to vector<128x128xf32>
    %8 = arith.addf %5, %7 : vector<128x128xf32>
    %9 = arith.truncf %8 : vector<128x128xf32> to vector<128x128xbf16>
    %c0_6 = arith.constant 0 : index
    %c0_7 = arith.constant 0 : index
    %10 = vector.load %arg5[%c0_6, %c0_7] : memref<128x128xbf16, #tpu.memory_space<vmem>>, vector<128x128xbf16>
    tpu.vector_store %arg5[%c0_6, %c0_7], %9 {strides = array<i32>} : memref<128x128xbf16, #tpu.memory_space<vmem>>, vector<128x128xbf16>,
    %11 = arith.extf %9 : vector<128x128xbf16> to vector<128x128xf32>
    %c0_8 = arith.constant 0 : index
    %c0_9 = arith.constant 0 : index
    %12 = vector.load %arg7[%c0_8, %c0_9] : memref<128x1xf32, #tpu.memory_space<vmem>>, vector<128x1xf32>
    %cst_10 = arith.constant dense<0xFF800000> : vector<128xf32>
    %13 = vector.multi_reduction <maximumf>, %11, %cst_10 [1] : vector<128x128xf32> to vector<128xf32>
    %14 = vector.shape_cast %13 : vector<128xf32> to vector<128x1xf32>
    %15 = arith.maximumf %12, %14 : vector<128x1xf32>
    %c0_11 = arith.constant 0 : index
    %c0_12 = arith.constant 0 : index
    %16 = vector.load %arg8[%c0_11, %c0_12] : memref<128x1xf32, #tpu.memory_space<vmem>>, vector<128x1xf32>
    %17 = arith.subf %12, %15 : vector<128x1xf32>
    %18 = math.exp %17 : vector<128x1xf32>
    %19 = arith.mulf %16, %18 : vector<128x1xf32>
    %20 = vector.broadcast %15 : vector<128x1xf32> to vector<128x128xf32>
    %21 = arith.subf %11, %20 : vector<128x128xf32>
    %22 = math.exp %21 : vector<128x128xf32>
    %cst_13 = arith.constant dense<0.000000e+00> : vector<128xf32>
    %23 = vector.multi_reduction <add>, %22, %cst_13 [1] : vector<128x128xf32> to vector<128xf32>
    %24 = vector.shape_cast %23 : vector<128xf32> to vector<128x1xf32>
    %25 = arith.addf %19, %24 : vector<128x1xf32>
    %c0_14 = arith.constant 0 : index
    %c0_15 = arith.constant 0 : index
    %26 = vector.load %arg8[%c0_14, %c0_15] : memref<128x1xf32, #tpu.memory_space<vmem>>, vector<128x1xf32>
    tpu.vector_store %arg8[%c0_14, %c0_15], %25 {strides = array<i32>} : memref<128x1xf32, #tpu.memory_space<vmem>>, vector<128x1xf32>,
    %c0_16 = arith.constant 0 : index
    %c0_17 = arith.constant 0 : index
    %27 = vector.load %arg7[%c0_16, %c0_17] : memref<128x1xf32, #tpu.memory_space<vmem>>, vector<128x1xf32>
    tpu.vector_store %arg7[%c0_16, %c0_17], %15 {strides = array<i32>} : memref<128x1xf32, #tpu.memory_space<vmem>>, vector<128x1xf32>,
    %c1_i32 = arith.constant 1 : i32
    %28 = arith.cmpi eq, %arg1, %c1_i32 : i32
    %29 = arith.extui %28 : i1 to i32
    %c0_i32_18 = arith.constant 0 : i32
    %30 = arith.cmpi ne, %29, %c0_i32_18 : i32
    scf.if %30 {
      %c0_19 = arith.constant 0 : index
      %c0_20 = arith.constant 0 : index
      %31 = vector.load %arg8[%c0_19, %c0_20] : memref<128x1xf32, #tpu.memory_space<vmem>>, vector<128x1xf32>
      %32 = math.log %31 : vector<128x1xf32>
      %33 = arith.addf %15, %32 : vector<128x1xf32>
      %c0_21 = arith.constant 0 : index
      %c0_22 = arith.constant 0 : index
      %34 = vector.load %arg6[%c0_21, %c0_22] : memref<128x1xf32, #tpu.memory_space<vmem>>, vector<128x1xf32>
      tpu.vector_store %arg6[%c0_21, %c0_22], %33 {strides = array<i32>} : memref<128x1xf32, #tpu.memory_space<vmem>>, vector<128x1xf32>,
    } else {
    }
    return
  }
  func.func @transform_0(%arg0: i32, %arg1: i32) -> (i32, i32) {
    %c0_i32 = arith.constant 0 : i32
    %c0_i32_0 = arith.constant 0 : i32
    return %arg0, %c0_i32 : i32, i32
  }
  func.func @transform_1(%arg0: i32, %arg1: i32) -> (i32, i32) {
    %c0_i32 = arith.constant 0 : i32
    %c0_i32_0 = arith.constant 0 : i32
    return %c0_i32, %arg1 : i32, i32
  }
  func.func @transform_2(%arg0: i32, %arg1: i32) -> (i32, i32) {
    %c0_i32 = arith.constant 0 : i32
    %c0_i32_0 = arith.constant 0 : i32
    return %c0_i32, %arg1 : i32, i32
  }
  func.func @transform_3(%arg0: i32, %arg1: i32) -> (i32, i32) {
    %c0_i32 = arith.constant 0 : i32
    return %arg0, %arg1 : i32, i32
  }
  func.func @transform_4(%arg0: i32, %arg1: i32) -> (i32, i32) {
    %c0_i32 = arith.constant 0 : i32
    %c0_i32_0 = arith.constant 0 : i32
    return %arg0, %c0_i32 : i32, i32
  }
}

module attributes {stable_mosaic.version = 11 : i64} {
  func.func @_sub_lse_kernel(%arg0: i32, %arg1: i32, %arg2: memref<128x128xbf16, #tpu.memory_space<vmem>>, %arg3: memref<128x1xf32, #tpu.memory_space<vmem>>, %arg4: memref<128x128xf32, #tpu.memory_space<vmem>>) attributes {dimension_semantics = [#tpu.dimension_semantics<parallel>, #tpu.dimension_semantics<parallel>], iteration_bounds = array<i64: 1, 2>, scalar_prefetch = 0 : i64, scratch_operands = 0 : i64, tpu.core_type = #tpu.core_type<tc>, window_params = [{transform_indices = @transform_0, window_bounds = array<i64: 128, 128>}, {transform_indices = @transform_1, window_bounds = array<i64: 128, 1>}, {transform_indices = @transform_2, window_bounds = array<i64: 128, 128>}]} {
    %c0 = arith.constant 0 : index
    %c0_0 = arith.constant 0 : index
    %0 = vector.load %arg2[%c0, %c0_0] : memref<128x128xbf16, #tpu.memory_space<vmem>>, vector<128x128xbf16>
    %1 = arith.extf %0 : vector<128x128xbf16> to vector<128x128xf32>
    %c0_1 = arith.constant 0 : index
    %c0_2 = arith.constant 0 : index
    %2 = vector.load %arg3[%c0_1, %c0_2] : memref<128x1xf32, #tpu.memory_space<vmem>>, vector<128x1xf32>
    %3 = vector.broadcast %2 : vector<128x1xf32> to vector<128x128xf32>
    %4 = arith.subf %1, %3 : vector<128x128xf32>
    %c0_3 = arith.constant 0 : index
    %c0_4 = arith.constant 0 : index
    %5 = vector.load %arg4[%c0_3, %c0_4] : memref<128x128xf32, #tpu.memory_space<vmem>>, vector<128x128xf32>
    tpu.vector_store %arg4[%c0_3, %c0_4], %4 {strides = array<i32>} : memref<128x128xf32, #tpu.memory_space<vmem>>, vector<128x128xf32>,
    return
  }
  func.func @transform_0(%arg0: i32, %arg1: i32) -> (i32, i32) {
    %c0_i32 = arith.constant 0 : i32
    return %arg0, %arg1 : i32, i32
  }
  func.func @transform_1(%arg0: i32, %arg1: i32) -> (i32, i32) {
    %c0_i32 = arith.constant 0 : i32
    %c0_i32_0 = arith.constant 0 : i32
    return %arg0, %c0_i32 : i32, i32
  }
  func.func @transform_2(%arg0: i32, %arg1: i32) -> (i32, i32) {
    %c0_i32 = arith.constant 0 : i32
    return %arg0, %arg1 : i32, i32
  }
}

</mosaic_0001>

<llo_original>
// kernel: rnn_model_forward.7
$region0: #{rnn_model_forward.7}
  #allocation0 [shape = 'u32[]', space=smem, size = 0x4, offset = 0x4, fixed_abs, tag = 'smem constant byte address 0x4 - core index']
  #allocation1 [shape = 'u32[144,128]{1,0:T(1,128)}', space=vmem, size = 0x12000, scoped, tag = 'internal scratch']
  #allocation2 [shape = 'f32[16,128]{1,0:T(8,128)}', space=vmem, size = 0x2000, scoped, tag = 'scratch operand']
  #allocation3 [shape = 'f32[16,128]{1,0:T(8,128)}', space=vmem, size = 0x2000, scoped, tag = 'scratch operand']
  %s0 = inlined_call_operand.vmem [shape: bf16[8,16,512], index: 0, kind: input, shape index: {}]
  %s1 = inlined_call_operand.vmem [shape: f32[16,128], index: 1, kind: input, shape index: {}]
  %s2 = inlined_call_operand.vmem [shape: f32[16,128], index: 2, kind: input, shape index: {}]
  %s3 = inlined_call_operand.vmem [shape: bf16[128,512], index: 3, kind: input, shape index: {}]
  %s4 = inlined_call_operand.vmem [shape: bf16[8,16,128], index: 4, kind: output, shape index: {0}]
  %s5 = inlined_call_operand.vmem [shape: f32[16,128], index: 5, kind: output, shape index: {1}]
  %s6 = inlined_call_operand.vmem [shape: f32[16,128], index: 6, kind: output, shape index: {2}]
  %7 = xla_tuple %s4, %s5, %s6
  %s8 = sld [smem:[#allocation0]]
  $region73: #{rnn_model_forward.7} parent=0
    _
  %s10 = ssub.s32 1, %s8
  %s11 = scalar_select 0, %s10, %s8
  loop: start=0, step=1, limit=4
  $region2: #{rnn_model_forward.7} parent=0 // loop_pre_header
    _
  $region3: #{rnn_model_forward.7} parent=0 // loop_header
    %s13 = sphi 0, %s17
    %p14 = scmp.ge.s32.totalorder %s13, 4
    %s20 = sphi 0, %s32
    %s21 = sphi 0, %s28
    %s22 = sphi 0, %s20
    %s23 = sphi 0, %s21
    %s24 = sphi 0, %s22
    %s25 = sphi 0, %s23
    %s37 = sphi 0, %s39
    %s40 = sphi 0, %s37
    %s41 = sphi 0, %s40
    %s57 = sphi 0, %s41
    %s63 = sphi 0, %s65
    %s66 = sphi 0, %s63
    %s67 = sphi 0, %s66
    %s83 = sphi 0, %s67
    %s89 = sphi 0, %s91
    %s92 = sphi 0, %s89
    %s93 = sphi 0, %s92
    %s109 = sphi 0, %s93
    %s113 = sphi 0, %s113
    %s115 = sphi 0, %s113
    %s116 = sphi 0, %s115
    %s130 = sphi 0, %s116
    %s138 = sphi 0, %s140
    %s141 = sphi 0, %s138
    %s142 = sphi 0, %s141
    %s158 = sphi 0, %s142
    %s164 = sphi 0, %s166
    %s167 = sphi 0, %s164
    %s168 = sphi 0, %s167
    %s184 = sphi 0, %s168
    %s190 = sphi 0, %s192
    %s193 = sphi 0, %s190
    %s194 = sphi 0, %s193
    %s210 = sphi 0, %s194
  $region4: #{rnn_model_forward.7} parent=0 // loop_header_branch
    %16 = sbr.rel (%p14) target = $region8
  $region5: #{rnn_model_forward.7} parent=0 // loop_body
    %s18 = ssub.s32 %s13, 1
    %s19 = ssub.s32 %s13, 2
    %s26 = sadd.s32 1, %s21
    %p27 = scmp.ge.s32.totalorder %s26, 2
    %s28 = scalar_select %p27, 0, %s26
    %s29 = sadd.s32 1, %s20
    %s30 = scalar_select %p27, %s29, %s20
    %p31 = scmp.ge.s32.totalorder %s30, 1
    %s32 = scalar_select %p31, 0, %s30
    %s33 = ssub.s32 %s21, %s28
    %s34 = ssub.s32 %s20, %s32
    %s35 = sor.u32 %s33, %s34
    %p36 = scmp.eq.s32.totalorder %s35, 0
    %s38 = sadd.s32 %s37, 1
    %s39 = scalar_select %p36, %s37, %s38
    %p42 = pneg %p36
    %p43 = scmp.eq.s32.totalorder %s13, 1
    %p44 = por %p42, %p43
    %p45 = scmp.ne.s32.totalorder %s37, %s40
    %p46 = scmp.eq.s32.totalorder %s13, 0
    %p47 = por %p45, %p46
    %p48 = scmp.ne.s32.totalorder %s37, %s40
    %p49 = scmp.eq.s32.totalorder %s18, 1
    %p50 = por %p48, %p49
    %p51 = scmp.ne.s32.totalorder %s40, %s41
    %p52 = scmp.eq.s32.totalorder %s18, 0
    %p53 = por %p51, %p52
    %p54 = scmp.ne.s32.totalorder %s40, %s41
    %p55 = scmp.eq.s32.totalorder %s19, 1
    %p56 = por %p54, %p55
    %p58 = scmp.ne.s32.totalorder %s41, %s57
    %p59 = scmp.eq.s32.totalorder %s19, 0
    %p60 = por %p58, %p59
    %s61 = ssub.s32 %s20, %s32
    %p62 = scmp.eq.s32.totalorder %s61, 0
    %s64 = sadd.s32 %s63, 1
    %s65 = scalar_select %p62, %s63, %s64
    %p68 = pneg %p62
    %p69 = scmp.eq.s32.totalorder %s13, 1
    %p70 = por %p68, %p69
    %p71 = scmp.ne.s32.totalorder %s63, %s66
    %p72 = scmp.eq.s32.totalorder %s13, 0
    %p73 = por %p71, %p72
    %p74 = scmp.ne.s32.totalorder %s63, %s66
    %p75 = scmp.eq.s32.totalorder %s18, 1
    %p76 = por %p74, %p75
    %p77 = scmp.ne.s32.totalorder %s66, %s67
    %p78 = scmp.eq.s32.totalorder %s18, 0
    %p79 = por %p77, %p78
    %p80 = scmp.ne.s32.totalorder %s66, %s67
    %p81 = scmp.eq.s32.totalorder %s19, 1
    %p82 = por %p80, %p81
    %p84 = scmp.ne.s32.totalorder %s67, %s83
    %p85 = scmp.eq.s32.totalorder %s19, 0
    %p86 = por %p84, %p85
    %s87 = ssub.s32 %s20, %s32
    %p88 = scmp.eq.s32.totalorder %s87, 0
    %s90 = sadd.s32 %s89, 1
    %s91 = scalar_select %p88, %s89, %s90
    %p94 = pneg %p88
    %p95 = scmp.eq.s32.totalorder %s13, 1
    %p96 = por %p94, %p95
    %p97 = scmp.ne.s32.totalorder %s89, %s92
    %p98 = scmp.eq.s32.totalorder %s13, 0
    %p99 = por %p97, %p98
    %p100 = scmp.ne.s32.totalorder %s89, %s92
    %p101 = scmp.eq.s32.totalorder %s18, 1
    %p102 = por %p100, %p101
    %p103 = scmp.ne.s32.totalorder %s92, %s93
    %p104 = scmp.eq.s32.totalorder %s18, 0
    %p105 = por %p103, %p104
    %p106 = scmp.ne.s32.totalorder %s92, %s93
    %p107 = scmp.eq.s32.totalorder %s19, 1
    %p108 = por %p106, %p107
    %p110 = scmp.ne.s32.totalorder %s93, %s109
    %p111 = scmp.eq.s32.totalorder %s19, 0
    %p112 = por %p110, %p111
    %s114 = sadd.s32 %s113, 1
    %p117 = scmp.eq.s32.totalorder %s13, 1
    %p118 = scmp.ne.s32.totalorder %s113, %s115
    %p119 = scmp.eq.s32.totalorder %s13, 0
    %p120 = por %p118, %p119
    %p121 = scmp.ne.s32.totalorder %s113, %s115
    %p122 = scmp.eq.s32.totalorder %s18, 1
    %p123 = por %p121, %p122
    %p124 = scmp.ne.s32.totalorder %s115, %s116
    %p125 = scmp.eq.s32.totalorder %s18, 0
    %p126 = por %p124, %p125
    %p127 = scmp.ne.s32.totalorder %s115, %s116
    %p128 = scmp.eq.s32.totalorder %s19, 1
    %p129 = por %p127, %p128
    %p131 = scmp.ne.s32.totalorder %s116, %s130
    %p132 = scmp.eq.s32.totalorder %s19, 0
    %p133 = por %p131, %p132
    %s134 = ssub.s32 %s21, %s28
    %s135 = ssub.s32 %s20, %s32
    %s136 = sor.u32 %s134, %s135
    %p137 = scmp.eq.s32.totalorder %s136, 0
    %s139 = sadd.s32 %s138, 1
    %s140 = scalar_select %p137, %s138, %s139
    %p143 = pneg %p137
    %p144 = scmp.eq.s32.totalorder %s13, 1
    %p145 = por %p143, %p144
    %p146 = scmp.ne.s32.totalorder %s138, %s141
    %p147 = scmp.eq.s32.totalorder %s13, 0
    %p148 = por %p146, %p147
    %p149 = scmp.ne.s32.totalorder %s138, %s141
    %p150 = scmp.eq.s32.totalorder %s18, 1
    %p151 = por %p149, %p150
    %p152 = scmp.ne.s32.totalorder %s141, %s142
    %p153 = scmp.eq.s32.totalorder %s18, 0
    %p154 = por %p152, %p153
    %p155 = scmp.ne.s32.totalorder %s141, %s142
    %p156 = scmp.eq.s32.totalorder %s19, 1
    %p157 = por %p155, %p156
    %p159 = scmp.ne.s32.totalorder %s142, %s158
    %p160 = scmp.eq.s32.totalorder %s19, 0
    %p161 = por %p159, %p160
    %s162 = ssub.s32 %s20, %s32
    %p163 = scmp.eq.s32.totalorder %s162, 0
    %s165 = sadd.s32 %s164, 1
    %s166 = scalar_select %p163, %s164, %s165
    %p169 = pneg %p163
    %p170 = scmp.eq.s32.totalorder %s13, 1
    %p171 = por %p169, %p170
    %p172 = scmp.ne.s32.totalorder %s164, %s167
    %p173 = scmp.eq.s32.totalorder %s13, 0
    %p174 = por %p172, %p173
    %p175 = scmp.ne.s32.totalorder %s164, %s167
    %p176 = scmp.eq.s32.totalorder %s18, 1
    %p177 = por %p175, %p176
    %p178 = scmp.ne.s32.totalorder %s167, %s168
    %p179 = scmp.eq.s32.totalorder %s18, 0
    %p180 = por %p178, %p179
    %p181 = scmp.ne.s32.totalorder %s167, %s168
    %p182 = scmp.eq.s32.totalorder %s19, 1
    %p183 = por %p181, %p182
    %p185 = scmp.ne.s32.totalorder %s168, %s184
    %p186 = scmp.eq.s32.totalorder %s19, 0
    %p187 = por %p185, %p186
    %s188 = ssub.s32 %s20, %s32
    %p189 = scmp.eq.s32.totalorder %s188, 0
    %s191 = sadd.s32 %s190, 1
    %s192 = scalar_select %p189, %s190, %s191
    %p195 = pneg %p189
    %p196 = scmp.eq.s32.totalorder %s13, 1
    %p197 = por %p195, %p196
    %p198 = scmp.ne.s32.totalorder %s190, %s193
    %p199 = scmp.eq.s32.totalorder %s13, 0
    %p200 = por %p198, %p199
    %p201 = scmp.ne.s32.totalorder %s190, %s193
    %p202 = scmp.eq.s32.totalorder %s18, 1
    %p203 = por %p201, %p202
    %p204 = scmp.ne.s32.totalorder %s193, %s194
    %p205 = scmp.eq.s32.totalorder %s18, 0
    %p206 = por %p204, %p205
    %p207 = scmp.ne.s32.totalorder %s193, %s194
    %p208 = scmp.eq.s32.totalorder %s19, 1
    %p209 = por %p207, %p208
    %p211 = scmp.ne.s32.totalorder %s194, %s210
    %p212 = scmp.eq.s32.totalorder %s19, 0
    %p213 = por %p211, %p212
    %p214 = scmp.le.s32.totalorder 1, %s13
    %p215 = scmp.lt.s32.totalorder %s13, 3
    %p216 = pnand %p214, %p215
    %p217 = pneg %p216
    // Predicated region
    $region9: #{rnn_model_forward.7} parent=5 // pred_check
      _
    $region10: #{rnn_model_forward.7} parent=5 // pred_check_branch
      %219 = sbr.rel (%p216) target = $region12
    $region11: #{rnn_model_forward.7} parent=5 // pred_region
      %s220 = ssub.s32 %s13, 1
      // Predicated region
      $region13: #{rnn_model_forward.7} parent=11 // pred_check
        %p221 = pneg %p79
      $region14: #{rnn_model_forward.7} parent=11 // pred_check_branch
        %223 = sbr.rel (%p221) target = $region16
      $region15: #{rnn_model_forward.7} parent=11 // pred_region
        %s224 = smul.u32 2, %s22
        %p225 = scmp.lt.s32.totalorder %s224, 1
        %s226 = scalar_select %p225, %s224, 1
        %s227 = smul.addr %s226, 8
        %s228 = scalar_lea.vmem %s1, %s227
        %s229 = smul.u32 2, %s22
      $region16: #{rnn_model_forward.7} parent=11 // pred_fallthru
        _
      // Predicated region
      $region17: #{rnn_model_forward.7} parent=11 // pred_check
        %p230 = pneg %p105
      $region18: #{rnn_model_forward.7} parent=11 // pred_check_branch
        %232 = sbr.rel (%p230) target = $region20
      $region19: #{rnn_model_forward.7} parent=11 // pred_region
        %s233 = smul.u32 2, %s22
        %p234 = scmp.lt.s32.totalorder %s233, 1
        %s235 = scalar_select %p234, %s233, 1
        %s236 = smul.addr %s235, 8
        %s237 = scalar_lea.vmem %s2, %s236
        %s238 = smul.u32 2, %s22
      $region20: #{rnn_model_forward.7} parent=11 // pred_fallthru
        _
      // Predicated region
      $region21: #{rnn_model_forward.7} parent=11 // pred_check
        %p239 = pneg %p126
      $region22: #{rnn_model_forward.7} parent=11 // pred_check_branch
        %241 = sbr.rel (%p239) target = $region24
      $region23: #{rnn_model_forward.7} parent=11 // pred_region
        _
      $region24: #{rnn_model_forward.7} parent=11 // pred_fallthru
        _
    $region12: #{rnn_model_forward.7} parent=5 // pred_fallthru
      _
    %p242 = scmp.lt.s32.totalorder %s13, 2
    // Predicated region
    $region25: #{rnn_model_forward.7} parent=5 // pred_check
      %p243 = pneg %p242
    $region26: #{rnn_model_forward.7} parent=5 // pred_check_branch
      %245 = sbr.rel (%p243) target = $region28
    $region27: #{rnn_model_forward.7} parent=5 // pred_region
      // Predicated region
      $region29: #{rnn_model_forward.7} parent=27 // pred_check
        %p246 = pneg %p47
      $region30: #{rnn_model_forward.7} parent=27 // pred_check_branch
        %248 = sbr.rel (%p246) target = $region32
      $region31: #{rnn_model_forward.7} parent=27 // pred_region
        %s249 = smul.u32 4, %s21
        %s250 = smul.u32 2, %s20
        %p251 = scmp.lt.s32.totalorder %s249, 7
        %s252 = scalar_select %p251, %s249, 7
        %p253 = scmp.lt.s32.totalorder %s250, 1
        %s254 = scalar_select %p253, %s250, 1
        %s255 = smul.addr %s254, 4
        %s256 = smul.addr %s252, 8
        %s257 = sadd.s32 %s255, %s256
        %s258 = smul.addr %s257, 4
        %s259 = scalar_lea.vmem %s0, %s258
        %s260 = smul.u32 4, %s21
        %s261 = smul.u32 2, %s20
      $region32: #{rnn_model_forward.7} parent=27 // pred_fallthru
        _
    $region28: #{rnn_model_forward.7} parent=5 // pred_fallthru
      _
    %p262 = scmp.le.s32.totalorder 1, %s13
    %p263 = scmp.lt.s32.totalorder %s13, 3
    %p264 = pnand %p262, %p263
    %p265 = pneg %p264
    // Predicated region
    $region33: #{rnn_model_forward.7} parent=5 // pred_check
      _
    $region34: #{rnn_model_forward.7} parent=5 // pred_check_branch
      %267 = sbr.rel (%p264) target = $region36
    $region35: #{rnn_model_forward.7} parent=5 // pred_region
      %s268 = ssub.s32 %s13, 1
      %s269 = smul.u32 4, %s23
      %s270 = smul.u32 2, %s22
      %p271 = scmp.lt.s32.totalorder %s269, 7
      %s272 = scalar_select %p271, %s269, 7
      %p273 = scmp.lt.s32.totalorder %s270, 1
      %s274 = scalar_select %p273, %s270, 1
      %s275 = smul.addr %s274, 4
      %s276 = smul.addr %s272, 8
      %s277 = sadd.s32 %s275, %s276
      %s278 = smul.addr %s277, 4
      %s279 = scalar_lea.vmem %s0, %s278
      %p280 = pneg %p53
      %p281 = pneg %p50
      %s282 = smul.u32 2, %s22
      %p283 = scmp.lt.s32.totalorder %s282, 1
      %s284 = scalar_select %p283, %s282, 1
      %s285 = smul.addr %s284, 8
      %s286 = scalar_lea.vmem %s1, %s285
      %p287 = pneg %p79
      %p288 = pneg %p76
      %s289 = smul.u32 2, %s22
      %p290 = scmp.lt.s32.totalorder %s289, 1
      %s291 = scalar_select %p290, %s289, 1
      %s292 = smul.addr %s291, 8
      %s293 = scalar_lea.vmem %s2, %s292
      %p294 = pneg %p105
      %p295 = pneg %p102
      %p296 = pneg %p126
      %p297 = pneg %p123
      %p298 = pneg %p154
      %p299 = pneg %p151
      %s300 = smul.u32 4, %s23
      %s301 = smul.u32 2, %s22
      %p302 = scmp.lt.s32.totalorder %s300, 7
      %s303 = scalar_select %p302, %s300, 7
      %p304 = scmp.lt.s32.totalorder %s301, 1
      %s305 = scalar_select %p304, %s301, 1
      %s306 = smul.addr %s303, 2
      %s307 = sadd.s32 %s305, %s306
      %s308 = smul.addr %s307, 4
      %s309 = scalar_lea.vmem %s4, %s308
      %p310 = pneg %p180
      %p311 = pneg %p177
      %s312 = smul.u32 2, %s22
      %p313 = scmp.lt.s32.totalorder %s312, 1
      %s314 = scalar_select %p313, %s312, 1
      %s315 = smul.addr %s314, 8
      %s316 = scalar_lea.vmem %s5, %s315
      %p317 = pneg %p206
      %p318 = pneg %p203
      %s319 = smul.u32 2, %s22
      %p320 = scmp.lt.s32.totalorder %s319, 1
      %s321 = scalar_select %p320, %s319, 1
      %s322 = smul.addr %s321, 8
      %s323 = scalar_lea.vmem %s6, %s322
      %s324 = smul.u32 4, %s23
      %s325 = smul.u32 2, %s22
      %p326 = scmp.lt.s32.totalorder %s324, 7
      %s327 = scalar_select %p326, %s324, 7
      %p328 = scmp.lt.s32.totalorder %s325, 1
      %s329 = scalar_select %p328, %s325, 1
      %s330 = smul.addr %s329, 4
      %s331 = smul.addr %s327, 8
      %s332 = sadd.s32 %s330, %s331
      %s333 = smul.addr %s332, 4
      %s334 = scalar_lea.vmem %s0, %s333
      %s335 = smul.u32 4, %s23
      %s336 = smul.u32 2, %s22
      %s337 = smul.u32 2, %s22
      %p338 = scmp.lt.s32.totalorder %s337, 1
      %s339 = scalar_select %p338, %s337, 1
      %s340 = smul.addr %s339, 8
      %s341 = scalar_lea.vmem %s1, %s340
      %s342 = smul.u32 2, %s22
      %s343 = smul.u32 2, %s22
      %p344 = scmp.lt.s32.totalorder %s343, 1
      %s345 = scalar_select %p344, %s343, 1
      %s346 = smul.addr %s345, 8
      %s347 = scalar_lea.vmem %s2, %s346
      %s348 = smul.u32 2, %s22
      %s349 = smul.u32 4, %s23
      %s350 = smul.u32 2, %s22
      %p351 = scmp.lt.s32.totalorder %s349, 7
      %s352 = scalar_select %p351, %s349, 7
      %p353 = scmp.lt.s32.totalorder %s350, 1
      %s354 = scalar_select %p353, %s350, 1
      %s355 = smul.addr %s352, 2
      %s356 = sadd.s32 %s354, %s355
      %s357 = smul.addr %s356, 4
      %s358 = scalar_lea.vmem %s4, %s357
      %s359 = smul.u32 4, %s23
      %s360 = smul.u32 2, %s22
      %s361 = smul.u32 2, %s22
      %p362 = scmp.lt.s32.totalorder %s361, 1
      %s363 = scalar_select %p362, %s361, 1
      %s364 = smul.addr %s363, 8
      %s365 = scalar_lea.vmem %s5, %s364
      %s366 = smul.u32 2, %s22
      %s367 = smul.u32 2, %s22
      %p368 = scmp.lt.s32.totalorder %s367, 1
      %s369 = scalar_select %p368, %s367, 1
      %s370 = smul.addr %s369, 8
      %s371 = scalar_lea.vmem %s6, %s370
      %s372 = smul.u32 2, %s22
      %p374 = scmp.eq.s32.totalorder %s23, 0
      // Predicated region
      $region37: #{rnn_model_forward.7} parent=35 // pred_check
        %p375 = pneg %p374
      $region38: #{rnn_model_forward.7} parent=35 // pred_check_branch
        %377 = sbr.rel (%p375) target = $region40
      $region39: #{rnn_model_forward.7} parent=35 // pred_region
        %v378 = vld [vmem:[%s341] sm:$0xff]
        %v379 = vld [vmem:[%s341 + $0x8] sm:$0xff]
        %380 = vst [vmem:[#allocation2] sm:$0xff] %v378
        %381 = vst [vmem:[#allocation2 + $0x8] sm:$0xff] %v379
        %v382 = vld [vmem:[%s347] sm:$0xff]
        %v383 = vld [vmem:[%s347 + $0x8] sm:$0xff]
        %384 = vst [vmem:[#allocation3] sm:$0xff] %v382
        %385 = vst [vmem:[#allocation3 + $0x8] sm:$0xff] %v383
      $region40: #{rnn_model_forward.7} parent=35 // pred_fallthru
        _
      %v386 = vld [vmem:[%s3] sm:$0xff]
      %v387 = vld [vmem:[%s3 + $0x8] sm:$0xff]
      %v388 = vld [vmem:[%s3 + $0x10] sm:$0xff]
      %v389 = vld [vmem:[%s3 + $0x18] sm:$0xff]
      %v390 = vld [vmem:[%s3 + $0x20] sm:$0xff]
      %v391 = vld [vmem:[%s3 + $0x28] sm:$0xff]
      %v392 = vld [vmem:[%s3 + $0x30] sm:$0xff]
      %v393 = vld [vmem:[%s3 + $0x38] sm:$0xff]
      %v394 = vld [vmem:[%s3 + $0x40] sm:$0xff]
      %v395 = vld [vmem:[%s3 + $0x48] sm:$0xff]
      %v396 = vld [vmem:[%s3 + $0x50] sm:$0xff]
      %v397 = vld [vmem:[%s3 + $0x58] sm:$0xff]
      %v398 = vld [vmem:[%s3 + $0x60] sm:$0xff]
      %v399 = vld [vmem:[%s3 + $0x68] sm:$0xff]
      %v400 = vld [vmem:[%s3 + $0x70] sm:$0xff]
      %v401 = vld [vmem:[%s3 + $0x78] sm:$0xff]
      %v402 = vld [vmem:[%s3 + $0x80] sm:$0xff]
      %v403 = vld [vmem:[%s3 + $0x88] sm:$0xff]
      %v404 = vld [vmem:[%s3 + $0x90] sm:$0xff]
      %v405 = vld [vmem:[%s3 + $0x98] sm:$0xff]
      %v406 = vld [vmem:[%s3 + $0xa0] sm:$0xff]
      %v407 = vld [vmem:[%s3 + $0xa8] sm:$0xff]
      %v408 = vld [vmem:[%s3 + $0xb0] sm:$0xff]
      %v409 = vld [vmem:[%s3 + $0xb8] sm:$0xff]
      %v410 = vld [vmem:[%s3 + $0xc0] sm:$0xff]
      %v411 = vld [vmem:[%s3 + $0xc8] sm:$0xff]
      %v412 = vld [vmem:[%s3 + $0xd0] sm:$0xff]
      %v413 = vld [vmem:[%s3 + $0xd8] sm:$0xff]
      %v414 = vld [vmem:[%s3 + $0xe0] sm:$0xff]
      %v415 = vld [vmem:[%s3 + $0xe8] sm:$0xff]
      %v416 = vld [vmem:[%s3 + $0xf0] sm:$0xff]
      %v417 = vld [vmem:[%s3 + $0xf8] sm:$0xff]
      %v418 = vld [vmem:[#allocation2] sm:$0xff]
      %v419 = vld [vmem:[#allocation2 + $0x8] sm:$0xff]
      %v420 = vld [vmem:[#allocation3] sm:$0xff]
      %v421 = vld [vmem:[#allocation3 + $0x8] sm:$0xff]
      %v422 = vld [vmem:[%s334] sm:$0xff]
      %v423 = vld [vmem:[%s334 + $0x8] sm:$0xff]
      %v424 = vld [vmem:[%s334 + $0x10] sm:$0xff]
      %v425 = vld [vmem:[%s334 + $0x18] sm:$0xff]
      %v426 = vunpack.c.l.bf16 %v422
      %v427 = vunpack.c.h.bf16 %v422
      %v428 = vunpack.c.l.bf16 %v423
      %v429 = vunpack.c.h.bf16 %v423
      %v430 = vunpack.c.l.bf16 %v424
      %v431 = vunpack.c.h.bf16 %v424
      %v432 = vunpack.c.l.bf16 %v425
      %v433 = vunpack.c.h.bf16 %v425
      %v434 = vpack.c.bf16 %v419, %v418
      %v467 = vunpack.c.l.b16 %v386
      %v468 = vunpack.c.h.b16 %v386
      %v469 = vunpack.c.l.b16 %v387
      %v470 = vunpack.c.h.b16 %v387
      %v471 = vunpack.c.l.b16 %v388
      %v472 = vunpack.c.h.b16 %v388
      %v473 = vunpack.c.l.b16 %v389
      %v474 = vunpack.c.h.b16 %v389
      %v475 = vunpack.c.l.b16 %v390
      %v476 = vunpack.c.h.b16 %v390
      %v477 = vunpack.c.l.b16 %v391
      %v478 = vunpack.c.h.b16 %v391
      %v479 = vunpack.c.l.b16 %v392
      %v480 = vunpack.c.h.b16 %v392
      %v481 = vunpack.c.l.b16 %v393
      %v482 = vunpack.c.h.b16 %v393
      %v483 = vunpack.c.l.b16 %v394
      %v484 = vunpack.c.h.b16 %v394
      %v485 = vunpack.c.l.b16 %v395
      %v486 = vunpack.c.h.b16 %v395
      %v487 = vunpack.c.l.b16 %v396
      %v488 = vunpack.c.h.b16 %v396
      %v489 = vunpack.c.l.b16 %v397
      %v490 = vunpack.c.h.b16 %v397
      %v491 = vunpack.c.l.b16 %v398
      %v492 = vunpack.c.h.b16 %v398
      %v493 = vunpack.c.l.b16 %v399
      %v494 = vunpack.c.h.b16 %v399
      %v495 = vunpack.c.l.b16 %v400
      %v496 = vunpack.c.h.b16 %v400
      %v497 = vunpack.c.l.b16 %v401
      %v498 = vunpack.c.h.b16 %v401
      %v499 = vunpack.c.l.b16 %v402
      %v500 = vunpack.c.h.b16 %v402
      %v501 = vunpack.c.l.b16 %v403
      %v502 = vunpack.c.h.b16 %v403
      %v503 = vunpack.c.l.b16 %v404
      %v504 = vunpack.c.h.b16 %v404
      %v505 = vunpack.c.l.b16 %v405
      %v506 = vunpack.c.h.b16 %v405
      %v507 = vunpack.c.l.b16 %v406
      %v508 = vunpack.c.h.b16 %v406
      %v509 = vunpack.c.l.b16 %v407
      %v510 = vunpack.c.h.b16 %v407
      %v511 = vunpack.c.l.b16 %v408
      %v512 = vunpack.c.h.b16 %v408
      %v513 = vunpack.c.l.b16 %v409
      %v514 = vunpack.c.h.b16 %v409
      %v515 = vunpack.c.l.b16 %v410
      %v516 = vunpack.c.h.b16 %v410
      %v517 = vunpack.c.l.b16 %v411
      %v518 = vunpack.c.h.b16 %v411
      %v519 = vunpack.c.l.b16 %v412
      %v520 = vunpack.c.h.b16 %v412
      %v521 = vunpack.c.l.b16 %v413
      %v522 = vunpack.c.h.b16 %v413
      %v523 = vunpack.c.l.b16 %v414
      %v524 = vunpack.c.h.b16 %v414
      %v525 = vunpack.c.l.b16 %v415
      %v526 = vunpack.c.h.b16 %v415
      %v527 = vunpack.c.l.b16 %v416
      %v528 = vunpack.c.h.b16 %v416
      %v529 = vunpack.c.l.b16 %v417
      %v530 = vunpack.c.h.b16 %v417
      %v531 = vpack.c.b16 %v471, %v467
      %v532 = vpack.c.b16 %v472, %v468
      %v533 = vpack.c.b16 %v473, %v469
      %v534 = vpack.c.b16 %v474, %v470
      %v535 = vpack.c.b16 %v479, %v475
      %v536 = vpack.c.b16 %v480, %v476
      %v537 = vpack.c.b16 %v481, %v477
      %v538 = vpack.c.b16 %v482, %v478
      %v539 = vpack.c.b16 %v487, %v483
      %v540 = vpack.c.b16 %v488, %v484
      %v541 = vpack.c.b16 %v489, %v485
      %v542 = vpack.c.b16 %v490, %v486
      %v543 = vpack.c.b16 %v495, %v491
      %v544 = vpack.c.b16 %v496, %v492
      %v545 = vpack.c.b16 %v497, %v493
      %v546 = vpack.c.b16 %v498, %v494
      %v547 = vpack.c.b16 %v503, %v499
      %v548 = vpack.c.b16 %v504, %v500
      %v549 = vpack.c.b16 %v505, %v501
      %v550 = vpack.c.b16 %v506, %v502
      %v551 = vpack.c.b16 %v511, %v507
      %v552 = vpack.c.b16 %v512, %v508
      %v553 = vpack.c.b16 %v513, %v509
      %v554 = vpack.c.b16 %v514, %v510
      %v555 = vpack.c.b16 %v519, %v515
      %v556 = vpack.c.b16 %v520, %v516
      %v557 = vpack.c.b16 %v521, %v517
      %v558 = vpack.c.b16 %v522, %v518
      %v559 = vpack.c.b16 %v527, %v523
      %v560 = vpack.c.b16 %v528, %v524
      %v561 = vpack.c.b16 %v529, %v525
      %v562 = vpack.c.b16 %v530, %v526
      %595 = vmatprep.subr.bf16.mxu0 %v560
      %596 = vmatpush1.bf16.msra.mxu0 %v559
      %597 = vmatprep.subr.bf16.mxu0 %v556
      %598 = vmatpush1.bf16.msra.mxu0 %v555
      %599 = vmatprep.subr.bf16.mxu0 %v552
      %600 = vmatpush1.bf16.msra.mxu0 %v551
      %601 = vmatprep.subr.bf16.mxu0 %v548
      %602 = vmatpush1.bf16.msra.mxu0 %v547
      %603 = vmatprep.subr.bf16.mxu0 %v544
      %604 = vmatpush1.bf16.msra.mxu0 %v543
      %605 = vmatprep.subr.bf16.mxu0 %v540
      %606 = vmatpush1.bf16.msra.mxu0 %v539
      %607 = vmatprep.subr.bf16.mxu0 %v536
      %608 = vmatpush1.bf16.msra.mxu0 %v535
      %609 = vmatprep.subr.bf16.mxu0 %v532
      %610 = vmatpush1.bf16.msra.mxu0 %v531
      %611 = vmatprep.subr.bf16.mxu0 0
      %612 = vmatpush2.bf16.msra.mxu0 0
      %613 = vmatprep.subr.bf16.mxu0 0
      %614 = vmatpush2.bf16.msra.mxu0 0
      %615 = vmatprep.subr.bf16.mxu0 0
      %616 = vmatpush2.bf16.msra.mxu0 0
      %617 = vmatprep.subr.bf16.mxu0 0
      %618 = vmatpush2.bf16.msra.mxu0 0
      %619 = vmatprep.subr.bf16.mxu0 0
      %620 = vmatpush2.bf16.msra.mxu0 0
      %621 = vmatprep.subr.bf16.mxu0 0
      %622 = vmatpush2.bf16.msra.mxu0 0
      %623 = vmatprep.subr.bf16.mxu0 0
      %624 = vmatpush2.bf16.msra.mxu0 0
      %625 = vmatprep.subr.bf16.mxu0 0
      %626 = vmatpush2.bf16.msra.mxu0 0
      %627 = vmatprep.mubr.bf16.mxu0 0
      %628 = vmatmul.mubr.bf16.gmra.mxu0 %v434
      %v629 = vpop.f32.mrf.mxu0
      %v630 = vadd.f32 0.0, %v629
      %v631 = vpop.f32.mrf.mxu0
      %v632 = vadd.f32 0.0, %v631
      %v633 = vpop.f32.mrf.mxu0
      %v634 = vadd.f32 0.0, %v633
      %v635 = vpop.f32.mrf.mxu0
      %v636 = vadd.f32 0.0, %v635
      %637 = vdwg.mxu0
      %638 = vmatprep.subr.bf16.mxu0 %v562
      %639 = vmatpush1.bf16.msra.mxu0 %v561
      %640 = vmatprep.subr.bf16.mxu0 %v558
      %641 = vmatpush1.bf16.msra.mxu0 %v557
      %642 = vmatprep.subr.bf16.mxu0 %v554
      %643 = vmatpush1.bf16.msra.mxu0 %v553
      %644 = vmatprep.subr.bf16.mxu0 %v550
      %645 = vmatpush1.bf16.msra.mxu0 %v549
      %646 = vmatprep.subr.bf16.mxu0 %v546
      %647 = vmatpush1.bf16.msra.mxu0 %v545
      %648 = vmatprep.subr.bf16.mxu0 %v542
      %649 = vmatpush1.bf16.msra.mxu0 %v541
      %650 = vmatprep.subr.bf16.mxu0 %v538
      %651 = vmatpush1.bf16.msra.mxu0 %v537
      %652 = vmatprep.subr.bf16.mxu0 %v534
      %653 = vmatpush1.bf16.msra.mxu0 %v533
      %654 = vmatprep.subr.bf16.mxu0 0
      %655 = vmatpush2.bf16.msra.mxu0 0
      %656 = vmatprep.subr.bf16.mxu0 0
      %657 = vmatpush2.bf16.msra.mxu0 0
      %658 = vmatprep.subr.bf16.mxu0 0
      %659 = vmatpush2.bf16.msra.mxu0 0
      %660 = vmatprep.subr.bf16.mxu0 0
      %661 = vmatpush2.bf16.msra.mxu0 0
      %662 = vmatprep.subr.bf16.mxu0 0
      %663 = vmatpush2.bf16.msra.mxu0 0
      %664 = vmatprep.subr.bf16.mxu0 0
      %665 = vmatpush2.bf16.msra.mxu0 0
      %666 = vmatprep.subr.bf16.mxu0 0
      %667 = vmatpush2.bf16.msra.mxu0 0
      %668 = vmatprep.subr.bf16.mxu0 0
      %669 = vmatpush2.bf16.msra.mxu0 0
      %670 = vmatprep.mubr.bf16.mxu0 0
      %671 = vmatmul.mubr.bf16.gmra.mxu0 %v434
      %v672 = vpop.f32.mrf.mxu0
      %v673 = vadd.f32 0.0, %v672
      %v674 = vpop.f32.mrf.mxu0
      %v675 = vadd.f32 0.0, %v674
      %v676 = vpop.f32.mrf.mxu0
      %v677 = vadd.f32 0.0, %v676
      %v678 = vpop.f32.mrf.mxu0
      %v679 = vadd.f32 0.0, %v678
      %680 = vdwg.mxu0
      %v681 = vadd.f32 %v426, %v630
      %v682 = vadd.f32 %v427, %v632
      %v683 = vadd.f32 %v428, %v673
      %v684 = vadd.f32 %v429, %v675
      %v685 = vadd.f32 %v430, %v634
      %v686 = vadd.f32 %v431, %v636
      %v687 = vadd.f32 %v432, %v677
      %v688 = vadd.f32 %v433, %v679
      %v689 = vxor.u32 %v681, 2147483648
      %v690 = vxor.u32 %v685, 2147483648
      %v691 = vmul.f32 %v689, 1.442695
      %v692 = vpow.pop %v691
      %v693 = vmul.f32 %v690, 1.442695
      %v694 = vpow.pop %v693
      %v695 = vadd.f32 %v692, 1.0
      %v696 = vadd.f32 %v694, 1.0
      %v697 = vrcp.pop %v695
      %v698 = vmul.f32 1.0, %v697
      %v699 = vrcp.pop %v696
      %v700 = vmul.f32 1.0, %v699
      %v701 = vxor.u32 %v682, 2147483648
      %v702 = vxor.u32 %v686, 2147483648
      %v703 = vmul.f32 %v701, 1.442695
      %v704 = vpow.pop %v703
      %v705 = vmul.f32 %v702, 1.442695
      %v706 = vpow.pop %v705
      %v707 = vadd.f32 %v704, 1.0
      %v708 = vadd.f32 %v706, 1.0
      %v709 = vrcp.pop %v707
      %v710 = vmul.f32 1.0, %v709
      %v711 = vrcp.pop %v708
      %v712 = vmul.f32 1.0, %v711
      %v713 = vtanh.pop %v683
      %v714 = vtanh.pop %v687
      %v715 = vxor.u32 %v684, 2147483648
      %v716 = vxor.u32 %v688, 2147483648
      %v717 = vmul.f32 %v715, 1.442695
      %v718 = vpow.pop %v717
      %v719 = vmul.f32 %v716, 1.442695
      %v720 = vpow.pop %v719
      %v721 = vadd.f32 %v718, 1.0
      %v722 = vadd.f32 %v720, 1.0
      %v723 = vrcp.pop %v721
      %v724 = vmul.f32 1.0, %v723
      %v725 = vrcp.pop %v722
      %v726 = vmul.f32 1.0, %v725
      %v727 = vmul.f32 %v710, %v420
      %v728 = vmul.f32 %v712, %v421
      %v729 = vmul.f32 %v698, %v713
      %v730 = vmul.f32 %v700, %v714
      %v731 = vadd.f32 %v727, %v729
      %v732 = vadd.f32 %v728, %v730
      %v733 = vtanh.pop %v731
      %v734 = vtanh.pop %v732
      %v735 = vmul.f32 %v724, %v733
      %v736 = vmul.f32 %v726, %v734
      %v737 = vpack.c.bf16 %v736, %v735
      %v739 = vunpack.c.l.b16 %v737
      %v740 = vunpack.c.h.b16 %v737
      %v741 = vpack.c.b16 %v739, %v739
      %v742 = vpack.c.b16 %v740, %v740
      %745 = vst [vmem:[%s358] sm:$0xf] %v741
      %746 = vst [vmem:[%s358 + $0x4] sm:$0xf] %v742
      %s747 = scalar_lea.vmem %s334, 32
      %v748 = vld [vmem:[%s747] sm:$0xff]
      %v749 = vld [vmem:[%s747 + $0x8] sm:$0xff]
      %v750 = vld [vmem:[%s747 + $0x10] sm:$0xff]
      %v751 = vld [vmem:[%s747 + $0x18] sm:$0xff]
      %v752 = vunpack.c.l.bf16 %v748
      %v753 = vunpack.c.h.bf16 %v748
      %v754 = vunpack.c.l.bf16 %v749
      %v755 = vunpack.c.h.bf16 %v749
      %v756 = vunpack.c.l.bf16 %v750
      %v757 = vunpack.c.h.bf16 %v750
      %v758 = vunpack.c.l.bf16 %v751
      %v759 = vunpack.c.h.bf16 %v751
      %760 = vmatprep.subr.bf16.mxu0 %v560
      %761 = vmatpush1.bf16.msra.mxu0 %v559
      %762 = vmatprep.subr.bf16.mxu0 %v556
      %763 = vmatpush1.bf16.msra.mxu0 %v555
      %764 = vmatprep.subr.bf16.mxu0 %v552
      %765 = vmatpush1.bf16.msra.mxu0 %v551
      %766 = vmatprep.subr.bf16.mxu0 %v548
      %767 = vmatpush1.bf16.msra.mxu0 %v547
      %768 = vmatprep.subr.bf16.mxu0 %v544
      %769 = vmatpush1.bf16.msra.mxu0 %v543
      %770 = vmatprep.subr.bf16.mxu0 %v540
      %771 = vmatpush1.bf16.msra.mxu0 %v539
      %772 = vmatprep.subr.bf16.mxu0 %v536
      %773 = vmatpush1.bf16.msra.mxu0 %v535
      %774 = vmatprep.subr.bf16.mxu0 %v532
      %775 = vmatpush1.bf16.msra.mxu0 %v531
      %776 = vmatprep.subr.bf16.mxu0 0
      %777 = vmatpush2.bf16.msra.mxu0 0
      %778 = vmatprep.subr.bf16.mxu0 0
      %779 = vmatpush2.bf16.msra.mxu0 0
      %780 = vmatprep.subr.bf16.mxu0 0
      %781 = vmatpush2.bf16.msra.mxu0 0
      %782 = vmatprep.subr.bf16.mxu0 0
      %783 = vmatpush2.bf16.msra.mxu0 0
      %784 = vmatprep.subr.bf16.mxu0 0
      %785 = vmatpush2.bf16.msra.mxu0 0
      %786 = vmatprep.subr.bf16.mxu0 0
      %787 = vmatpush2.bf16.msra.mxu0 0
      %788 = vmatprep.subr.bf16.mxu0 0
      %789 = vmatpush2.bf16.msra.mxu0 0
      %790 = vmatprep.subr.bf16.mxu0 0
      %791 = vmatpush2.bf16.msra.mxu0 0
      %792 = vmatprep.mubr.bf16.mxu0 0
      %793 = vmatmul.mubr.bf16.gmra.mxu0 %v737
      %v794 = vpop.f32.mrf.mxu0
      %v795 = vadd.f32 0.0, %v794
      %v796 = vpop.f32.mrf.mxu0
      %v797 = vadd.f32 0.0, %v796
      %v798 = vpop.f32.mrf.mxu0
      %v799 = vadd.f32 0.0, %v798
      %v800 = vpop.f32.mrf.mxu0
      %v801 = vadd.f32 0.0, %v800
      %802 = vdwg.mxu0
      %803 = vmatprep.subr.bf16.mxu0 %v562
      %804 = vmatpush1.bf16.msra.mxu0 %v561
      %805 = vmatprep.subr.bf16.mxu0 %v558
      %806 = vmatpush1.bf16.msra.mxu0 %v557
      %807 = vmatprep.subr.bf16.mxu0 %v554
      %808 = vmatpush1.bf16.msra.mxu0 %v553
      %809 = vmatprep.subr.bf16.mxu0 %v550
      %810 = vmatpush1.bf16.msra.mxu0 %v549
      %811 = vmatprep.subr.bf16.mxu0 %v546
      %812 = vmatpush1.bf16.msra.mxu0 %v545
      %813 = vmatprep.subr.bf16.mxu0 %v542
      %814 = vmatpush1.bf16.msra.mxu0 %v541
      %815 = vmatprep.subr.bf16.mxu0 %v538
      %816 = vmatpush1.bf16.msra.mxu0 %v537
      %817 = vmatprep.subr.bf16.mxu0 %v534
      %818 = vmatpush1.bf16.msra.mxu0 %v533
      %819 = vmatprep.subr.bf16.mxu0 0
      %820 = vmatpush2.bf16.msra.mxu0 0
      %821 = vmatprep.subr.bf16.mxu0 0
      %822 = vmatpush2.bf16.msra.mxu0 0
      %823 = vmatprep.subr.bf16.mxu0 0
      %824 = vmatpush2.bf16.msra.mxu0 0
      %825 = vmatprep.subr.bf16.mxu0 0
      %826 = vmatpush2.bf16.msra.mxu0 0
      %827 = vmatprep.subr.bf16.mxu0 0
      %828 = vmatpush2.bf16.msra.mxu0 0
      %829 = vmatprep.subr.bf16.mxu0 0
      %830 = vmatpush2.bf16.msra.mxu0 0
      %831 = vmatprep.subr.bf16.mxu0 0
      %832 = vmatpush2.bf16.msra.mxu0 0
      %833 = vmatprep.subr.bf16.mxu0 0
      %834 = vmatpush2.bf16.msra.mxu0 0
      %835 = vmatprep.mubr.bf16.mxu0 0
      %836 = vmatmul.mubr.bf16.gmra.mxu0 %v737
      %v837 = vpop.f32.mrf.mxu0
      %v838 = vadd.f32 0.0, %v837
      %v839 = vpop.f32.mrf.mxu0
      %v840 = vadd.f32 0.0, %v839
      %v841 = vpop.f32.mrf.mxu0
      %v842 = vadd.f32 0.0, %v841
      %v843 = vpop.f32.mrf.mxu0
      %v844 = vadd.f32 0.0, %v843
      %845 = vdwg.mxu0
      %v846 = vadd.f32 %v752, %v795
      %v847 = vadd.f32 %v753, %v797
      %v848 = vadd.f32 %v754, %v838
      %v849 = vadd.f32 %v755, %v840
      %v850 = vadd.f32 %v756, %v799
      %v851 = vadd.f32 %v757, %v801
      %v852 = vadd.f32 %v758, %v842
      %v853 = vadd.f32 %v759, %v844
      %v854 = vxor.u32 %v846, 2147483648
      %v855 = vxor.u32 %v850, 2147483648
      %v856 = vmul.f32 %v854, 1.442695
      %v857 = vpow.pop %v856
      %v858 = vmul.f32 %v855, 1.442695
      %v859 = vpow.pop %v858
      %v860 = vadd.f32 %v857, 1.0
      %v861 = vadd.f32 %v859, 1.0
      %v862 = vrcp.pop %v860
      %v863 = vmul.f32 1.0, %v862
      %v864 = vrcp.pop %v861
      %v865 = vmul.f32 1.0, %v864
      %v866 = vxor.u32 %v847, 2147483648
      %v867 = vxor.u32 %v851, 2147483648
      %v868 = vmul.f32 %v866, 1.442695
      %v869 = vpow.pop %v868
      %v870 = vmul.f32 %v867, 1.442695
      %v871 = vpow.pop %v870
      %v872 = vadd.f32 %v869, 1.0
      %v873 = vadd.f32 %v871, 1.0
      %v874 = vrcp.pop %v872
      %v875 = vmul.f32 1.0, %v874
      %v876 = vrcp.pop %v873
      %v877 = vmul.f32 1.0, %v876
      %v878 = vtanh.pop %v848
      %v879 = vtanh.pop %v852
      %v880 = vxor.u32 %v849, 2147483648
      %v881 = vxor.u32 %v853, 2147483648
      %v882 = vmul.f32 %v880, 1.442695
      %v883 = vpow.pop %v882
      %v884 = vmul.f32 %v881, 1.442695
      %v885 = vpow.pop %v884
      %v886 = vadd.f32 %v883, 1.0
      %v887 = vadd.f32 %v885, 1.0
      %v888 = vrcp.pop %v886
      %v889 = vmul.f32 1.0, %v888
      %v890 = vrcp.pop %v887
      %v891 = vmul.f32 1.0, %v890
      %v892 = vmul.f32 %v875, %v731
      %v893 = vmul.f32 %v877, %v732
      %v894 = vmul.f32 %v863, %v878
      %v895 = vmul.f32 %v865, %v879
      %v896 = vadd.f32 %v892, %v894
      %v897 = vadd.f32 %v893, %v895
      %v898 = vtanh.pop %v896
      %v899 = vtanh.pop %v897
      %v900 = vmul.f32 %v889, %v898
      %v901 = vmul.f32 %v891, %v899
      %v902 = vpack.c.bf16 %v901, %v900
      %v904 = vunpack.c.l.b16 %v902
      %v905 = vunpack.c.h.b16 %v902
      %v906 = vpack.c.b16 %v904, %v904
      %v907 = vpack.c.b16 %v905, %v905
      %s910 = scalar_lea.vmem %s358, 8
      %911 = vst [vmem:[%s910] sm:$0xf] %v906
      %912 = vst [vmem:[%s910 + $0x4] sm:$0xf] %v907
      %s913 = scalar_lea.vmem %s334, 64
      %v914 = vld [vmem:[%s913] sm:$0xff]
      %v915 = vld [vmem:[%s913 + $0x8] sm:$0xff]
      %v916 = vld [vmem:[%s913 + $0x10] sm:$0xff]
      %v917 = vld [vmem:[%s913 + $0x18] sm:$0xff]
      %v918 = vunpack.c.l.bf16 %v914
      %v919 = vunpack.c.h.bf16 %v914
      %v920 = vunpack.c.l.bf16 %v915
      %v921 = vunpack.c.h.bf16 %v915
      %v922 = vunpack.c.l.bf16 %v916
      %v923 = vunpack.c.h.bf16 %v916
      %v924 = vunpack.c.l.bf16 %v917
      %v925 = vunpack.c.h.bf16 %v917
      %926 = vmatprep.subr.bf16.mxu0 %v560
      %927 = vmatpush1.bf16.msra.mxu0 %v559
      %928 = vmatprep.subr.bf16.mxu0 %v556
      %929 = vmatpush1.bf16.msra.mxu0 %v555
      %930 = vmatprep.subr.bf16.mxu0 %v552
      %931 = vmatpush1.bf16.msra.mxu0 %v551
      %932 = vmatprep.subr.bf16.mxu0 %v548
      %933 = vmatpush1.bf16.msra.mxu0 %v547
      %934 = vmatprep.subr.bf16.mxu0 %v544
      %935 = vmatpush1.bf16.msra.mxu0 %v543
      %936 = vmatprep.subr.bf16.mxu0 %v540
      %937 = vmatpush1.bf16.msra.mxu0 %v539
      %938 = vmatprep.subr.bf16.mxu0 %v536
      %939 = vmatpush1.bf16.msra.mxu0 %v535
      %940 = vmatprep.subr.bf16.mxu0 %v532
      %941 = vmatpush1.bf16.msra.mxu0 %v531
      %942 = vmatprep.subr.bf16.mxu0 0
      %943 = vmatpush2.bf16.msra.mxu0 0
      %944 = vmatprep.subr.bf16.mxu0 0
      %945 = vmatpush2.bf16.msra.mxu0 0
      %946 = vmatprep.subr.bf16.mxu0 0
      %947 = vmatpush2.bf16.msra.mxu0 0
      %948 = vmatprep.subr.bf16.mxu0 0
      %949 = vmatpush2.bf16.msra.mxu0 0
      %950 = vmatprep.subr.bf16.mxu0 0
      %951 = vmatpush2.bf16.msra.mxu0 0
      %952 = vmatprep.subr.bf16.mxu0 0
      %953 = vmatpush2.bf16.msra.mxu0 0
      %954 = vmatprep.subr.bf16.mxu0 0
      %955 = vmatpush2.bf16.msra.mxu0 0
      %956 = vmatprep.subr.bf16.mxu0 0
      %957 = vmatpush2.bf16.msra.mxu0 0
      %958 = vmatprep.mubr.bf16.mxu0 0
      %959 = vmatmul.mubr.bf16.gmra.mxu0 %v902
      %v960 = vpop.f32.mrf.mxu0
      %v961 = vadd.f32 0.0, %v960
      %v962 = vpop.f32.mrf.mxu0
      %v963 = vadd.f32 0.0, %v962
      %v964 = vpop.f32.mrf.mxu0
      %v965 = vadd.f32 0.0, %v964
      %v966 = vpop.f32.mrf.mxu0
      %v967 = vadd.f32 0.0, %v966
      %968 = vdwg.mxu0
      %969 = vmatprep.subr.bf16.mxu0 %v562
      %970 = vmatpush1.bf16.msra.mxu0 %v561
      %971 = vmatprep.subr.bf16.mxu0 %v558
      %972 = vmatpush1.bf16.msra.mxu0 %v557
      %973 = vmatprep.subr.bf16.mxu0 %v554
      %974 = vmatpush1.bf16.msra.mxu0 %v553
      %975 = vmatprep.subr.bf16.mxu0 %v550
      %976 = vmatpush1.bf16.msra.mxu0 %v549
      %977 = vmatprep.subr.bf16.mxu0 %v546
      %978 = vmatpush1.bf16.msra.mxu0 %v545
      %979 = vmatprep.subr.bf16.mxu0 %v542
      %980 = vmatpush1.bf16.msra.mxu0 %v541
      %981 = vmatprep.subr.bf16.mxu0 %v538
      %982 = vmatpush1.bf16.msra.mxu0 %v537
      %983 = vmatprep.subr.bf16.mxu0 %v534
      %984 = vmatpush1.bf16.msra.mxu0 %v533
      %985 = vmatprep.subr.bf16.mxu0 0
      %986 = vmatpush2.bf16.msra.mxu0 0
      %987 = vmatprep.subr.bf16.mxu0 0
      %988 = vmatpush2.bf16.msra.mxu0 0
      %989 = vmatprep.subr.bf16.mxu0 0
      %990 = vmatpush2.bf16.msra.mxu0 0
      %991 = vmatprep.subr.bf16.mxu0 0
      %992 = vmatpush2.bf16.msra.mxu0 0
      %993 = vmatprep.subr.bf16.mxu0 0
      %994 = vmatpush2.bf16.msra.mxu0 0
      %995 = vmatprep.subr.bf16.mxu0 0
      %996 = vmatpush2.bf16.msra.mxu0 0
      %997 = vmatprep.subr.bf16.mxu0 0
      %998 = vmatpush2.bf16.msra.mxu0 0
      %999 = vmatprep.subr.bf16.mxu0 0
      %1000 = vmatpush2.bf16.msra.mxu0 0
      %1001 = vmatprep.mubr.bf16.mxu0 0
      %1002 = vmatmul.mubr.bf16.gmra.mxu0 %v902
      %v1003 = vpop.f32.mrf.mxu0
      %v1004 = vadd.f32 0.0, %v1003
      %v1005 = vpop.f32.mrf.mxu0
      %v1006 = vadd.f32 0.0, %v1005
      %v1007 = vpop.f32.mrf.mxu0
      %v1008 = vadd.f32 0.0, %v1007
      %v1009 = vpop.f32.mrf.mxu0
      %v1010 = vadd.f32 0.0, %v1009
      %1011 = vdwg.mxu0
      %v1012 = vadd.f32 %v918, %v961
      %v1013 = vadd.f32 %v919, %v963
      %v1014 = vadd.f32 %v920, %v1004
      %v1015 = vadd.f32 %v921, %v1006
      %v1016 = vadd.f32 %v922, %v965
      %v1017 = vadd.f32 %v923, %v967
      %v1018 = vadd.f32 %v924, %v1008
      %v1019 = vadd.f32 %v925, %v1010
      %v1020 = vxor.u32 %v1012, 2147483648
      %v1021 = vxor.u32 %v1016, 2147483648
      %v1022 = vmul.f32 %v1020, 1.442695
      %v1023 = vpow.pop %v1022
      %v1024 = vmul.f32 %v1021, 1.442695
      %v1025 = vpow.pop %v1024
      %v1026 = vadd.f32 %v1023, 1.0
      %v1027 = vadd.f32 %v1025, 1.0
      %v1028 = vrcp.pop %v1026
      %v1029 = vmul.f32 1.0, %v1028
      %v1030 = vrcp.pop %v1027
      %v1031 = vmul.f32 1.0, %v1030
      %v1032 = vxor.u32 %v1013, 2147483648
      %v1033 = vxor.u32 %v1017, 2147483648
      %v1034 = vmul.f32 %v1032, 1.442695
      %v1035 = vpow.pop %v1034
      %v1036 = vmul.f32 %v1033, 1.442695
      %v1037 = vpow.pop %v1036
      %v1038 = vadd.f32 %v1035, 1.0
      %v1039 = vadd.f32 %v1037, 1.0
      %v1040 = vrcp.pop %v1038
      %v1041 = vmul.f32 1.0, %v1040
      %v1042 = vrcp.pop %v1039
      %v1043 = vmul.f32 1.0, %v1042
      %v1044 = vtanh.pop %v1014
      %v1045 = vtanh.pop %v1018
      %v1046 = vxor.u32 %v1015, 2147483648
      %v1047 = vxor.u32 %v1019, 2147483648
      %v1048 = vmul.f32 %v1046, 1.442695
      %v1049 = vpow.pop %v1048
      %v1050 = vmul.f32 %v1047, 1.442695
      %v1051 = vpow.pop %v1050
      %v1052 = vadd.f32 %v1049, 1.0
      %v1053 = vadd.f32 %v1051, 1.0
      %v1054 = vrcp.pop %v1052
      %v1055 = vmul.f32 1.0, %v1054
      %v1056 = vrcp.pop %v1053
      %v1057 = vmul.f32 1.0, %v1056
      %v1058 = vmul.f32 %v1041, %v896
      %v1059 = vmul.f32 %v1043, %v897
      %v1060 = vmul.f32 %v1029, %v1044
      %v1061 = vmul.f32 %v1031, %v1045
      %v1062 = vadd.f32 %v1058, %v1060
      %v1063 = vadd.f32 %v1059, %v1061
      %v1064 = vtanh.pop %v1062
      %v1065 = vtanh.pop %v1063
      %v1066 = vmul.f32 %v1055, %v1064
      %v1067 = vmul.f32 %v1057, %v1065
      %v1068 = vpack.c.bf16 %v1067, %v1066
      %v1070 = vunpack.c.l.b16 %v1068
      %v1071 = vunpack.c.h.b16 %v1068
      %v1072 = vpack.c.b16 %v1070, %v1070
      %v1073 = vpack.c.b16 %v1071, %v1071
      %s1076 = scalar_lea.vmem %s358, 16
      %1077 = vst [vmem:[%s1076] sm:$0xf] %v1072
      %1078 = vst [vmem:[%s1076 + $0x4] sm:$0xf] %v1073
      %s1079 = scalar_lea.vmem %s334, 96
      %v1080 = vld [vmem:[%s1079] sm:$0xff]
      %v1081 = vld [vmem:[%s1079 + $0x8] sm:$0xff]
      %v1082 = vld [vmem:[%s1079 + $0x10] sm:$0xff]
      %v1083 = vld [vmem:[%s1079 + $0x18] sm:$0xff]
      %v1084 = vunpack.c.l.bf16 %v1080
      %v1085 = vunpack.c.h.bf16 %v1080
      %v1086 = vunpack.c.l.bf16 %v1081
      %v1087 = vunpack.c.h.bf16 %v1081
      %v1088 = vunpack.c.l.bf16 %v1082
      %v1089 = vunpack.c.h.bf16 %v1082
      %v1090 = vunpack.c.l.bf16 %v1083
      %v1091 = vunpack.c.h.bf16 %v1083
      %1092 = vmatprep.subr.bf16.mxu0 %v560
      %1093 = vmatpush1.bf16.msra.mxu0 %v559
      %1094 = vmatprep.subr.bf16.mxu0 %v556
      %1095 = vmatpush1.bf16.msra.mxu0 %v555
      %1096 = vmatprep.subr.bf16.mxu0 %v552
      %1097 = vmatpush1.bf16.msra.mxu0 %v551
      %1098 = vmatprep.subr.bf16.mxu0 %v548
      %1099 = vmatpush1.bf16.msra.mxu0 %v547
      %1100 = vmatprep.subr.bf16.mxu0 %v544
      %1101 = vmatpush1.bf16.msra.mxu0 %v543
      %1102 = vmatprep.subr.bf16.mxu0 %v540
      %1103 = vmatpush1.bf16.msra.mxu0 %v539
      %1104 = vmatprep.subr.bf16.mxu0 %v536
      %1105 = vmatpush1.bf16.msra.mxu0 %v535
      %1106 = vmatprep.subr.bf16.mxu0 %v532
      %1107 = vmatpush1.bf16.msra.mxu0 %v531
      %1108 = vmatprep.subr.bf16.mxu0 0
      %1109 = vmatpush2.bf16.msra.mxu0 0
      %1110 = vmatprep.subr.bf16.mxu0 0
      %1111 = vmatpush2.bf16.msra.mxu0 0
      %1112 = vmatprep.subr.bf16.mxu0 0
      %1113 = vmatpush2.bf16.msra.mxu0 0
      %1114 = vmatprep.subr.bf16.mxu0 0
      %1115 = vmatpush2.bf16.msra.mxu0 0
      %1116 = vmatprep.subr.bf16.mxu0 0
      %1117 = vmatpush2.bf16.msra.mxu0 0
      %1118 = vmatprep.subr.bf16.mxu0 0
      %1119 = vmatpush2.bf16.msra.mxu0 0
      %1120 = vmatprep.subr.bf16.mxu0 0
      %1121 = vmatpush2.bf16.msra.mxu0 0
      %1122 = vmatprep.subr.bf16.mxu0 0
      %1123 = vmatpush2.bf16.msra.mxu0 0
      %1124 = vmatprep.mubr.bf16.mxu0 0
      %1125 = vmatmul.mubr.bf16.gmra.mxu0 %v1068
      %v1126 = vpop.f32.mrf.mxu0
      %v1127 = vadd.f32 0.0, %v1126
      %v1128 = vpop.f32.mrf.mxu0
      %v1129 = vadd.f32 0.0, %v1128
      %v1130 = vpop.f32.mrf.mxu0
      %v1131 = vadd.f32 0.0, %v1130
      %v1132 = vpop.f32.mrf.mxu0
      %v1133 = vadd.f32 0.0, %v1132
      %1134 = vdwg.mxu0
      %1135 = vmatprep.subr.bf16.mxu0 %v562
      %1136 = vmatpush1.bf16.msra.mxu0 %v561
      %1137 = vmatprep.subr.bf16.mxu0 %v558
      %1138 = vmatpush1.bf16.msra.mxu0 %v557
      %1139 = vmatprep.subr.bf16.mxu0 %v554
      %1140 = vmatpush1.bf16.msra.mxu0 %v553
      %1141 = vmatprep.subr.bf16.mxu0 %v550
      %1142 = vmatpush1.bf16.msra.mxu0 %v549
      %1143 = vmatprep.subr.bf16.mxu0 %v546
      %1144 = vmatpush1.bf16.msra.mxu0 %v545
      %1145 = vmatprep.subr.bf16.mxu0 %v542
      %1146 = vmatpush1.bf16.msra.mxu0 %v541
      %1147 = vmatprep.subr.bf16.mxu0 %v538
      %1148 = vmatpush1.bf16.msra.mxu0 %v537
      %1149 = vmatprep.subr.bf16.mxu0 %v534
      %1150 = vmatpush1.bf16.msra.mxu0 %v533
      %1151 = vmatprep.subr.bf16.mxu0 0
      %1152 = vmatpush2.bf16.msra.mxu0 0
      %1153 = vmatprep.subr.bf16.mxu0 0
      %1154 = vmatpush2.bf16.msra.mxu0 0
      %1155 = vmatprep.subr.bf16.mxu0 0
      %1156 = vmatpush2.bf16.msra.mxu0 0
      %1157 = vmatprep.subr.bf16.mxu0 0
      %1158 = vmatpush2.bf16.msra.mxu0 0
      %1159 = vmatprep.subr.bf16.mxu0 0
      %1160 = vmatpush2.bf16.msra.mxu0 0
      %1161 = vmatprep.subr.bf16.mxu0 0
      %1162 = vmatpush2.bf16.msra.mxu0 0
      %1163 = vmatprep.subr.bf16.mxu0 0
      %1164 = vmatpush2.bf16.msra.mxu0 0
      %1165 = vmatprep.subr.bf16.mxu0 0
      %1166 = vmatpush2.bf16.msra.mxu0 0
      %1167 = vmatprep.mubr.bf16.mxu0 0
      %1168 = vmatmul.mubr.bf16.gmra.mxu0 %v1068
      %v1169 = vpop.f32.mrf.mxu0
      %v1170 = vadd.f32 0.0, %v1169
      %v1171 = vpop.f32.mrf.mxu0
      %v1172 = vadd.f32 0.0, %v1171
      %v1173 = vpop.f32.mrf.mxu0
      %v1174 = vadd.f32 0.0, %v1173
      %v1175 = vpop.f32.mrf.mxu0
      %v1176 = vadd.f32 0.0, %v1175
      %1177 = vdwg.mxu0
      %v1178 = vadd.f32 %v1084, %v1127
      %v1179 = vadd.f32 %v1085, %v1129
      %v1180 = vadd.f32 %v1086, %v1170
      %v1181 = vadd.f32 %v1087, %v1172
      %v1182 = vadd.f32 %v1088, %v1131
      %v1183 = vadd.f32 %v1089, %v1133
      %v1184 = vadd.f32 %v1090, %v1174
      %v1185 = vadd.f32 %v1091, %v1176
      %v1186 = vxor.u32 %v1178, 2147483648
      %v1187 = vxor.u32 %v1182, 2147483648
      %v1188 = vmul.f32 %v1186, 1.442695
      %v1189 = vpow.pop %v1188
      %v1190 = vmul.f32 %v1187, 1.442695
      %v1191 = vpow.pop %v1190
      %v1192 = vadd.f32 %v1189, 1.0
      %v1193 = vadd.f32 %v1191, 1.0
      %v1194 = vrcp.pop %v1192
      %v1195 = vmul.f32 1.0, %v1194
      %v1196 = vrcp.pop %v1193
      %v1197 = vmul.f32 1.0, %v1196
      %v1198 = vxor.u32 %v1179, 2147483648
      %v1199 = vxor.u32 %v1183, 2147483648
      %v1200 = vmul.f32 %v1198, 1.442695
      %v1201 = vpow.pop %v1200
      %v1202 = vmul.f32 %v1199, 1.442695
      %v1203 = vpow.pop %v1202
      %v1204 = vadd.f32 %v1201, 1.0
      %v1205 = vadd.f32 %v1203, 1.0
      %v1206 = vrcp.pop %v1204
      %v1207 = vmul.f32 1.0, %v1206
      %v1208 = vrcp.pop %v1205
      %v1209 = vmul.f32 1.0, %v1208
      %v1210 = vtanh.pop %v1180
      %v1211 = vtanh.pop %v1184
      %v1212 = vxor.u32 %v1181, 2147483648
      %v1213 = vxor.u32 %v1185, 2147483648
      %v1214 = vmul.f32 %v1212, 1.442695
      %v1215 = vpow.pop %v1214
      %v1216 = vmul.f32 %v1213, 1.442695
      %v1217 = vpow.pop %v1216
      %v1218 = vadd.f32 %v1215, 1.0
      %v1219 = vadd.f32 %v1217, 1.0
      %v1220 = vrcp.pop %v1218
      %v1221 = vmul.f32 1.0, %v1220
      %v1222 = vrcp.pop %v1219
      %v1223 = vmul.f32 1.0, %v1222
      %v1224 = vmul.f32 %v1207, %v1062
      %v1225 = vmul.f32 %v1209, %v1063
      %v1226 = vmul.f32 %v1195, %v1210
      %v1227 = vmul.f32 %v1197, %v1211
      %v1228 = vadd.f32 %v1224, %v1226
      %v1229 = vadd.f32 %v1225, %v1227
      %v1230 = vtanh.pop %v1228
      %v1231 = vtanh.pop %v1229
      %v1232 = vmul.f32 %v1221, %v1230
      %v1233 = vmul.f32 %v1223, %v1231
      %v1234 = vpack.c.bf16 %v1233, %v1232
      %v1236 = vunpack.c.l.b16 %v1234
      %v1237 = vunpack.c.h.b16 %v1234
      %v1238 = vpack.c.b16 %v1236, %v1236
      %v1239 = vpack.c.b16 %v1237, %v1237
      %s1242 = scalar_lea.vmem %s358, 24
      %1243 = vst [vmem:[%s1242] sm:$0xf] %v1238
      %1244 = vst [vmem:[%s1242 + $0x4] sm:$0xf] %v1239
      %1245 = vst [vmem:[#allocation2] sm:$0xff] %v1232
      %1246 = vst [vmem:[#allocation2 + $0x8] sm:$0xff] %v1233
      %1247 = vst [vmem:[#allocation3] sm:$0xff] %v1228
      %1248 = vst [vmem:[#allocation3 + $0x8] sm:$0xff] %v1229
      %p1249 = scmp.eq.s32.totalorder %s23, 1
      // Predicated region
      $region41: #{rnn_model_forward.7} parent=35 // pred_check
        %p1250 = pneg %p1249
      $region42: #{rnn_model_forward.7} parent=35 // pred_check_branch
        %1252 = sbr.rel (%p1250) target = $region44
      $region43: #{rnn_model_forward.7} parent=35 // pred_region
        %1253 = vst [vmem:[%s365] sm:$0xff] %v1232
        %1254 = vst [vmem:[%s365 + $0x8] sm:$0xff] %v1233
        %1255 = vst [vmem:[%s371] sm:$0xff] %v1228
        %1256 = vst [vmem:[%s371 + $0x8] sm:$0xff] %v1229
      $region44: #{rnn_model_forward.7} parent=35 // pred_fallthru
        _
      %s1257 = smul.u32 4, %s23
      %s1258 = smul.u32 2, %s22
      %p1259 = scmp.lt.s32.totalorder %s1257, 7
      %s1260 = scalar_select %p1259, %s1257, 7
      %p1261 = scmp.lt.s32.totalorder %s1258, 1
      %s1262 = scalar_select %p1261, %s1258, 1
      %s1263 = smul.addr %s1260, 2
      %s1264 = sadd.s32 %s1262, %s1263
      %s1265 = smul.addr %s1264, 4
      %s1266 = scalar_lea.vmem %s4, %s1265
      %s1267 = smul.u32 2, %s22
      %p1268 = scmp.lt.s32.totalorder %s1267, 1
      %s1269 = scalar_select %p1268, %s1267, 1
      %s1270 = smul.addr %s1269, 8
      %s1271 = scalar_lea.vmem %s5, %s1270
      %s1272 = smul.u32 2, %s22
      %p1273 = scmp.lt.s32.totalorder %s1272, 1
      %s1274 = scalar_select %p1273, %s1272, 1
      %s1275 = smul.addr %s1274, 8
      %s1276 = scalar_lea.vmem %s6, %s1275
      // Predicated region
      $region45: #{rnn_model_forward.7} parent=35 // pred_check
        %p1277 = pneg %p151
      $region46: #{rnn_model_forward.7} parent=35 // pred_check_branch
        %1279 = sbr.rel (%p1277) target = $region48
      $region47: #{rnn_model_forward.7} parent=35 // pred_region
        %s1280 = smul.u32 4, %s23
        %s1281 = smul.u32 2, %s22
      $region48: #{rnn_model_forward.7} parent=35 // pred_fallthru
        _
      // Predicated region
      $region49: #{rnn_model_forward.7} parent=35 // pred_check
        %p1282 = pneg %p177
      $region50: #{rnn_model_forward.7} parent=35 // pred_check_branch
        %1284 = sbr.rel (%p1282) target = $region52
      $region51: #{rnn_model_forward.7} parent=35 // pred_region
        %s1285 = smul.u32 2, %s22
      $region52: #{rnn_model_forward.7} parent=35 // pred_fallthru
        _
      // Predicated region
      $region53: #{rnn_model_forward.7} parent=35 // pred_check
        %p1286 = pneg %p203
      $region54: #{rnn_model_forward.7} parent=35 // pred_check_branch
        %1288 = sbr.rel (%p1286) target = $region56
      $region55: #{rnn_model_forward.7} parent=35 // pred_region
        %s1289 = smul.u32 2, %s22
      $region56: #{rnn_model_forward.7} parent=35 // pred_fallthru
        _
      // Predicated region
      $region57: #{rnn_model_forward.7} parent=35 // pred_check
        %p1290 = pneg %p177
      $region58: #{rnn_model_forward.7} parent=35 // pred_check_branch
        %1292 = sbr.rel (%p1290) target = $region60
      $region59: #{rnn_model_forward.7} parent=35 // pred_region
        %s1293 = smul.u32 2, %s22
        %p1294 = scmp.lt.s32.totalorder %s1293, 1
        %s1295 = scalar_select %p1294, %s1293, 1
        %s1296 = smul.addr %s1295, 8
        %s1297 = scalar_lea.vmem %s5, %s1296
      $region60: #{rnn_model_forward.7} parent=35 // pred_fallthru
        _
      // Predicated region
      $region61: #{rnn_model_forward.7} parent=35 // pred_check
        %p1298 = pneg %p203
      $region62: #{rnn_model_forward.7} parent=35 // pred_check_branch
        %1300 = sbr.rel (%p1298) target = $region64
      $region63: #{rnn_model_forward.7} parent=35 // pred_region
        %s1301 = smul.u32 2, %s22
        %p1302 = scmp.lt.s32.totalorder %s1301, 1
        %s1303 = scalar_select %p1302, %s1301, 1
        %s1304 = smul.addr %s1303, 8
        %s1305 = scalar_lea.vmem %s6, %s1304
      $region64: #{rnn_model_forward.7} parent=35 // pred_fallthru
        _
    $region36: #{rnn_model_forward.7} parent=5 // pred_fallthru
      _
    %p1306 = scmp.le.s32.totalorder 2, %s13
    // Predicated region
    $region65: #{rnn_model_forward.7} parent=5 // pred_check
      %p1307 = pneg %p1306
    $region66: #{rnn_model_forward.7} parent=5 // pred_check_branch
      %1309 = sbr.rel (%p1307) target = $region68
    $region67: #{rnn_model_forward.7} parent=5 // pred_region
      %s1310 = ssub.s32 %s13, 2
      // Predicated region
      $region69: #{rnn_model_forward.7} parent=67 // pred_check
        %p1311 = pneg %p157
      $region70: #{rnn_model_forward.7} parent=67 // pred_check_branch
        %1313 = sbr.rel (%p1311) target = $region72
      $region71: #{rnn_model_forward.7} parent=67 // pred_region
        %s1314 = smul.u32 4, %s25
        %s1315 = smul.u32 2, %s24
        %p1316 = scmp.lt.s32.totalorder %s1314, 7
        %s1317 = scalar_select %p1316, %s1314, 7
        %p1318 = scmp.lt.s32.totalorder %s1315, 1
        %s1319 = scalar_select %p1318, %s1315, 1
        %s1320 = smul.addr %s1317, 2
        %s1321 = sadd.s32 %s1319, %s1320
        %s1322 = smul.addr %s1321, 4
        %s1323 = scalar_lea.vmem %s4, %s1322
      $region72: #{rnn_model_forward.7} parent=67 // pred_fallthru
        _
    $region68: #{rnn_model_forward.7} parent=5 // pred_fallthru
      _
  $region6: #{rnn_model_forward.7} parent=0 // loop_footer
    %s17 = sadd.s32 1, %s13
  $region7: #{rnn_model_forward.7} parent=0 // loop_footer_branch
    %12 = sbr.rel target = $region3
  $region8: #{rnn_model_forward.7} parent=0 // loop_exit
    _

// kernel: rnn_model_forward.6
$region0: #{rnn_model_forward.6}
  #allocation0 [shape = 'u32[]', space=smem, size = 0x4, offset = 0x4, fixed_abs, tag = 'smem constant byte address 0x4 - core index']
  #allocation1 [shape = 'u32[144,128]{1,0:T(1,128)}', space=vmem, size = 0x12000, scoped, tag = 'internal scratch']
  %s0 = inlined_call_operand.vmem [shape: bf16[128,128], index: 0, kind: input, shape index: {}]
  %s1 = inlined_call_operand.vmem [shape: bf16[128,512], index: 1, kind: input, shape index: {}]
  %s2 = inlined_call_operand.vmem [shape: f32[1,512], index: 2, kind: input, shape index: {}]
  %s3 = inlined_call_operand.vmem [shape: bf16[128,512], index: 3, kind: output, shape index: {}]
  %s4 = sld [smem:[#allocation0]]
  $region22: #{rnn_model_forward.6} parent=0
    _
  %s6 = ssub.s32 1, %s4
  %s7 = scalar_select 0, %s6, %s4
  // Predicated region
  $region2: #{rnn_model_forward.6} parent=0 // pred_check
    _
  $region3: #{rnn_model_forward.6} parent=0 // pred_check_branch
    %9 = sbr.rel (0) target = $region5
  $region4: #{rnn_model_forward.6} parent=0 // pred_region
    _
  $region5: #{rnn_model_forward.6} parent=0 // pred_fallthru
    _
  // Predicated region
  $region6: #{rnn_model_forward.6} parent=0 // pred_check
    _
  $region7: #{rnn_model_forward.6} parent=0 // pred_check_branch
    %11 = sbr.rel (0) target = $region9
  $region8: #{rnn_model_forward.6} parent=0 // pred_region
    _
  $region9: #{rnn_model_forward.6} parent=0 // pred_fallthru
    _
  // Predicated region
  $region10: #{rnn_model_forward.6} parent=0 // pred_check
    _
  $region11: #{rnn_model_forward.6} parent=0 // pred_check_branch
    %13 = sbr.rel (0) target = $region13
  $region12: #{rnn_model_forward.6} parent=0 // pred_region
    _
  $region13: #{rnn_model_forward.6} parent=0 // pred_fallthru
    _
  %v15 = vld [vmem:[%s0] sm:$0xf]
  %v16 = vld [vmem:[%s0 + $0x4] sm:$0xf]
  %v17 = vld [vmem:[%s0 + $0x8] sm:$0xf]
  %v18 = vld [vmem:[%s0 + $0xc] sm:$0xf]
  %v19 = vld [vmem:[%s0 + $0x10] sm:$0xf]
  %v20 = vld [vmem:[%s0 + $0x14] sm:$0xf]
  %v21 = vld [vmem:[%s0 + $0x18] sm:$0xf]
  %v22 = vld [vmem:[%s0 + $0x1c] sm:$0xf]
  %v23 = vld [vmem:[%s0 + $0x20] sm:$0xf]
  %v24 = vld [vmem:[%s0 + $0x24] sm:$0xf]
  %v25 = vld [vmem:[%s0 + $0x28] sm:$0xf]
  %v26 = vld [vmem:[%s0 + $0x2c] sm:$0xf]
  %v27 = vld [vmem:[%s0 + $0x30] sm:$0xf]
  %v28 = vld [vmem:[%s0 + $0x34] sm:$0xf]
  %v29 = vld [vmem:[%s0 + $0x38] sm:$0xf]
  %v30 = vld [vmem:[%s0 + $0x3c] sm:$0xf]
  %v31 = vld [vmem:[%s1] sm:$0xff]
  %v32 = vld [vmem:[%s1 + $0x8] sm:$0xff]
  %v33 = vld [vmem:[%s1 + $0x10] sm:$0xff]
  %v34 = vld [vmem:[%s1 + $0x18] sm:$0xff]
  %v35 = vld [vmem:[%s1 + $0x20] sm:$0xff]
  %v36 = vld [vmem:[%s1 + $0x28] sm:$0xff]
  %v37 = vld [vmem:[%s1 + $0x30] sm:$0xff]
  %v38 = vld [vmem:[%s1 + $0x38] sm:$0xff]
  %v39 = vld [vmem:[%s1 + $0x40] sm:$0xff]
  %v40 = vld [vmem:[%s1 + $0x48] sm:$0xff]
  %v41 = vld [vmem:[%s1 + $0x50] sm:$0xff]
  %v42 = vld [vmem:[%s1 + $0x58] sm:$0xff]
  %v43 = vld [vmem:[%s1 + $0x60] sm:$0xff]
  %v44 = vld [vmem:[%s1 + $0x68] sm:$0xff]
  %v45 = vld [vmem:[%s1 + $0x70] sm:$0xff]
  %v46 = vld [vmem:[%s1 + $0x78] sm:$0xff]
  %v47 = vld [vmem:[%s1 + $0x80] sm:$0xff]
  %v48 = vld [vmem:[%s1 + $0x88] sm:$0xff]
  %v49 = vld [vmem:[%s1 + $0x90] sm:$0xff]
  %v50 = vld [vmem:[%s1 + $0x98] sm:$0xff]
  %v51 = vld [vmem:[%s1 + $0xa0] sm:$0xff]
  %v52 = vld [vmem:[%s1 + $0xa8] sm:$0xff]
  %v53 = vld [vmem:[%s1 + $0xb0] sm:$0xff]
  %v54 = vld [vmem:[%s1 + $0xb8] sm:$0xff]
  %v55 = vld [vmem:[%s1 + $0xc0] sm:$0xff]
  %v56 = vld [vmem:[%s1 + $0xc8] sm:$0xff]
  %v57 = vld [vmem:[%s1 + $0xd0] sm:$0xff]
  %v58 = vld [vmem:[%s1 + $0xd8] sm:$0xff]
  %v59 = vld [vmem:[%s1 + $0xe0] sm:$0xff]
  %v60 = vld [vmem:[%s1 + $0xe8] sm:$0xff]
  %v61 = vld [vmem:[%s1 + $0xf0] sm:$0xff]
  %v62 = vld [vmem:[%s1 + $0xf8] sm:$0xff]
  %v63 = vld [vmem:[%s2] sm:$0xf]
  %v65 = vlaneseq
  %v66 = vshrl.u32 %v65, 7
  %v67 = vsub.s32 0, %v66
  %v68 = vrot.slane %v63, %v67
  %v69 = vlaneseq
  %v70 = vshrl.u32 %v69, 7
  %v71 = vsub.s32 1, %v70
  %v72 = vrot.slane %v63, %v71
  %v73 = vlaneseq
  %v74 = vshrl.u32 %v73, 7
  %v75 = vsub.s32 2, %v74
  %v76 = vrot.slane %v63, %v75
  %v77 = vlaneseq
  %v78 = vshrl.u32 %v77, 7
  %v79 = vsub.s32 3, %v78
  %v80 = vrot.slane %v63, %v79
  %v101 = vunpack.c.l.b16 %v15
  %v102 = vunpack.c.l.b16 %v16
  %v103 = vunpack.c.l.b16 %v17
  %v104 = vunpack.c.l.b16 %v18
  %v105 = vunpack.c.l.b16 %v19
  %v106 = vunpack.c.l.b16 %v20
  %v107 = vunpack.c.l.b16 %v21
  %v108 = vunpack.c.l.b16 %v22
  %v109 = vunpack.c.l.b16 %v23
  %v110 = vunpack.c.l.b16 %v24
  %v111 = vunpack.c.l.b16 %v25
  %v112 = vunpack.c.l.b16 %v26
  %v113 = vunpack.c.l.b16 %v27
  %v114 = vunpack.c.l.b16 %v28
  %v115 = vunpack.c.l.b16 %v29
  %v116 = vunpack.c.l.b16 %v30
  %v117 = vpack.c.b16 %v102, %v101
  %v118 = vpack.c.b16 %v104, %v103
  %v119 = vpack.c.b16 %v106, %v105
  %v120 = vpack.c.b16 %v108, %v107
  %v121 = vpack.c.b16 %v110, %v109
  %v122 = vpack.c.b16 %v112, %v111
  %v123 = vpack.c.b16 %v114, %v113
  %v124 = vpack.c.b16 %v116, %v115
  %v165 = vunpack.c.l.b16 %v31
  %v166 = vunpack.c.h.b16 %v31
  %v167 = vunpack.c.l.b16 %v32
  %v168 = vunpack.c.h.b16 %v32
  %v169 = vunpack.c.l.b16 %v33
  %v170 = vunpack.c.h.b16 %v33
  %v171 = vunpack.c.l.b16 %v34
  %v172 = vunpack.c.h.b16 %v34
  %v173 = vunpack.c.l.b16 %v35
  %v174 = vunpack.c.h.b16 %v35
  %v175 = vunpack.c.l.b16 %v36
  %v176 = vunpack.c.h.b16 %v36
  %v177 = vunpack.c.l.b16 %v37
  %v178 = vunpack.c.h.b16 %v37
  %v179 = vunpack.c.l.b16 %v38
  %v180 = vunpack.c.h.b16 %v38
  %v181 = vunpack.c.l.b16 %v39
  %v182 = vunpack.c.h.b16 %v39
  %v183 = vunpack.c.l.b16 %v40
  %v184 = vunpack.c.h.b16 %v40
  %v185 = vunpack.c.l.b16 %v41
  %v186 = vunpack.c.h.b16 %v41
  %v187 = vunpack.c.l.b16 %v42
  %v188 = vunpack.c.h.b16 %v42
  %v189 = vunpack.c.l.b16 %v43
  %v190 = vunpack.c.h.b16 %v43
  %v191 = vunpack.c.l.b16 %v44
  %v192 = vunpack.c.h.b16 %v44
  %v193 = vunpack.c.l.b16 %v45
  %v194 = vunpack.c.h.b16 %v45
  %v195 = vunpack.c.l.b16 %v46
  %v196 = vunpack.c.h.b16 %v46
  %v197 = vunpack.c.l.b16 %v47
  %v198 = vunpack.c.h.b16 %v47
  %v199 = vunpack.c.l.b16 %v48
  %v200 = vunpack.c.h.b16 %v48
  %v201 = vunpack.c.l.b16 %v49
  %v202 = vunpack.c.h.b16 %v49
  %v203 = vunpack.c.l.b16 %v50
  %v204 = vunpack.c.h.b16 %v50
  %v205 = vunpack.c.l.b16 %v51
  %v206 = vunpack.c.h.b16 %v51
  %v207 = vunpack.c.l.b16 %v52
  %v208 = vunpack.c.h.b16 %v52
  %v209 = vunpack.c.l.b16 %v53
  %v210 = vunpack.c.h.b16 %v53
  %v211 = vunpack.c.l.b16 %v54
  %v212 = vunpack.c.h.b16 %v54
  %v213 = vunpack.c.l.b16 %v55
  %v214 = vunpack.c.h.b16 %v55
  %v215 = vunpack.c.l.b16 %v56
  %v216 = vunpack.c.h.b16 %v56
  %v217 = vunpack.c.l.b16 %v57
  %v218 = vunpack.c.h.b16 %v57
  %v219 = vunpack.c.l.b16 %v58
  %v220 = vunpack.c.h.b16 %v58
  %v221 = vunpack.c.l.b16 %v59
  %v222 = vunpack.c.h.b16 %v59
  %v223 = vunpack.c.l.b16 %v60
  %v224 = vunpack.c.h.b16 %v60
  %v225 = vunpack.c.l.b16 %v61
  %v226 = vunpack.c.h.b16 %v61
  %v227 = vunpack.c.l.b16 %v62
  %v228 = vunpack.c.h.b16 %v62
  %v229 = vpack.c.b16 %v169, %v165
  %v230 = vpack.c.b16 %v170, %v166
  %v231 = vpack.c.b16 %v171, %v167
  %v232 = vpack.c.b16 %v172, %v168
  %v233 = vpack.c.b16 %v177, %v173
  %v234 = vpack.c.b16 %v178, %v174
  %v235 = vpack.c.b16 %v179, %v175
  %v236 = vpack.c.b16 %v180, %v176
  %v237 = vpack.c.b16 %v185, %v181
  %v238 = vpack.c.b16 %v186, %v182
  %v239 = vpack.c.b16 %v187, %v183
  %v240 = vpack.c.b16 %v188, %v184
  %v241 = vpack.c.b16 %v193, %v189
  %v242 = vpack.c.b16 %v194, %v190
  %v243 = vpack.c.b16 %v195, %v191
  %v244 = vpack.c.b16 %v196, %v192
  %v245 = vpack.c.b16 %v201, %v197
  %v246 = vpack.c.b16 %v202, %v198
  %v247 = vpack.c.b16 %v203, %v199
  %v248 = vpack.c.b16 %v204, %v200
  %v249 = vpack.c.b16 %v209, %v205
  %v250 = vpack.c.b16 %v210, %v206
  %v251 = vpack.c.b16 %v211, %v207
  %v252 = vpack.c.b16 %v212, %v208
  %v253 = vpack.c.b16 %v217, %v213
  %v254 = vpack.c.b16 %v218, %v214
  %v255 = vpack.c.b16 %v219, %v215
  %v256 = vpack.c.b16 %v220, %v216
  %v257 = vpack.c.b16 %v225, %v221
  %v258 = vpack.c.b16 %v226, %v222
  %v259 = vpack.c.b16 %v227, %v223
  %v260 = vpack.c.b16 %v228, %v224
  %293 = vmatprep.subr.bf16.mxu0 %v258
  %294 = vmatpush1.bf16.msra.mxu0 %v257
  %295 = vmatprep.subr.bf16.mxu0 %v254
  %296 = vmatpush1.bf16.msra.mxu0 %v253
  %297 = vmatprep.subr.bf16.mxu0 %v250
  %298 = vmatpush1.bf16.msra.mxu0 %v249
  %299 = vmatprep.subr.bf16.mxu0 %v246
  %300 = vmatpush1.bf16.msra.mxu0 %v245
  %301 = vmatprep.subr.bf16.mxu0 %v242
  %302 = vmatpush1.bf16.msra.mxu0 %v241
  %303 = vmatprep.subr.bf16.mxu0 %v238
  %304 = vmatpush1.bf16.msra.mxu0 %v237
  %305 = vmatprep.subr.bf16.mxu0 %v234
  %306 = vmatpush1.bf16.msra.mxu0 %v233
  %307 = vmatprep.subr.bf16.mxu0 %v230
  %308 = vmatpush1.bf16.msra.mxu0 %v229
  %309 = vmatprep.subr.bf16.mxu0 0
  %310 = vmatpush2.bf16.msra.mxu0 0
  %311 = vmatprep.subr.bf16.mxu0 0
  %312 = vmatpush2.bf16.msra.mxu0 0
  %313 = vmatprep.subr.bf16.mxu0 0
  %314 = vmatpush2.bf16.msra.mxu0 0
  %315 = vmatprep.subr.bf16.mxu0 0
  %316 = vmatpush2.bf16.msra.mxu0 0
  %317 = vmatprep.subr.bf16.mxu0 0
  %318 = vmatpush2.bf16.msra.mxu0 0
  %319 = vmatprep.subr.bf16.mxu0 0
  %320 = vmatpush2.bf16.msra.mxu0 0
  %321 = vmatprep.subr.bf16.mxu0 0
  %322 = vmatpush2.bf16.msra.mxu0 0
  %323 = vmatprep.subr.bf16.mxu0 0
  %324 = vmatpush2.bf16.msra.mxu0 0
  %325 = vmatprep.mubr.bf16.mxu0 0
  %326 = vmatmul.mubr.bf16.gmra.mxu0 %v117
  %v327 = vpop.f32.mrf.mxu0
  %v328 = vadd.f32 %v68, %v327
  %v329 = vpop.f32.mrf.mxu0
  %v330 = vadd.f32 %v72, %v329
  %v331 = vpop.f32.mrf.mxu0
  %v332 = vadd.f32 %v68, %v331
  %v333 = vpop.f32.mrf.mxu0
  %v334 = vadd.f32 %v72, %v333
  %335 = vmatprep.mubr.bf16.mxu0 0
  %336 = vmatmul.mubr.bf16.gmra.mxu0 %v118
  %v337 = vpop.f32.mrf.mxu0
  %v338 = vadd.f32 %v68, %v337
  %v339 = vpop.f32.mrf.mxu0
  %v340 = vadd.f32 %v72, %v339
  %v341 = vpop.f32.mrf.mxu0
  %v342 = vadd.f32 %v68, %v341
  %v343 = vpop.f32.mrf.mxu0
  %v344 = vadd.f32 %v72, %v343
  %345 = vmatprep.mubr.bf16.mxu0 0
  %346 = vmatmul.mubr.bf16.gmra.mxu0 %v119
  %v347 = vpop.f32.mrf.mxu0
  %v348 = vadd.f32 %v68, %v347
  %v349 = vpop.f32.mrf.mxu0
  %v350 = vadd.f32 %v72, %v349
  %v351 = vpop.f32.mrf.mxu0
  %v352 = vadd.f32 %v68, %v351
  %v353 = vpop.f32.mrf.mxu0
  %v354 = vadd.f32 %v72, %v353
  %355 = vmatprep.mubr.bf16.mxu0 0
  %356 = vmatmul.mubr.bf16.gmra.mxu0 %v120
  %v357 = vpop.f32.mrf.mxu0
  %v358 = vadd.f32 %v68, %v357
  %v359 = vpop.f32.mrf.mxu0
  %v360 = vadd.f32 %v72, %v359
  %v361 = vpop.f32.mrf.mxu0
  %v362 = vadd.f32 %v68, %v361
  %v363 = vpop.f32.mrf.mxu0
  %v364 = vadd.f32 %v72, %v363
  %365 = vmatprep.mubr.bf16.mxu0 0
  %366 = vmatmul.mubr.bf16.gmra.mxu0 %v121
  %v367 = vpop.f32.mrf.mxu0
  %v368 = vadd.f32 %v68, %v367
  %v369 = vpop.f32.mrf.mxu0
  %v370 = vadd.f32 %v72, %v369
  %v371 = vpop.f32.mrf.mxu0
  %v372 = vadd.f32 %v68, %v371
  %v373 = vpop.f32.mrf.mxu0
  %v374 = vadd.f32 %v72, %v373
  %375 = vmatprep.mubr.bf16.mxu0 0
  %376 = vmatmul.mubr.bf16.gmra.mxu0 %v122
  %v377 = vpop.f32.mrf.mxu0
  %v378 = vadd.f32 %v68, %v377
  %v379 = vpop.f32.mrf.mxu0
  %v380 = vadd.f32 %v72, %v379
  %v381 = vpop.f32.mrf.mxu0
  %v382 = vadd.f32 %v68, %v381
  %v383 = vpop.f32.mrf.mxu0
  %v384 = vadd.f32 %v72, %v383
  %385 = vmatprep.mubr.bf16.mxu0 0
  %386 = vmatmul.mubr.bf16.gmra.mxu0 %v123
  %v387 = vpop.f32.mrf.mxu0
  %v388 = vadd.f32 %v68, %v387
  %v389 = vpop.f32.mrf.mxu0
  %v390 = vadd.f32 %v72, %v389
  %v391 = vpop.f32.mrf.mxu0
  %v392 = vadd.f32 %v68, %v391
  %v393 = vpop.f32.mrf.mxu0
  %v394 = vadd.f32 %v72, %v393
  %395 = vmatprep.mubr.bf16.mxu0 0
  %396 = vmatmul.mubr.bf16.gmra.mxu0 %v124
  %v397 = vpop.f32.mrf.mxu0
  %v398 = vadd.f32 %v68, %v397
  %v399 = vpop.f32.mrf.mxu0
  %v400 = vadd.f32 %v72, %v399
  %v401 = vpop.f32.mrf.mxu0
  %v402 = vadd.f32 %v68, %v401
  %v403 = vpop.f32.mrf.mxu0
  %v404 = vadd.f32 %v72, %v403
  %405 = vdwg.mxu0
  %406 = vmatprep.subr.bf16.mxu0 %v260
  %407 = vmatpush1.bf16.msra.mxu0 %v259
  %408 = vmatprep.subr.bf16.mxu0 %v256
  %409 = vmatpush1.bf16.msra.mxu0 %v255
  %410 = vmatprep.subr.bf16.mxu0 %v252
  %411 = vmatpush1.bf16.msra.mxu0 %v251
  %412 = vmatprep.subr.bf16.mxu0 %v248
  %413 = vmatpush1.bf16.msra.mxu0 %v247
  %414 = vmatprep.subr.bf16.mxu0 %v244
  %415 = vmatpush1.bf16.msra.mxu0 %v243
  %416 = vmatprep.subr.bf16.mxu0 %v240
  %417 = vmatpush1.bf16.msra.mxu0 %v239
  %418 = vmatprep.subr.bf16.mxu0 %v236
  %419 = vmatpush1.bf16.msra.mxu0 %v235
  %420 = vmatprep.subr.bf16.mxu0 %v232
  %421 = vmatpush1.bf16.msra.mxu0 %v231
  %422 = vmatprep.subr.bf16.mxu0 0
  %423 = vmatpush2.bf16.msra.mxu0 0
  %424 = vmatprep.subr.bf16.mxu0 0
  %425 = vmatpush2.bf16.msra.mxu0 0
  %426 = vmatprep.subr.bf16.mxu0 0
  %427 = vmatpush2.bf16.msra.mxu0 0
  %428 = vmatprep.subr.bf16.mxu0 0
  %429 = vmatpush2.bf16.msra.mxu0 0
  %430 = vmatprep.subr.bf16.mxu0 0
  %431 = vmatpush2.bf16.msra.mxu0 0
  %432 = vmatprep.subr.bf16.mxu0 0
  %433 = vmatpush2.bf16.msra.mxu0 0
  %434 = vmatprep.subr.bf16.mxu0 0
  %435 = vmatpush2.bf16.msra.mxu0 0
  %436 = vmatprep.subr.bf16.mxu0 0
  %437 = vmatpush2.bf16.msra.mxu0 0
  %438 = vmatprep.mubr.bf16.mxu0 0
  %439 = vmatmul.mubr.bf16.gmra.mxu0 %v117
  %v440 = vpop.f32.mrf.mxu0
  %v441 = vadd.f32 %v76, %v440
  %v442 = vpop.f32.mrf.mxu0
  %v443 = vadd.f32 %v80, %v442
  %v444 = vpop.f32.mrf.mxu0
  %v445 = vadd.f32 %v76, %v444
  %v446 = vpop.f32.mrf.mxu0
  %v447 = vadd.f32 %v80, %v446
  %448 = vmatprep.mubr.bf16.mxu0 0
  %449 = vmatmul.mubr.bf16.gmra.mxu0 %v118
  %v450 = vpop.f32.mrf.mxu0
  %v451 = vadd.f32 %v76, %v450
  %v452 = vpop.f32.mrf.mxu0
  %v453 = vadd.f32 %v80, %v452
  %v454 = vpop.f32.mrf.mxu0
  %v455 = vadd.f32 %v76, %v454
  %v456 = vpop.f32.mrf.mxu0
  %v457 = vadd.f32 %v80, %v456
  %458 = vmatprep.mubr.bf16.mxu0 0
  %459 = vmatmul.mubr.bf16.gmra.mxu0 %v119
  %v460 = vpop.f32.mrf.mxu0
  %v461 = vadd.f32 %v76, %v460
  %v462 = vpop.f32.mrf.mxu0
  %v463 = vadd.f32 %v80, %v462
  %v464 = vpop.f32.mrf.mxu0
  %v465 = vadd.f32 %v76, %v464
  %v466 = vpop.f32.mrf.mxu0
  %v467 = vadd.f32 %v80, %v466
  %468 = vmatprep.mubr.bf16.mxu0 0
  %469 = vmatmul.mubr.bf16.gmra.mxu0 %v120
  %v470 = vpop.f32.mrf.mxu0
  %v471 = vadd.f32 %v76, %v470
  %v472 = vpop.f32.mrf.mxu0
  %v473 = vadd.f32 %v80, %v472
  %v474 = vpop.f32.mrf.mxu0
  %v475 = vadd.f32 %v76, %v474
  %v476 = vpop.f32.mrf.mxu0
  %v477 = vadd.f32 %v80, %v476
  %478 = vmatprep.mubr.bf16.mxu0 0
  %479 = vmatmul.mubr.bf16.gmra.mxu0 %v121
  %v480 = vpop.f32.mrf.mxu0
  %v481 = vadd.f32 %v76, %v480
  %v482 = vpop.f32.mrf.mxu0
  %v483 = vadd.f32 %v80, %v482
  %v484 = vpop.f32.mrf.mxu0
  %v485 = vadd.f32 %v76, %v484
  %v486 = vpop.f32.mrf.mxu0
  %v487 = vadd.f32 %v80, %v486
  %488 = vmatprep.mubr.bf16.mxu0 0
  %489 = vmatmul.mubr.bf16.gmra.mxu0 %v122
  %v490 = vpop.f32.mrf.mxu0
  %v491 = vadd.f32 %v76, %v490
  %v492 = vpop.f32.mrf.mxu0
  %v493 = vadd.f32 %v80, %v492
  %v494 = vpop.f32.mrf.mxu0
  %v495 = vadd.f32 %v76, %v494
  %v496 = vpop.f32.mrf.mxu0
  %v497 = vadd.f32 %v80, %v496
  %498 = vmatprep.mubr.bf16.mxu0 0
  %499 = vmatmul.mubr.bf16.gmra.mxu0 %v123
  %v500 = vpop.f32.mrf.mxu0
  %v501 = vadd.f32 %v76, %v500
  %v502 = vpop.f32.mrf.mxu0
  %v503 = vadd.f32 %v80, %v502
  %v504 = vpop.f32.mrf.mxu0
  %v505 = vadd.f32 %v76, %v504
  %v506 = vpop.f32.mrf.mxu0
  %v507 = vadd.f32 %v80, %v506
  %508 = vmatprep.mubr.bf16.mxu0 0
  %509 = vmatmul.mubr.bf16.gmra.mxu0 %v124
  %v510 = vpop.f32.mrf.mxu0
  %v511 = vadd.f32 %v76, %v510
  %v512 = vpop.f32.mrf.mxu0
  %v513 = vadd.f32 %v80, %v512
  %v514 = vpop.f32.mrf.mxu0
  %v515 = vadd.f32 %v76, %v514
  %v516 = vpop.f32.mrf.mxu0
  %v517 = vadd.f32 %v80, %v516
  %518 = vdwg.mxu0
  %v519 = vpack.c.bf16 %v332, %v328
  %v520 = vpack.c.bf16 %v334, %v330
  %v521 = vpack.c.bf16 %v445, %v441
  %v522 = vpack.c.bf16 %v447, %v443
  %v523 = vpack.c.bf16 %v342, %v338
  %v524 = vpack.c.bf16 %v344, %v340
  %v525 = vpack.c.bf16 %v455, %v451
  %v526 = vpack.c.bf16 %v457, %v453
  %v527 = vpack.c.bf16 %v352, %v348
  %v528 = vpack.c.bf16 %v354, %v350
  %v529 = vpack.c.bf16 %v465, %v461
  %v530 = vpack.c.bf16 %v467, %v463
  %v531 = vpack.c.bf16 %v362, %v358
  %v532 = vpack.c.bf16 %v364, %v360
  %v533 = vpack.c.bf16 %v475, %v471
  %v534 = vpack.c.bf16 %v477, %v473
  %v535 = vpack.c.bf16 %v372, %v368
  %v536 = vpack.c.bf16 %v374, %v370
  %v537 = vpack.c.bf16 %v485, %v481
  %v538 = vpack.c.bf16 %v487, %v483
  %v539 = vpack.c.bf16 %v382, %v378
  %v540 = vpack.c.bf16 %v384, %v380
  %v541 = vpack.c.bf16 %v495, %v491
  %v542 = vpack.c.bf16 %v497, %v493
  %v543 = vpack.c.bf16 %v392, %v388
  %v544 = vpack.c.bf16 %v394, %v390
  %v545 = vpack.c.bf16 %v505, %v501
  %v546 = vpack.c.bf16 %v507, %v503
  %v547 = vpack.c.bf16 %v402, %v398
  %v548 = vpack.c.bf16 %v404, %v400
  %v549 = vpack.c.bf16 %v515, %v511
  %v550 = vpack.c.bf16 %v517, %v513
  %v583 = vunpack.c.l.b16 %v519
  %v584 = vunpack.c.l.b16 %v520
  %v585 = vunpack.c.l.b16 %v521
  %v586 = vunpack.c.l.b16 %v522
  %v587 = vunpack.c.h.b16 %v519
  %v588 = vunpack.c.h.b16 %v520
  %v589 = vunpack.c.h.b16 %v521
  %v590 = vunpack.c.h.b16 %v522
  %v591 = vunpack.c.l.b16 %v523
  %v592 = vunpack.c.l.b16 %v524
  %v593 = vunpack.c.l.b16 %v525
  %v594 = vunpack.c.l.b16 %v526
  %v595 = vunpack.c.h.b16 %v523
  %v596 = vunpack.c.h.b16 %v524
  %v597 = vunpack.c.h.b16 %v525
  %v598 = vunpack.c.h.b16 %v526
  %v599 = vunpack.c.l.b16 %v527
  %v600 = vunpack.c.l.b16 %v528
  %v601 = vunpack.c.l.b16 %v529
  %v602 = vunpack.c.l.b16 %v530
  %v603 = vunpack.c.h.b16 %v527
  %v604 = vunpack.c.h.b16 %v528
  %v605 = vunpack.c.h.b16 %v529
  %v606 = vunpack.c.h.b16 %v530
  %v607 = vunpack.c.l.b16 %v531
  %v608 = vunpack.c.l.b16 %v532
  %v609 = vunpack.c.l.b16 %v533
  %v610 = vunpack.c.l.b16 %v534
  %v611 = vunpack.c.h.b16 %v531
  %v612 = vunpack.c.h.b16 %v532
  %v613 = vunpack.c.h.b16 %v533
  %v614 = vunpack.c.h.b16 %v534
  %v615 = vunpack.c.l.b16 %v535
  %v616 = vunpack.c.l.b16 %v536
  %v617 = vunpack.c.l.b16 %v537
  %v618 = vunpack.c.l.b16 %v538
  %v619 = vunpack.c.h.b16 %v535
  %v620 = vunpack.c.h.b16 %v536
  %v621 = vunpack.c.h.b16 %v537
  %v622 = vunpack.c.h.b16 %v538
  %v623 = vunpack.c.l.b16 %v539
  %v624 = vunpack.c.l.b16 %v540
  %v625 = vunpack.c.l.b16 %v541
  %v626 = vunpack.c.l.b16 %v542
  %v627 = vunpack.c.h.b16 %v539
  %v628 = vunpack.c.h.b16 %v540
  %v629 = vunpack.c.h.b16 %v541
  %v630 = vunpack.c.h.b16 %v542
  %v631 = vunpack.c.l.b16 %v543
  %v632 = vunpack.c.l.b16 %v544
  %v633 = vunpack.c.l.b16 %v545
  %v634 = vunpack.c.l.b16 %v546
  %v635 = vunpack.c.h.b16 %v543
  %v636 = vunpack.c.h.b16 %v544
  %v637 = vunpack.c.h.b16 %v545
  %v638 = vunpack.c.h.b16 %v546
  %v639 = vunpack.c.l.b16 %v547
  %v640 = vunpack.c.l.b16 %v548
  %v641 = vunpack.c.l.b16 %v549
  %v642 = vunpack.c.l.b16 %v550
  %v643 = vunpack.c.h.b16 %v547
  %v644 = vunpack.c.h.b16 %v548
  %v645 = vunpack.c.h.b16 %v549
  %v646 = vunpack.c.h.b16 %v550
  %v647 = vpack.c.b16 %v584, %v583
  %v648 = vpack.c.b16 %v586, %v585
  %v649 = vpack.c.b16 %v588, %v587
  %v650 = vpack.c.b16 %v590, %v589
  %v651 = vpack.c.b16 %v592, %v591
  %v652 = vpack.c.b16 %v594, %v593
  %v653 = vpack.c.b16 %v596, %v595
  %v654 = vpack.c.b16 %v598, %v597
  %v655 = vpack.c.b16 %v600, %v599
  %v656 = vpack.c.b16 %v602, %v601
  %v657 = vpack.c.b16 %v604, %v603
  %v658 = vpack.c.b16 %v606, %v605
  %v659 = vpack.c.b16 %v608, %v607
  %v660 = vpack.c.b16 %v610, %v609
  %v661 = vpack.c.b16 %v612, %v611
  %v662 = vpack.c.b16 %v614, %v613
  %v663 = vpack.c.b16 %v616, %v615
  %v664 = vpack.c.b16 %v618, %v617
  %v665 = vpack.c.b16 %v620, %v619
  %v666 = vpack.c.b16 %v622, %v621
  %v667 = vpack.c.b16 %v624, %v623
  %v668 = vpack.c.b16 %v626, %v625
  %v669 = vpack.c.b16 %v628, %v627
  %v670 = vpack.c.b16 %v630, %v629
  %v671 = vpack.c.b16 %v632, %v631
  %v672 = vpack.c.b16 %v634, %v633
  %v673 = vpack.c.b16 %v636, %v635
  %v674 = vpack.c.b16 %v638, %v637
  %v675 = vpack.c.b16 %v640, %v639
  %v676 = vpack.c.b16 %v642, %v641
  %v677 = vpack.c.b16 %v644, %v643
  %v678 = vpack.c.b16 %v646, %v645
  %711 = vst [vmem:[%s3] sm:$0xff] %v647
  %712 = vst [vmem:[%s3 + $0x8] sm:$0xff] %v648
  %713 = vst [vmem:[%s3 + $0x10] sm:$0xff] %v649
  %714 = vst [vmem:[%s3 + $0x18] sm:$0xff] %v650
  %715 = vst [vmem:[%s3 + $0x20] sm:$0xff] %v651
  %716 = vst [vmem:[%s3 + $0x28] sm:$0xff] %v652
  %717 = vst [vmem:[%s3 + $0x30] sm:$0xff] %v653
  %718 = vst [vmem:[%s3 + $0x38] sm:$0xff] %v654
  %719 = vst [vmem:[%s3 + $0x40] sm:$0xff] %v655
  %720 = vst [vmem:[%s3 + $0x48] sm:$0xff] %v656
  %721 = vst [vmem:[%s3 + $0x50] sm:$0xff] %v657
  %722 = vst [vmem:[%s3 + $0x58] sm:$0xff] %v658
  %723 = vst [vmem:[%s3 + $0x60] sm:$0xff] %v659
  %724 = vst [vmem:[%s3 + $0x68] sm:$0xff] %v660
  %725 = vst [vmem:[%s3 + $0x70] sm:$0xff] %v661
  %726 = vst [vmem:[%s3 + $0x78] sm:$0xff] %v662
  %727 = vst [vmem:[%s3 + $0x80] sm:$0xff] %v663
  %728 = vst [vmem:[%s3 + $0x88] sm:$0xff] %v664
  %729 = vst [vmem:[%s3 + $0x90] sm:$0xff] %v665
  %730 = vst [vmem:[%s3 + $0x98] sm:$0xff] %v666
  %731 = vst [vmem:[%s3 + $0xa0] sm:$0xff] %v667
  %732 = vst [vmem:[%s3 + $0xa8] sm:$0xff] %v668
  %733 = vst [vmem:[%s3 + $0xb0] sm:$0xff] %v669
  %734 = vst [vmem:[%s3 + $0xb8] sm:$0xff] %v670
  %735 = vst [vmem:[%s3 + $0xc0] sm:$0xff] %v671
  %736 = vst [vmem:[%s3 + $0xc8] sm:$0xff] %v672
  %737 = vst [vmem:[%s3 + $0xd0] sm:$0xff] %v673
  %738 = vst [vmem:[%s3 + $0xd8] sm:$0xff] %v674
  %739 = vst [vmem:[%s3 + $0xe0] sm:$0xff] %v675
  %740 = vst [vmem:[%s3 + $0xe8] sm:$0xff] %v676
  %741 = vst [vmem:[%s3 + $0xf0] sm:$0xff] %v677
  %742 = vst [vmem:[%s3 + $0xf8] sm:$0xff] %v678
  // Predicated region
  $region14: #{rnn_model_forward.6} parent=0 // pred_check
    _
  $region15: #{rnn_model_forward.6} parent=0 // pred_check_branch
    %744 = sbr.rel (0) target = $region17
  $region16: #{rnn_model_forward.6} parent=0 // pred_region
    _
  $region17: #{rnn_model_forward.6} parent=0 // pred_fallthru
    _
  // Predicated region
  $region18: #{rnn_model_forward.6} parent=0 // pred_check
    _
  $region19: #{rnn_model_forward.6} parent=0 // pred_check_branch
    %746 = sbr.rel (0) target = $region21
  $region20: #{rnn_model_forward.6} parent=0 // pred_region
    _
  $region21: #{rnn_model_forward.6} parent=0 // pred_fallthru
    _

// kernel: rnn_model_forward.11
$region0: #{rnn_model_forward.11}
  #allocation0 [shape = 'u32[]', space=smem, size = 0x4, offset = 0x4, fixed_abs, tag = 'smem constant byte address 0x4 - core index']
  #allocation1 [shape = 'u32[144,128]{1,0:T(1,128)}', space=vmem, size = 0x12000, scoped, tag = 'internal scratch']
  %s0 = inlined_call_operand.vmem [shape: bf16[128,256], index: 0, kind: input, shape index: {}]
  %s1 = inlined_call_operand.vmem [shape: f32[128,1], index: 1, kind: input, shape index: {}]
  %s2 = inlined_call_operand.hbm [shape: f32[128,256], index: 2, kind: output, shape index: {}]
  %s3 = sld [smem:[#allocation0]]
  $region82: #{rnn_model_forward.11} parent=0
    _
  %s5 = ssub.s32 1, %s3
  %s6 = scalar_select 0, %s5, %s3
  $region1: #{rnn_model_forward.11} parent=0
    #allocation2 [shape = 'u8[65536]{0}', space=vmem, size = 0x10000, scoped, tag = 'input window, operand 0']
    #allocation3 [shape = 'u8[131072]{0}', space=vmem, size = 0x20000, scoped, tag = 'output window, operand 0']
    #allocation4 [shape = 's32[2]{0}', space=sflag, size = 0x8, scoped, tag = 'scoped memory for rnn_model_forward.11']
    %7 = vsyncpa [#allocation4], 0
    %s8 = scalar_lea.sflag [#allocation4], 1
    %9 = vsyncpa %s8, 0
    loop: start=0, step=1, limit=4
    $region2: #{rnn_model_forward.11} parent=1 // loop_pre_header
      _
    $region3: #{rnn_model_forward.11} parent=1 // loop_header
      %s11 = sphi 0, %s15
      %p12 = scmp.ge.s32.totalorder %s11, 4
      %s18 = sphi 0, %s30
      %s19 = sphi 0, %s26
      %s20 = sphi 0, %s18
      %s21 = sphi 0, %s19
      %s22 = sphi 0, %s20
      %s23 = sphi 0, %s21
      %s35 = sphi 0, %s37
      %s38 = sphi 0, %s35
      %s39 = sphi 0, %s38
      %s55 = sphi 0, %s39
      %s61 = sphi 0, %s63
      %s64 = sphi 0, %s61
      %s65 = sphi 0, %s64
      %s81 = sphi 0, %s65
      %s89 = sphi 0, %s91
      %s92 = sphi 0, %s89
      %s93 = sphi 0, %s92
      %s109 = sphi 0, %s93
    $region4: #{rnn_model_forward.11} parent=1 // loop_header_branch
      %14 = sbr.rel (%p12) target = $region8
    $region5: #{rnn_model_forward.11} parent=1 // loop_body
      %s16 = ssub.s32 %s11, 1
      %s17 = ssub.s32 %s11, 2
      %s24 = sadd.s32 1, %s19
      %p25 = scmp.ge.s32.totalorder %s24, 2
      %s26 = scalar_select %p25, 0, %s24
      %s27 = sadd.s32 1, %s18
      %s28 = scalar_select %p25, %s27, %s18
      %p29 = scmp.ge.s32.totalorder %s28, 1
      %s30 = scalar_select %p29, 0, %s28
      %s31 = ssub.s32 %s18, %s30
      %s32 = ssub.s32 %s19, %s26
      %s33 = sor.u32 %s31, %s32
      %p34 = scmp.eq.s32.totalorder %s33, 0
      %s36 = sadd.s32 %s35, 1
      %s37 = scalar_select %p34, %s35, %s36
      %p40 = pneg %p34
      %p41 = scmp.eq.s32.totalorder %s11, 1
      %p42 = por %p40, %p41
      %p43 = scmp.ne.s32.totalorder %s35, %s38
      %p44 = scmp.eq.s32.totalorder %s11, 0
      %p45 = por %p43, %p44
      %p46 = scmp.ne.s32.totalorder %s35, %s38
      %p47 = scmp.eq.s32.totalorder %s16, 1
      %p48 = por %p46, %p47
      %p49 = scmp.ne.s32.totalorder %s38, %s39
      %p50 = scmp.eq.s32.totalorder %s16, 0
      %p51 = por %p49, %p50
      %p52 = scmp.ne.s32.totalorder %s38, %s39
      %p53 = scmp.eq.s32.totalorder %s17, 1
      %p54 = por %p52, %p53
      %p56 = scmp.ne.s32.totalorder %s39, %s55
      %p57 = scmp.eq.s32.totalorder %s17, 0
      %p58 = por %p56, %p57
      %s59 = ssub.s32 %s18, %s30
      %p60 = scmp.eq.s32.totalorder %s59, 0
      %s62 = sadd.s32 %s61, 1
      %s63 = scalar_select %p60, %s61, %s62
      %p66 = pneg %p60
      %p67 = scmp.eq.s32.totalorder %s11, 1
      %p68 = por %p66, %p67
      %p69 = scmp.ne.s32.totalorder %s61, %s64
      %p70 = scmp.eq.s32.totalorder %s11, 0
      %p71 = por %p69, %p70
      %p72 = scmp.ne.s32.totalorder %s61, %s64
      %p73 = scmp.eq.s32.totalorder %s16, 1
      %p74 = por %p72, %p73
      %p75 = scmp.ne.s32.totalorder %s64, %s65
      %p76 = scmp.eq.s32.totalorder %s16, 0
      %p77 = por %p75, %p76
      %p78 = scmp.ne.s32.totalorder %s64, %s65
      %p79 = scmp.eq.s32.totalorder %s17, 1
      %p80 = por %p78, %p79
      %p82 = scmp.ne.s32.totalorder %s65, %s81
      %p83 = scmp.eq.s32.totalorder %s17, 0
      %p84 = por %p82, %p83
      %s85 = ssub.s32 %s18, %s30
      %s86 = ssub.s32 %s19, %s26
      %s87 = sor.u32 %s85, %s86
      %p88 = scmp.eq.s32.totalorder %s87, 0
      %s90 = sadd.s32 %s89, 1
      %s91 = scalar_select %p88, %s89, %s90
      %p94 = pneg %p88
      %p95 = scmp.eq.s32.totalorder %s11, 1
      %p96 = por %p94, %p95
      %p97 = scmp.ne.s32.totalorder %s89, %s92
      %p98 = scmp.eq.s32.totalorder %s11, 0
      %p99 = por %p97, %p98
      %p100 = scmp.ne.s32.totalorder %s89, %s92
      %p101 = scmp.eq.s32.totalorder %s16, 1
      %p102 = por %p100, %p101
      %p103 = scmp.ne.s32.totalorder %s92, %s93
      %p104 = scmp.eq.s32.totalorder %s16, 0
      %p105 = por %p103, %p104
      %p106 = scmp.ne.s32.totalorder %s92, %s93
      %p107 = scmp.eq.s32.totalorder %s17, 1
      %p108 = por %p106, %p107
      %p110 = scmp.ne.s32.totalorder %s93, %s109
      %p111 = scmp.eq.s32.totalorder %s17, 0
      %p112 = por %p110, %p111
      %p113 = scmp.le.s32.totalorder 1, %s11
      %p114 = scmp.lt.s32.totalorder %s11, 3
      %p115 = pnand %p113, %p114
      %p116 = pneg %p115
      // Predicated region
      $region9: #{rnn_model_forward.11} parent=5 // pred_check
        _
      $region10: #{rnn_model_forward.11} parent=5 // pred_check_branch
        %118 = sbr.rel (%p115) target = $region12
      $region11: #{rnn_model_forward.11} parent=5 // pred_region
        %s119 = ssub.s32 %s11, 1
        // Predicated region
        $region13: #{rnn_model_forward.11} parent=11 // pred_check
          %p120 = pneg %p77
        $region14: #{rnn_model_forward.11} parent=11 // pred_check_branch
          %122 = sbr.rel (%p120) target = $region16
        $region15: #{rnn_model_forward.11} parent=11 // pred_region
          %s123 = smul.u32 16, %s20
          %p124 = scmp.lt.s32.totalorder %s123, 15
          %s125 = scalar_select %p124, %s123, 15
          %s126 = smul.addr %s125, 8
          %s127 = scalar_lea.vmem %s1, %s126
          %s128 = smul.u32 16, %s20
        $region16: #{rnn_model_forward.11} parent=11 // pred_fallthru
          _
      $region12: #{rnn_model_forward.11} parent=5 // pred_fallthru
        _
      %p129 = scmp.lt.s32.totalorder %s11, 2
      // Predicated region
      $region17: #{rnn_model_forward.11} parent=5 // pred_check
        %p130 = pneg %p129
      $region18: #{rnn_model_forward.11} parent=5 // pred_check_branch
        %132 = sbr.rel (%p130) target = $region20
      $region19: #{rnn_model_forward.11} parent=5 // pred_region
        // Predicated region
        $region21: #{rnn_model_forward.11} parent=19 // pred_check
          %p133 = pneg %p45
        $region22: #{rnn_model_forward.11} parent=19 // pred_check_branch
          %135 = sbr.rel (%p133) target = $region24
        $region23: #{rnn_model_forward.11} parent=19 // pred_region
          %s136 = sand.u32 %s35, 1
          %s137 = sand.u32 %s35, 1
          %s138 = smul.addr %s137, 64
          %s139 = scalar_lea.vmem [#allocation2], %s138
          %s140 = smul.u32 16, %s18
          %s141 = smul.addr %s140, 2
          %s142 = sadd.s32 %s19, %s141
          %s143 = smul.addr %s142, 4
          %s144 = scalar_lea.vmem %s0, %s143
          // Predicated region
          $region25: #{rnn_model_forward.11} parent=23 // pred_check
            _
          $region26: #{rnn_model_forward.11} parent=23 // pred_check_branch
            %146 = sbr.rel (0) target = $region28
          $region27: #{rnn_model_forward.11} parent=23 // pred_region
            // Predicated region
            $region29: #{rnn_model_forward.11} parent=27 // pred_check
              _
            $region30: #{rnn_model_forward.11} parent=27 // pred_check_branch
              %148 = sbr.rel target = $region32
            $region31: #{rnn_model_forward.11} parent=27 // pred_region
              // Predicated region
              $region44: #{rnn_model_forward.11} parent=31 // pred_check
                _
              $region45: #{rnn_model_forward.11} parent=31 // pred_check_branch
                %194 = sbr.rel (0) target = $region47
              $region46: #{rnn_model_forward.11} parent=31 // pred_region
                loop: start=0, step=1, limit=1
                $region48: #{rnn_model_forward.11} parent=46 // loop_pre_header
                  _
                $region49: #{rnn_model_forward.11} parent=46 // loop_header
                  %s196 = sphi 0, %s200
                  %p197 = scmp.ge.s32.totalorder %s196, 1
                  %s201 = sphi %s144, %s144
                  %s202 = sphi %s139, %s139
                $region50: #{rnn_model_forward.11} parent=46 // loop_header_branch
                  %199 = sbr.rel (%p197) target = $region54
                $region51: #{rnn_model_forward.11} parent=46 // loop_body
                  _
                $region52: #{rnn_model_forward.11} parent=46 // loop_footer
                  %s200 = sadd.s32 1, %s196
                $region53: #{rnn_model_forward.11} parent=46 // loop_footer_branch
                  %195 = sbr.rel target = $region49
                $region54: #{rnn_model_forward.11} parent=46 // loop_exit
                  _
                %s204 = ssub.s32 16, 1
                loop: start=0, step=1, limit=1
                $region55: #{rnn_model_forward.11} parent=46 // loop_pre_header
                  _
                $region56: #{rnn_model_forward.11} parent=46 // loop_header
                  %s206 = sphi 0, %s210
                  %p207 = scmp.ge.s32.totalorder %s206, 1
                  %s211 = sphi %s144, %s144
                  %s212 = sphi %s139, %s139
                $region57: #{rnn_model_forward.11} parent=46 // loop_header_branch
                  %209 = sbr.rel (%p207) target = $region61
                $region58: #{rnn_model_forward.11} parent=46 // loop_body
                  %v213 = vld [vmem:[%s211] sm:%s204]
                  %214 = vst [vmem:[%s212] sm:%s204] %v213
                  %v215 = vld [vmem:[%s211 + $0x8] sm:%s204]
                  %216 = vst [vmem:[%s212 + $0x4] sm:%s204] %v215
                  %v217 = vld [vmem:[%s211 + $0x10] sm:%s204]
                  %218 = vst [vmem:[%s212 + $0x8] sm:%s204] %v217
                  %v219 = vld [vmem:[%s211 + $0x18] sm:%s204]
                  %220 = vst [vmem:[%s212 + $0xc] sm:%s204] %v219
                  %v221 = vld [vmem:[%s211 + $0x20] sm:%s204]
                  %222 = vst [vmem:[%s212 + $0x10] sm:%s204] %v221
                  %v223 = vld [vmem:[%s211 + $0x28] sm:%s204]
                  %224 = vst [vmem:[%s212 + $0x14] sm:%s204] %v223
                  %v225 = vld [vmem:[%s211 + $0x30] sm:%s204]
                  %226 = vst [vmem:[%s212 + $0x18] sm:%s204] %v225
                  %v227 = vld [vmem:[%s211 + $0x38] sm:%s204]
                  %228 = vst [vmem:[%s212 + $0x1c] sm:%s204] %v227
                  %v229 = vld [vmem:[%s211 + $0x40] sm:%s204]
                  %230 = vst [vmem:[%s212 + $0x20] sm:%s204] %v229
                  %v231 = vld [vmem:[%s211 + $0x48] sm:%s204]
                  %232 = vst [vmem:[%s212 + $0x24] sm:%s204] %v231
                  %v233 = vld [vmem:[%s211 + $0x50] sm:%s204]
                  %234 = vst [vmem:[%s212 + $0x28] sm:%s204] %v233
                  %v235 = vld [vmem:[%s211 + $0x58] sm:%s204]
                  %236 = vst [vmem:[%s212 + $0x2c] sm:%s204] %v235
                  %v237 = vld [vmem:[%s211 + $0x60] sm:%s204]
                  %238 = vst [vmem:[%s212 + $0x30] sm:%s204] %v237
                  %v239 = vld [vmem:[%s211 + $0x68] sm:%s204]
                  %240 = vst [vmem:[%s212 + $0x34] sm:%s204] %v239
                  %v241 = vld [vmem:[%s211 + $0x70] sm:%s204]
                  %242 = vst [vmem:[%s212 + $0x38] sm:%s204] %v241
                  %v243 = vld [vmem:[%s211 + $0x78] sm:%s204]
                  %244 = vst [vmem:[%s212 + $0x3c] sm:%s204] %v243
                $region59: #{rnn_model_forward.11} parent=46 // loop_footer
                  %s210 = sadd.s32 1, %s206
                $region60: #{rnn_model_forward.11} parent=46 // loop_footer_branch
                  %205 = sbr.rel target = $region56
                $region61: #{rnn_model_forward.11} parent=46 // loop_exit
                  _
              $region47: #{rnn_model_forward.11} parent=31 // pred_fallthru
                _
            $region32: #{rnn_model_forward.11} parent=27 // pred_fallthru
              _
            // Predicated region
            $region33: #{rnn_model_forward.11} parent=27 // pred_check
              _
            $region34: #{rnn_model_forward.11} parent=27 // pred_check_branch
              %150 = sbr.rel (0) target = $region36
            $region35: #{rnn_model_forward.11} parent=27 // pred_region
              %s152 = ssub.s32 16, 1
              loop: start=0, step=1, limit=1
              $region37: #{rnn_model_forward.11} parent=35 // loop_pre_header
                _
              $region38: #{rnn_model_forward.11} parent=35 // loop_header
                %s154 = sphi 0, %s158
                %p155 = scmp.ge.s32.totalorder %s154, 1
                %s159 = sphi %s144, %s144
                %s160 = sphi %s139, %s139
              $region39: #{rnn_model_forward.11} parent=35 // loop_header_branch
                %157 = sbr.rel (%p155) target = $region43
              $region40: #{rnn_model_forward.11} parent=35 // loop_body
                %v161 = vld [vmem:[%s159] sm:%s152]
                %162 = vst [vmem:[%s160] sm:%s152] %v161
                %v163 = vld [vmem:[%s159 + $0x8] sm:%s152]
                %164 = vst [vmem:[%s160 + $0x4] sm:%s152] %v163
                %v165 = vld [vmem:[%s159 + $0x10] sm:%s152]
                %166 = vst [vmem:[%s160 + $0x8] sm:%s152] %v165
                %v167 = vld [vmem:[%s159 + $0x18] sm:%s152]
                %168 = vst [vmem:[%s160 + $0xc] sm:%s152] %v167
                %v169 = vld [vmem:[%s159 + $0x20] sm:%s152]
                %170 = vst [vmem:[%s160 + $0x10] sm:%s152] %v169
                %v171 = vld [vmem:[%s159 + $0x28] sm:%s152]
                %172 = vst [vmem:[%s160 + $0x14] sm:%s152] %v171
                %v173 = vld [vmem:[%s159 + $0x30] sm:%s152]
                %174 = vst [vmem:[%s160 + $0x18] sm:%s152] %v173
                %v175 = vld [vmem:[%s159 + $0x38] sm:%s152]
                %176 = vst [vmem:[%s160 + $0x1c] sm:%s152] %v175
                %v177 = vld [vmem:[%s159 + $0x40] sm:%s152]
                %178 = vst [vmem:[%s160 + $0x20] sm:%s152] %v177
                %v179 = vld [vmem:[%s159 + $0x48] sm:%s152]
                %180 = vst [vmem:[%s160 + $0x24] sm:%s152] %v179
                %v181 = vld [vmem:[%s159 + $0x50] sm:%s152]
                %182 = vst [vmem:[%s160 + $0x28] sm:%s152] %v181
                %v183 = vld [vmem:[%s159 + $0x58] sm:%s152]
                %184 = vst [vmem:[%s160 + $0x2c] sm:%s152] %v183
                %v185 = vld [vmem:[%s159 + $0x60] sm:%s152]
                %186 = vst [vmem:[%s160 + $0x30] sm:%s152] %v185
                %v187 = vld [vmem:[%s159 + $0x68] sm:%s152]
                %188 = vst [vmem:[%s160 + $0x34] sm:%s152] %v187
                %v189 = vld [vmem:[%s159 + $0x70] sm:%s152]
                %190 = vst [vmem:[%s160 + $0x38] sm:%s152] %v189
                %v191 = vld [vmem:[%s159 + $0x78] sm:%s152]
                %192 = vst [vmem:[%s160 + $0x3c] sm:%s152] %v191
              $region41: #{rnn_model_forward.11} parent=35 // loop_footer
                %s158 = sadd.s32 1, %s154
              $region42: #{rnn_model_forward.11} parent=35 // loop_footer_branch
                %153 = sbr.rel target = $region38
              $region43: #{rnn_model_forward.11} parent=35 // loop_exit
                _
            $region36: #{rnn_model_forward.11} parent=27 // pred_fallthru
              _
          $region28: #{rnn_model_forward.11} parent=23 // pred_fallthru
            _
          %245 = vnop
        $region24: #{rnn_model_forward.11} parent=19 // pred_fallthru
          _
      $region20: #{rnn_model_forward.11} parent=5 // pred_fallthru
        _
      %p246 = scmp.le.s32.totalorder 1, %s11
      %p247 = scmp.lt.s32.totalorder %s11, 3
      %p248 = pnand %p246, %p247
      %p249 = pneg %p248
      // Predicated region
      $region62: #{rnn_model_forward.11} parent=5 // pred_check
        _
      $region63: #{rnn_model_forward.11} parent=5 // pred_check_branch
        %251 = sbr.rel (%p248) target = $region65
      $region64: #{rnn_model_forward.11} parent=5 // pred_region
        %s252 = ssub.s32 %s11, 1
        %s253 = sand.u32 %s38, 1
        %s254 = sand.u32 %s38, 1
        %s255 = smul.addr %s254, 64
        %s256 = scalar_lea.vmem [#allocation2], %s255
        // Predicated region
        $region66: #{rnn_model_forward.11} parent=64 // pred_check
          %p257 = pneg %p51
        $region67: #{rnn_model_forward.11} parent=64 // pred_check_branch
          %259 = sbr.rel (%p257) target = $region69
        $region68: #{rnn_model_forward.11} parent=64 // pred_region
          _
        $region69: #{rnn_model_forward.11} parent=64 // pred_fallthru
          _
        %s260 = sand.u32 %s38, 1
        %s261 = sand.u32 %s38, 1
        %s262 = smul.addr %s261, 64
        %s263 = scalar_lea.vmem [#allocation2], %s262
        %p264 = pneg %p51
        %p265 = pneg %p48
        %s266 = smul.u32 16, %s20
        %p267 = scmp.lt.s32.totalorder %s266, 15
        %s268 = scalar_select %p267, %s266, 15
        %s269 = smul.addr %s268, 8
        %s270 = scalar_lea.vmem %s1, %s269
        %p271 = pneg %p77
        %p272 = pneg %p74
        %p273 = pneg %p105
        %p274 = pneg %p102
        %s275 = sand.u32 %s92, 1
        %s276 = scalar_lea.sflag [#allocation4], %s275
        %s277 = sand.u32 %s92, 1
        %s278 = smul.addr %s277, 128
        %s279 = scalar_lea.vmem [#allocation3], %s278
        %s280 = smul.u32 16, %s20
        %s281 = smul.u32 16, %s20
        %p282 = scmp.lt.s32.totalorder %s281, 15
        %s283 = scalar_select %p282, %s281, 15
        %s284 = smul.addr %s283, 8
        %s285 = scalar_lea.vmem %s1, %s284
        %s286 = smul.u32 16, %s20
        %s287 = smul.u32 16, %s20
        %v288 = vld [vmem:[%s256] sm:$0xf]
        %v289 = vld [vmem:[%s256 + $0x4] sm:$0xf]
        %v290 = vld [vmem:[%s256 + $0x8] sm:$0xf]
        %v291 = vld [vmem:[%s256 + $0xc] sm:$0xf]
        %v292 = vld [vmem:[%s256 + $0x10] sm:$0xf]
        %v293 = vld [vmem:[%s256 + $0x14] sm:$0xf]
        %v294 = vld [vmem:[%s256 + $0x18] sm:$0xf]
        %v295 = vld [vmem:[%s256 + $0x1c] sm:$0xf]
        %v296 = vld [vmem:[%s256 + $0x20] sm:$0xf]
        %v297 = vld [vmem:[%s256 + $0x24] sm:$0xf]
        %v298 = vld [vmem:[%s256 + $0x28] sm:$0xf]
        %v299 = vld [vmem:[%s256 + $0x2c] sm:$0xf]
        %v300 = vld [vmem:[%s256 + $0x30] sm:$0xf]
        %v301 = vld [vmem:[%s256 + $0x34] sm:$0xf]
        %v302 = vld [vmem:[%s256 + $0x38] sm:$0xf]
        %v303 = vld [vmem:[%s256 + $0x3c] sm:$0xf]
        %v304 = vunpack.c.l.bf16 %v288
        %v305 = vunpack.c.l.bf16 %v289
        %v306 = vunpack.c.l.bf16 %v290
        %v307 = vunpack.c.l.bf16 %v291
        %v308 = vunpack.c.l.bf16 %v292
        %v309 = vunpack.c.l.bf16 %v293
        %v310 = vunpack.c.l.bf16 %v294
        %v311 = vunpack.c.l.bf16 %v295
        %v312 = vunpack.c.l.bf16 %v296
        %v313 = vunpack.c.l.bf16 %v297
        %v314 = vunpack.c.l.bf16 %v298
        %v315 = vunpack.c.l.bf16 %v299
        %v316 = vunpack.c.l.bf16 %v300
        %v317 = vunpack.c.l.bf16 %v301
        %v318 = vunpack.c.l.bf16 %v302
        %v319 = vunpack.c.l.bf16 %v303
        %v320 = vld [vmem:[%s285] sm:$0xff]
        %v321 = vld [vmem:[%s285 + $0x8] sm:$0xff]
        %v322 = vld [vmem:[%s285 + $0x10] sm:$0xff]
        %v323 = vld [vmem:[%s285 + $0x18] sm:$0xff]
        %v324 = vld [vmem:[%s285 + $0x20] sm:$0xff]
        %v325 = vld [vmem:[%s285 + $0x28] sm:$0xff]
        %v326 = vld [vmem:[%s285 + $0x30] sm:$0xff]
        %v327 = vld [vmem:[%s285 + $0x38] sm:$0xff]
        %v328 = vld [vmem:[%s285 + $0x40] sm:$0xff]
        %v329 = vld [vmem:[%s285 + $0x48] sm:$0xff]
        %v330 = vld [vmem:[%s285 + $0x50] sm:$0xff]
        %v331 = vld [vmem:[%s285 + $0x58] sm:$0xff]
        %v332 = vld [vmem:[%s285 + $0x60] sm:$0xff]
        %v333 = vld [vmem:[%s285 + $0x68] sm:$0xff]
        %v334 = vld [vmem:[%s285 + $0x70] sm:$0xff]
        %v335 = vld [vmem:[%s285 + $0x78] sm:$0xff]
        %337 = vset.pattern.permute.xlu0 0
        %338 = vperm.xlu0 %337, %v320
        %v339 = vpop.permute.xlu0 %338
        %342 = vset.pattern.permute.xlu0 0
        %343 = vperm.xlu0 %342, %v321
        %v344 = vpop.permute.xlu0 %343
        %347 = vset.pattern.permute.xlu0 0
        %348 = vperm.xlu0 %347, %v322
        %v349 = vpop.permute.xlu0 %348
        %352 = vset.pattern.permute.xlu0 0
        %353 = vperm.xlu0 %352, %v323
        %v354 = vpop.permute.xlu0 %353
        %357 = vset.pattern.permute.xlu0 0
        %358 = vperm.xlu0 %357, %v324
        %v359 = vpop.permute.xlu0 %358
        %362 = vset.pattern.permute.xlu0 0
        %363 = vperm.xlu0 %362, %v325
        %v364 = vpop.permute.xlu0 %363
        %367 = vset.pattern.permute.xlu0 0
        %368 = vperm.xlu0 %367, %v326
        %v369 = vpop.permute.xlu0 %368
        %372 = vset.pattern.permute.xlu0 0
        %373 = vperm.xlu0 %372, %v327
        %v374 = vpop.permute.xlu0 %373
        %377 = vset.pattern.permute.xlu0 0
        %378 = vperm.xlu0 %377, %v328
        %v379 = vpop.permute.xlu0 %378
        %382 = vset.pattern.permute.xlu0 0
        %383 = vperm.xlu0 %382, %v329
        %v384 = vpop.permute.xlu0 %383
        %387 = vset.pattern.permute.xlu0 0
        %388 = vperm.xlu0 %387, %v330
        %v389 = vpop.permute.xlu0 %388
        %392 = vset.pattern.permute.xlu0 0
        %393 = vperm.xlu0 %392, %v331
        %v394 = vpop.permute.xlu0 %393
        %397 = vset.pattern.permute.xlu0 0
        %398 = vperm.xlu0 %397, %v332
        %v399 = vpop.permute.xlu0 %398
        %402 = vset.pattern.permute.xlu0 0
        %403 = vperm.xlu0 %402, %v333
        %v404 = vpop.permute.xlu0 %403
        %407 = vset.pattern.permute.xlu0 0
        %408 = vperm.xlu0 %407, %v334
        %v409 = vpop.permute.xlu0 %408
        %412 = vset.pattern.permute.xlu0 0
        %413 = vperm.xlu0 %412, %v335
        %v414 = vpop.permute.xlu0 %413
        %v416 = vsub.f32 %v304, %v339
        %v417 = vsub.f32 %v305, %v344
        %v418 = vsub.f32 %v306, %v349
        %v419 = vsub.f32 %v307, %v354
        %v420 = vsub.f32 %v308, %v359
        %v421 = vsub.f32 %v309, %v364
        %v422 = vsub.f32 %v310, %v369
        %v423 = vsub.f32 %v311, %v374
        %v424 = vsub.f32 %v312, %v379
        %v425 = vsub.f32 %v313, %v384
        %v426 = vsub.f32 %v314, %v389
        %v427 = vsub.f32 %v315, %v394
        %v428 = vsub.f32 %v316, %v399
        %v429 = vsub.f32 %v317, %v404
        %v430 = vsub.f32 %v318, %v409
        %v431 = vsub.f32 %v319, %v414
        %432 = vst [vmem:[%s279] sm:$0xff] %v416
        %433 = vst [vmem:[%s279 + $0x8] sm:$0xff] %v417
        %434 = vst [vmem:[%s279 + $0x10] sm:$0xff] %v418
        %435 = vst [vmem:[%s279 + $0x18] sm:$0xff] %v419
        %436 = vst [vmem:[%s279 + $0x20] sm:$0xff] %v420
        %437 = vst [vmem:[%s279 + $0x28] sm:$0xff] %v421
        %438 = vst [vmem:[%s279 + $0x30] sm:$0xff] %v422
        %439 = vst [vmem:[%s279 + $0x38] sm:$0xff] %v423
        %440 = vst [vmem:[%s279 + $0x40] sm:$0xff] %v424
        %441 = vst [vmem:[%s279 + $0x48] sm:$0xff] %v425
        %442 = vst [vmem:[%s279 + $0x50] sm:$0xff] %v426
        %443 = vst [vmem:[%s279 + $0x58] sm:$0xff] %v427
        %444 = vst [vmem:[%s279 + $0x60] sm:$0xff] %v428
        %445 = vst [vmem:[%s279 + $0x68] sm:$0xff] %v429
        %446 = vst [vmem:[%s279 + $0x70] sm:$0xff] %v430
        %447 = vst [vmem:[%s279 + $0x78] sm:$0xff] %v431
        %s448 = sand.u32 %s92, 1
        %s449 = scalar_lea.sflag [#allocation4], %s448
        %s450 = sand.u32 %s92, 1
        %s451 = smul.addr %s450, 128
        %s452 = scalar_lea.vmem [#allocation3], %s451
        // Predicated region
        $region70: #{rnn_model_forward.11} parent=64 // pred_check
          %p453 = pneg %p102
        $region71: #{rnn_model_forward.11} parent=64 // pred_check_branch
          %455 = sbr.rel (%p453) target = $region73
        $region72: #{rnn_model_forward.11} parent=64 // pred_region
          %s456 = smul.u32 16, %s20
          %s458 = ssub.s32 2048, 2048
          %459 = vsyncadd %s449, %s458
          %s460 = smul.addr %s456, 2
          %s461 = sadd.s32 %s21, %s460
          %s462 = smul.addr %s461, 128
          %s463 = scalar_lea.hbm %s2, %s462
          %s464 = sshll.u32 %s452, 4
          %s465 = int_to_ptr.vmem [resolvable:$true] %s464
          %470 = dma.vmem_to_hbm [thread:$0]  %s465, 2048, %s463, %s449, 128, 256, 8
        $region73: #{rnn_model_forward.11} parent=64 // pred_fallthru
          _
      $region65: #{rnn_model_forward.11} parent=5 // pred_fallthru
        _
      %p471 = scmp.le.s32.totalorder 2, %s11
      // Predicated region
      $region74: #{rnn_model_forward.11} parent=5 // pred_check
        %p472 = pneg %p471
      $region75: #{rnn_model_forward.11} parent=5 // pred_check_branch
        %474 = sbr.rel (%p472) target = $region77
      $region76: #{rnn_model_forward.11} parent=5 // pred_region
        %s475 = ssub.s32 %s11, 2
        // Predicated region
        $region78: #{rnn_model_forward.11} parent=76 // pred_check
          %p476 = pneg %p108
        $region79: #{rnn_model_forward.11} parent=76 // pred_check_branch
          %478 = sbr.rel (%p476) target = $region81
        $region80: #{rnn_model_forward.11} parent=76 // pred_region
          %s479 = sand.u32 %s93, 1
          %s480 = scalar_lea.sflag [#allocation4], %s479
          %s481 = sand.u32 %s93, 1
          %s482 = smul.addr %s481, 128
          %s483 = scalar_lea.vmem [#allocation3], %s482
          %484 = dma.done %s480, 2048
        $region81: #{rnn_model_forward.11} parent=76 // pred_fallthru
          _
      $region77: #{rnn_model_forward.11} parent=5 // pred_fallthru
        _
    $region6: #{rnn_model_forward.11} parent=1 // loop_footer
      %s15 = sadd.s32 1, %s11
    $region7: #{rnn_model_forward.11} parent=1 // loop_footer_branch
      %10 = sbr.rel target = $region3
    $region8: #{rnn_model_forward.11} parent=1 // loop_exit
      _
    %485 = vsyncpa [#allocation4], 1
    %s486 = scalar_lea.sflag [#allocation4], 1
    %487 = vsyncpa %s486, 1

// kernel: rnn_model_forward.10
$region0: #{rnn_model_forward.10}
  #allocation0 [shape = 'u32[]', space=smem, size = 0x4, offset = 0x4, fixed_abs, tag = 'smem constant byte address 0x4 - core index']
  #allocation1 [shape = 'u32[144,128]{1,0:T(1,128)}', space=vmem, size = 0x12000, scoped, tag = 'internal scratch']
  #allocation2 [shape = 'f32[128,1]{1,0:T(8,128)}', space=vmem, size = 0x10000, scoped, tag = 'scratch operand']
  #allocation3 [shape = 'f32[128,1]{1,0:T(8,128)}', space=vmem, size = 0x10000, scoped, tag = 'scratch operand']
  %s0 = inlined_call_operand.vmem [shape: bf16[128,128], index: 0, kind: input, shape index: {}]
  %s1 = inlined_call_operand.vmem [shape: bf16[128,256], index: 1, kind: input, shape index: {}]
  %s2 = inlined_call_operand.vmem [shape: f32[1,256], index: 2, kind: input, shape index: {}]
  %s3 = inlined_call_operand.vmem [shape: bf16[128,256], index: 3, kind: output, shape index: {0}]
  %s4 = inlined_call_operand.vmem [shape: f32[128,1], index: 4, kind: output, shape index: {1}]
  %5 = xla_tuple %s3, %s4
  %s6 = sld [smem:[#allocation0]]
  $region139: #{rnn_model_forward.10} parent=0
    _
  %s8 = ssub.s32 1, %s6
  %s9 = scalar_select 0, %s8, %s6
  $region1: #{rnn_model_forward.10} parent=0
    #allocation4 [shape = 'u8[65536]{0}', space=vmem, size = 0x10000, scoped, tag = 'input window, operand 1']
    #allocation5 [shape = 'u8[65536]{0}', space=vmem, size = 0x10000, scoped, tag = 'output window, operand 0']
    loop: start=0, step=1, limit=4
    $region2: #{rnn_model_forward.10} parent=1 // loop_pre_header
      _
    $region3: #{rnn_model_forward.10} parent=1 // loop_header
      %s11 = sphi 0, %s15
      %p12 = scmp.ge.s32.totalorder %s11, 4
      %s18 = sphi 0, %s30
      %s19 = sphi 0, %s26
      %s20 = sphi 0, %s18
      %s21 = sphi 0, %s19
      %s22 = sphi 0, %s20
      %s23 = sphi 0, %s21
      %s33 = sphi 0, %s35
      %s36 = sphi 0, %s33
      %s37 = sphi 0, %s36
      %s53 = sphi 0, %s37
      %s59 = sphi 0, %s61
      %s62 = sphi 0, %s59
      %s63 = sphi 0, %s62
      %s79 = sphi 0, %s63
      %s85 = sphi 0, %s87
      %s88 = sphi 0, %s85
      %s89 = sphi 0, %s88
      %s105 = sphi 0, %s89
      %s113 = sphi 0, %s115
      %s116 = sphi 0, %s113
      %s117 = sphi 0, %s116
      %s133 = sphi 0, %s117
      %s139 = sphi 0, %s141
      %s142 = sphi 0, %s139
      %s143 = sphi 0, %s142
      %s159 = sphi 0, %s143
    $region4: #{rnn_model_forward.10} parent=1 // loop_header_branch
      %14 = sbr.rel (%p12) target = $region8
    $region5: #{rnn_model_forward.10} parent=1 // loop_body
      %s16 = ssub.s32 %s11, 1
      %s17 = ssub.s32 %s11, 2
      %s24 = sadd.s32 1, %s19
      %p25 = scmp.ge.s32.totalorder %s24, 2
      %s26 = scalar_select %p25, 0, %s24
      %s27 = sadd.s32 1, %s18
      %s28 = scalar_select %p25, %s27, %s18
      %p29 = scmp.ge.s32.totalorder %s28, 1
      %s30 = scalar_select %p29, 0, %s28
      %s31 = ssub.s32 %s18, %s30
      %p32 = scmp.eq.s32.totalorder %s31, 0
      %s34 = sadd.s32 %s33, 1
      %s35 = scalar_select %p32, %s33, %s34
      %p38 = pneg %p32
      %p39 = scmp.eq.s32.totalorder %s11, 1
      %p40 = por %p38, %p39
      %p41 = scmp.ne.s32.totalorder %s33, %s36
      %p42 = scmp.eq.s32.totalorder %s11, 0
      %p43 = por %p41, %p42
      %p44 = scmp.ne.s32.totalorder %s33, %s36
      %p45 = scmp.eq.s32.totalorder %s16, 1
      %p46 = por %p44, %p45
      %p47 = scmp.ne.s32.totalorder %s36, %s37
      %p48 = scmp.eq.s32.totalorder %s16, 0
      %p49 = por %p47, %p48
      %p50 = scmp.ne.s32.totalorder %s36, %s37
      %p51 = scmp.eq.s32.totalorder %s17, 1
      %p52 = por %p50, %p51
      %p54 = scmp.ne.s32.totalorder %s37, %s53
      %p55 = scmp.eq.s32.totalorder %s17, 0
      %p56 = por %p54, %p55
      %s57 = ssub.s32 %s19, %s26
      %p58 = scmp.eq.s32.totalorder %s57, 0
      %s60 = sadd.s32 %s59, 1
      %s61 = scalar_select %p58, %s59, %s60
      %p64 = pneg %p58
      %p65 = scmp.eq.s32.totalorder %s11, 1
      %p66 = por %p64, %p65
      %p67 = scmp.ne.s32.totalorder %s59, %s62
      %p68 = scmp.eq.s32.totalorder %s11, 0
      %p69 = por %p67, %p68
      %p70 = scmp.ne.s32.totalorder %s59, %s62
      %p71 = scmp.eq.s32.totalorder %s16, 1
      %p72 = por %p70, %p71
      %p73 = scmp.ne.s32.totalorder %s62, %s63
      %p74 = scmp.eq.s32.totalorder %s16, 0
      %p75 = por %p73, %p74
      %p76 = scmp.ne.s32.totalorder %s62, %s63
      %p77 = scmp.eq.s32.totalorder %s17, 1
      %p78 = por %p76, %p77
      %p80 = scmp.ne.s32.totalorder %s63, %s79
      %p81 = scmp.eq.s32.totalorder %s17, 0
      %p82 = por %p80, %p81
      %s83 = ssub.s32 %s19, %s26
      %p84 = scmp.eq.s32.totalorder %s83, 0
      %s86 = sadd.s32 %s85, 1
      %s87 = scalar_select %p84, %s85, %s86
      %p90 = pneg %p84
      %p91 = scmp.eq.s32.totalorder %s11, 1
      %p92 = por %p90, %p91
      %p93 = scmp.ne.s32.totalorder %s85, %s88
      %p94 = scmp.eq.s32.totalorder %s11, 0
      %p95 = por %p93, %p94
      %p96 = scmp.ne.s32.totalorder %s85, %s88
      %p97 = scmp.eq.s32.totalorder %s16, 1
      %p98 = por %p96, %p97
      %p99 = scmp.ne.s32.totalorder %s88, %s89
      %p100 = scmp.eq.s32.totalorder %s16, 0
      %p101 = por %p99, %p100
      %p102 = scmp.ne.s32.totalorder %s88, %s89
      %p103 = scmp.eq.s32.totalorder %s17, 1
      %p104 = por %p102, %p103
      %p106 = scmp.ne.s32.totalorder %s89, %s105
      %p107 = scmp.eq.s32.totalorder %s17, 0
      %p108 = por %p106, %p107
      %s109 = ssub.s32 %s18, %s30
      %s110 = ssub.s32 %s19, %s26
      %s111 = sor.u32 %s109, %s110
      %p112 = scmp.eq.s32.totalorder %s111, 0
      %s114 = sadd.s32 %s113, 1
      %s115 = scalar_select %p112, %s113, %s114
      %p118 = pneg %p112
      %p119 = scmp.eq.s32.totalorder %s11, 1
      %p120 = por %p118, %p119
      %p121 = scmp.ne.s32.totalorder %s113, %s116
      %p122 = scmp.eq.s32.totalorder %s11, 0
      %p123 = por %p121, %p122
      %p124 = scmp.ne.s32.totalorder %s113, %s116
      %p125 = scmp.eq.s32.totalorder %s16, 1
      %p126 = por %p124, %p125
      %p127 = scmp.ne.s32.totalorder %s116, %s117
      %p128 = scmp.eq.s32.totalorder %s16, 0
      %p129 = por %p127, %p128
      %p130 = scmp.ne.s32.totalorder %s116, %s117
      %p131 = scmp.eq.s32.totalorder %s17, 1
      %p132 = por %p130, %p131
      %p134 = scmp.ne.s32.totalorder %s117, %s133
      %p135 = scmp.eq.s32.totalorder %s17, 0
      %p136 = por %p134, %p135
      %s137 = ssub.s32 %s18, %s30
      %p138 = scmp.eq.s32.totalorder %s137, 0
      %s140 = sadd.s32 %s139, 1
      %s141 = scalar_select %p138, %s139, %s140
      %p144 = pneg %p138
      %p145 = scmp.eq.s32.totalorder %s11, 1
      %p146 = por %p144, %p145
      %p147 = scmp.ne.s32.totalorder %s139, %s142
      %p148 = scmp.eq.s32.totalorder %s11, 0
      %p149 = por %p147, %p148
      %p150 = scmp.ne.s32.totalorder %s139, %s142
      %p151 = scmp.eq.s32.totalorder %s16, 1
      %p152 = por %p150, %p151
      %p153 = scmp.ne.s32.totalorder %s142, %s143
      %p154 = scmp.eq.s32.totalorder %s16, 0
      %p155 = por %p153, %p154
      %p156 = scmp.ne.s32.totalorder %s142, %s143
      %p157 = scmp.eq.s32.totalorder %s17, 1
      %p158 = por %p156, %p157
      %p160 = scmp.ne.s32.totalorder %s143, %s159
      %p161 = scmp.eq.s32.totalorder %s17, 0
      %p162 = por %p160, %p161
      %p163 = scmp.le.s32.totalorder 1, %s11
      %p164 = scmp.lt.s32.totalorder %s11, 3
      %p165 = pnand %p163, %p164
      %p166 = pneg %p165
      // Predicated region
      $region9: #{rnn_model_forward.10} parent=5 // pred_check
        _
      $region10: #{rnn_model_forward.10} parent=5 // pred_check_branch
        %168 = sbr.rel (%p165) target = $region12
      $region11: #{rnn_model_forward.10} parent=5 // pred_region
        %s169 = ssub.s32 %s11, 1
        // Predicated region
        $region13: #{rnn_model_forward.10} parent=11 // pred_check
          %p170 = pneg %p49
        $region14: #{rnn_model_forward.10} parent=11 // pred_check_branch
          %172 = sbr.rel (%p170) target = $region16
        $region15: #{rnn_model_forward.10} parent=11 // pred_region
          %s173 = smul.u32 16, %s20
          %p174 = scmp.lt.s32.totalorder %s173, 15
          %s175 = scalar_select %p174, %s173, 15
          %s176 = smul.addr %s175, 4
          %s177 = scalar_lea.vmem %s0, %s176
          %s178 = smul.u32 16, %s20
        $region16: #{rnn_model_forward.10} parent=11 // pred_fallthru
          _
      $region12: #{rnn_model_forward.10} parent=5 // pred_fallthru
        _
      %p179 = scmp.lt.s32.totalorder %s11, 2
      // Predicated region
      $region17: #{rnn_model_forward.10} parent=5 // pred_check
        %p180 = pneg %p179
      $region18: #{rnn_model_forward.10} parent=5 // pred_check_branch
        %182 = sbr.rel (%p180) target = $region20
      $region19: #{rnn_model_forward.10} parent=5 // pred_region
        // Predicated region
        $region21: #{rnn_model_forward.10} parent=19 // pred_check
          %p183 = pneg %p69
        $region22: #{rnn_model_forward.10} parent=19 // pred_check_branch
          %185 = sbr.rel (%p183) target = $region24
        $region23: #{rnn_model_forward.10} parent=19 // pred_region
          %s186 = sand.u32 %s59, 1
          %s187 = sand.u32 %s59, 1
          %s188 = smul.addr %s187, 64
          %s189 = scalar_lea.vmem [#allocation4], %s188
          %s190 = smul.addr %s19, 4
          %s191 = scalar_lea.vmem %s1, %s190
          // Predicated region
          $region25: #{rnn_model_forward.10} parent=23 // pred_check
            _
          $region26: #{rnn_model_forward.10} parent=23 // pred_check_branch
            %193 = sbr.rel (0) target = $region28
          $region27: #{rnn_model_forward.10} parent=23 // pred_region
            // Predicated region
            $region29: #{rnn_model_forward.10} parent=27 // pred_check
              _
            $region30: #{rnn_model_forward.10} parent=27 // pred_check_branch
              %195 = sbr.rel target = $region32
            $region31: #{rnn_model_forward.10} parent=27 // pred_region
              // Predicated region
              $region44: #{rnn_model_forward.10} parent=31 // pred_check
                _
              $region45: #{rnn_model_forward.10} parent=31 // pred_check_branch
                %241 = sbr.rel (0) target = $region47
              $region46: #{rnn_model_forward.10} parent=31 // pred_region
                loop: start=0, step=1, limit=1
                $region48: #{rnn_model_forward.10} parent=46 // loop_pre_header
                  _
                $region49: #{rnn_model_forward.10} parent=46 // loop_header
                  %s243 = sphi 0, %s247
                  %p244 = scmp.ge.s32.totalorder %s243, 1
                  %s248 = sphi %s191, %s191
                  %s249 = sphi %s189, %s189
                $region50: #{rnn_model_forward.10} parent=46 // loop_header_branch
                  %246 = sbr.rel (%p244) target = $region54
                $region51: #{rnn_model_forward.10} parent=46 // loop_body
                  _
                $region52: #{rnn_model_forward.10} parent=46 // loop_footer
                  %s247 = sadd.s32 1, %s243
                $region53: #{rnn_model_forward.10} parent=46 // loop_footer_branch
                  %242 = sbr.rel target = $region49
                $region54: #{rnn_model_forward.10} parent=46 // loop_exit
                  _
                %s251 = ssub.s32 16, 1
                loop: start=0, step=1, limit=1
                $region55: #{rnn_model_forward.10} parent=46 // loop_pre_header
                  _
                $region56: #{rnn_model_forward.10} parent=46 // loop_header
                  %s253 = sphi 0, %s257
                  %p254 = scmp.ge.s32.totalorder %s253, 1
                  %s258 = sphi %s191, %s191
                  %s259 = sphi %s189, %s189
                $region57: #{rnn_model_forward.10} parent=46 // loop_header_branch
                  %256 = sbr.rel (%p254) target = $region61
                $region58: #{rnn_model_forward.10} parent=46 // loop_body
                  %v260 = vld [vmem:[%s258] sm:%s251]
                  %261 = vst [vmem:[%s259] sm:%s251] %v260
                  %v262 = vld [vmem:[%s258 + $0x8] sm:%s251]
                  %263 = vst [vmem:[%s259 + $0x4] sm:%s251] %v262
                  %v264 = vld [vmem:[%s258 + $0x10] sm:%s251]
                  %265 = vst [vmem:[%s259 + $0x8] sm:%s251] %v264
                  %v266 = vld [vmem:[%s258 + $0x18] sm:%s251]
                  %267 = vst [vmem:[%s259 + $0xc] sm:%s251] %v266
                  %v268 = vld [vmem:[%s258 + $0x20] sm:%s251]
                  %269 = vst [vmem:[%s259 + $0x10] sm:%s251] %v268
                  %v270 = vld [vmem:[%s258 + $0x28] sm:%s251]
                  %271 = vst [vmem:[%s259 + $0x14] sm:%s251] %v270
                  %v272 = vld [vmem:[%s258 + $0x30] sm:%s251]
                  %273 = vst [vmem:[%s259 + $0x18] sm:%s251] %v272
                  %v274 = vld [vmem:[%s258 + $0x38] sm:%s251]
                  %275 = vst [vmem:[%s259 + $0x1c] sm:%s251] %v274
                  %v276 = vld [vmem:[%s258 + $0x40] sm:%s251]
                  %277 = vst [vmem:[%s259 + $0x20] sm:%s251] %v276
                  %v278 = vld [vmem:[%s258 + $0x48] sm:%s251]
                  %279 = vst [vmem:[%s259 + $0x24] sm:%s251] %v278
                  %v280 = vld [vmem:[%s258 + $0x50] sm:%s251]
                  %281 = vst [vmem:[%s259 + $0x28] sm:%s251] %v280
                  %v282 = vld [vmem:[%s258 + $0x58] sm:%s251]
                  %283 = vst [vmem:[%s259 + $0x2c] sm:%s251] %v282
                  %v284 = vld [vmem:[%s258 + $0x60] sm:%s251]
                  %285 = vst [vmem:[%s259 + $0x30] sm:%s251] %v284
                  %v286 = vld [vmem:[%s258 + $0x68] sm:%s251]
                  %287 = vst [vmem:[%s259 + $0x34] sm:%s251] %v286
                  %v288 = vld [vmem:[%s258 + $0x70] sm:%s251]
                  %289 = vst [vmem:[%s259 + $0x38] sm:%s251] %v288
                  %v290 = vld [vmem:[%s258 + $0x78] sm:%s251]
                  %291 = vst [vmem:[%s259 + $0x3c] sm:%s251] %v290
                $region59: #{rnn_model_forward.10} parent=46 // loop_footer
                  %s257 = sadd.s32 1, %s253
                $region60: #{rnn_model_forward.10} parent=46 // loop_footer_branch
                  %252 = sbr.rel target = $region56
                $region61: #{rnn_model_forward.10} parent=46 // loop_exit
                  _
              $region47: #{rnn_model_forward.10} parent=31 // pred_fallthru
                _
            $region32: #{rnn_model_forward.10} parent=27 // pred_fallthru
              _
            // Predicated region
            $region33: #{rnn_model_forward.10} parent=27 // pred_check
              _
            $region34: #{rnn_model_forward.10} parent=27 // pred_check_branch
              %197 = sbr.rel (0) target = $region36
            $region35: #{rnn_model_forward.10} parent=27 // pred_region
              %s199 = ssub.s32 16, 1
              loop: start=0, step=1, limit=1
              $region37: #{rnn_model_forward.10} parent=35 // loop_pre_header
                _
              $region38: #{rnn_model_forward.10} parent=35 // loop_header
                %s201 = sphi 0, %s205
                %p202 = scmp.ge.s32.totalorder %s201, 1
                %s206 = sphi %s191, %s191
                %s207 = sphi %s189, %s189
              $region39: #{rnn_model_forward.10} parent=35 // loop_header_branch
                %204 = sbr.rel (%p202) target = $region43
              $region40: #{rnn_model_forward.10} parent=35 // loop_body
                %v208 = vld [vmem:[%s206] sm:%s199]
                %209 = vst [vmem:[%s207] sm:%s199] %v208
                %v210 = vld [vmem:[%s206 + $0x8] sm:%s199]
                %211 = vst [vmem:[%s207 + $0x4] sm:%s199] %v210
                %v212 = vld [vmem:[%s206 + $0x10] sm:%s199]
                %213 = vst [vmem:[%s207 + $0x8] sm:%s199] %v212
                %v214 = vld [vmem:[%s206 + $0x18] sm:%s199]
                %215 = vst [vmem:[%s207 + $0xc] sm:%s199] %v214
                %v216 = vld [vmem:[%s206 + $0x20] sm:%s199]
                %217 = vst [vmem:[%s207 + $0x10] sm:%s199] %v216
                %v218 = vld [vmem:[%s206 + $0x28] sm:%s199]
                %219 = vst [vmem:[%s207 + $0x14] sm:%s199] %v218
                %v220 = vld [vmem:[%s206 + $0x30] sm:%s199]
                %221 = vst [vmem:[%s207 + $0x18] sm:%s199] %v220
                %v222 = vld [vmem:[%s206 + $0x38] sm:%s199]
                %223 = vst [vmem:[%s207 + $0x1c] sm:%s199] %v222
                %v224 = vld [vmem:[%s206 + $0x40] sm:%s199]
                %225 = vst [vmem:[%s207 + $0x20] sm:%s199] %v224
                %v226 = vld [vmem:[%s206 + $0x48] sm:%s199]
                %227 = vst [vmem:[%s207 + $0x24] sm:%s199] %v226
                %v228 = vld [vmem:[%s206 + $0x50] sm:%s199]
                %229 = vst [vmem:[%s207 + $0x28] sm:%s199] %v228
                %v230 = vld [vmem:[%s206 + $0x58] sm:%s199]
                %231 = vst [vmem:[%s207 + $0x2c] sm:%s199] %v230
                %v232 = vld [vmem:[%s206 + $0x60] sm:%s199]
                %233 = vst [vmem:[%s207 + $0x30] sm:%s199] %v232
                %v234 = vld [vmem:[%s206 + $0x68] sm:%s199]
                %235 = vst [vmem:[%s207 + $0x34] sm:%s199] %v234
                %v236 = vld [vmem:[%s206 + $0x70] sm:%s199]
                %237 = vst [vmem:[%s207 + $0x38] sm:%s199] %v236
                %v238 = vld [vmem:[%s206 + $0x78] sm:%s199]
                %239 = vst [vmem:[%s207 + $0x3c] sm:%s199] %v238
              $region41: #{rnn_model_forward.10} parent=35 // loop_footer
                %s205 = sadd.s32 1, %s201
              $region42: #{rnn_model_forward.10} parent=35 // loop_footer_branch
                %200 = sbr.rel target = $region38
              $region43: #{rnn_model_forward.10} parent=35 // loop_exit
                _
            $region36: #{rnn_model_forward.10} parent=27 // pred_fallthru
              _
          $region28: #{rnn_model_forward.10} parent=23 // pred_fallthru
            _
          %292 = vnop
        $region24: #{rnn_model_forward.10} parent=19 // pred_fallthru
          _
        // Predicated region
        $region62: #{rnn_model_forward.10} parent=19 // pred_check
          %p293 = pneg %p95
        $region63: #{rnn_model_forward.10} parent=19 // pred_check_branch
          %295 = sbr.rel (%p293) target = $region65
        $region64: #{rnn_model_forward.10} parent=19 // pred_region
          %p296 = scmp.lt.s32.totalorder %s19, 1
          %s297 = scalar_select %p296, %s19, 1
          %s298 = scalar_lea.vmem %s2, %s297
        $region65: #{rnn_model_forward.10} parent=19 // pred_fallthru
          _
      $region20: #{rnn_model_forward.10} parent=5 // pred_fallthru
        _
      %p299 = scmp.le.s32.totalorder 1, %s11
      %p300 = scmp.lt.s32.totalorder %s11, 3
      %p301 = pnand %p299, %p300
      %p302 = pneg %p301
      // Predicated region
      $region66: #{rnn_model_forward.10} parent=5 // pred_check
        _
      $region67: #{rnn_model_forward.10} parent=5 // pred_check_branch
        %304 = sbr.rel (%p301) target = $region69
      $region68: #{rnn_model_forward.10} parent=5 // pred_region
        %s305 = ssub.s32 %s11, 1
        %s306 = sand.u32 %s62, 1
        %s307 = sand.u32 %s62, 1
        %s308 = smul.addr %s307, 64
        %s309 = scalar_lea.vmem [#allocation4], %s308
        // Predicated region
        $region70: #{rnn_model_forward.10} parent=68 // pred_check
          %p310 = pneg %p75
        $region71: #{rnn_model_forward.10} parent=68 // pred_check_branch
          %312 = sbr.rel (%p310) target = $region73
        $region72: #{rnn_model_forward.10} parent=68 // pred_region
          _
        $region73: #{rnn_model_forward.10} parent=68 // pred_fallthru
          _
        %s313 = smul.u32 16, %s20
        %p314 = scmp.lt.s32.totalorder %s313, 15
        %s315 = scalar_select %p314, %s313, 15
        %s316 = smul.addr %s315, 4
        %s317 = scalar_lea.vmem %s0, %s316
        %p318 = pneg %p49
        %p319 = pneg %p46
        %s320 = sand.u32 %s62, 1
        %s321 = sand.u32 %s62, 1
        %s322 = smul.addr %s321, 64
        %s323 = scalar_lea.vmem [#allocation4], %s322
        %p324 = pneg %p75
        %p325 = pneg %p72
        %p326 = scmp.lt.s32.totalorder %s21, 1
        %s327 = scalar_select %p326, %s21, 1
        %s328 = scalar_lea.vmem %s2, %s327
        %p329 = pneg %p101
        %p330 = pneg %p98
        %p331 = pneg %p129
        %p332 = pneg %p126
        %s333 = sand.u32 %s116, 1
        %s334 = sand.u32 %s116, 1
        %s335 = smul.addr %s334, 64
        %s336 = scalar_lea.vmem [#allocation5], %s335
        %p337 = pneg %p155
        %p338 = pneg %p152
        %s339 = smul.u32 16, %s20
        %p340 = scmp.lt.s32.totalorder %s339, 15
        %s341 = scalar_select %p340, %s339, 15
        %s342 = smul.addr %s341, 8
        %s343 = scalar_lea.vmem %s4, %s342
        %s344 = smul.u32 16, %s20
        %p345 = scmp.lt.s32.totalorder %s344, 15
        %s346 = scalar_select %p345, %s344, 15
        %s347 = smul.addr %s346, 4
        %s348 = scalar_lea.vmem %s0, %s347
        %s349 = smul.u32 16, %s20
        %p350 = scmp.lt.s32.totalorder %s21, 1
        %s351 = scalar_select %p350, %s21, 1
        %s352 = scalar_lea.vmem %s2, %s351
        %s353 = smul.u32 16, %s20
        %s354 = smul.u32 16, %s20
        %p355 = scmp.lt.s32.totalorder %s354, 15
        %s356 = scalar_select %p355, %s354, 15
        %s357 = smul.addr %s356, 8
        %s358 = scalar_lea.vmem %s4, %s357
        %s359 = smul.u32 16, %s20
        %p361 = scmp.eq.s32.totalorder %s21, 0
        // Predicated region
        $region74: #{rnn_model_forward.10} parent=68 // pred_check
          %p362 = pneg %p361
        $region75: #{rnn_model_forward.10} parent=68 // pred_check_branch
          %364 = sbr.rel (%p362) target = $region77
        $region76: #{rnn_model_forward.10} parent=68 // pred_region
          %vm365 = vcmask 7168
          %366 = vst.msk [vmem:[#allocation2] sm:$0xff] %vm365, -inf
          %367 = vst.msk [vmem:[#allocation2 + $0x8] sm:$0xff] %vm365, -inf
          %368 = vst.msk [vmem:[#allocation2 + $0x10] sm:$0xff] %vm365, -inf
          %369 = vst.msk [vmem:[#allocation2 + $0x18] sm:$0xff] %vm365, -inf
          %370 = vst.msk [vmem:[#allocation2 + $0x20] sm:$0xff] %vm365, -inf
          %371 = vst.msk [vmem:[#allocation2 + $0x28] sm:$0xff] %vm365, -inf
          %372 = vst.msk [vmem:[#allocation2 + $0x30] sm:$0xff] %vm365, -inf
          %373 = vst.msk [vmem:[#allocation2 + $0x38] sm:$0xff] %vm365, -inf
          %374 = vst.msk [vmem:[#allocation2 + $0x40] sm:$0xff] %vm365, -inf
          %375 = vst.msk [vmem:[#allocation2 + $0x48] sm:$0xff] %vm365, -inf
          %376 = vst.msk [vmem:[#allocation2 + $0x50] sm:$0xff] %vm365, -inf
          %377 = vst.msk [vmem:[#allocation2 + $0x58] sm:$0xff] %vm365, -inf
          %378 = vst.msk [vmem:[#allocation2 + $0x60] sm:$0xff] %vm365, -inf
          %379 = vst.msk [vmem:[#allocation2 + $0x68] sm:$0xff] %vm365, -inf
          %380 = vst.msk [vmem:[#allocation2 + $0x70] sm:$0xff] %vm365, -inf
          %381 = vst.msk [vmem:[#allocation2 + $0x78] sm:$0xff] %vm365, -inf
          %382 = vst.msk [vmem:[#allocation3] sm:$0xff] %vm365, 0.0
          %383 = vst.msk [vmem:[#allocation3 + $0x8] sm:$0xff] %vm365, 0.0
          %384 = vst.msk [vmem:[#allocation3 + $0x10] sm:$0xff] %vm365, 0.0
          %385 = vst.msk [vmem:[#allocation3 + $0x18] sm:$0xff] %vm365, 0.0
          %386 = vst.msk [vmem:[#allocation3 + $0x20] sm:$0xff] %vm365, 0.0
          %387 = vst.msk [vmem:[#allocation3 + $0x28] sm:$0xff] %vm365, 0.0
          %388 = vst.msk [vmem:[#allocation3 + $0x30] sm:$0xff] %vm365, 0.0
          %389 = vst.msk [vmem:[#allocation3 + $0x38] sm:$0xff] %vm365, 0.0
          %390 = vst.msk [vmem:[#allocation3 + $0x40] sm:$0xff] %vm365, 0.0
          %391 = vst.msk [vmem:[#allocation3 + $0x48] sm:$0xff] %vm365, 0.0
          %392 = vst.msk [vmem:[#allocation3 + $0x50] sm:$0xff] %vm365, 0.0
          %393 = vst.msk [vmem:[#allocation3 + $0x58] sm:$0xff] %vm365, 0.0
          %394 = vst.msk [vmem:[#allocation3 + $0x60] sm:$0xff] %vm365, 0.0
          %395 = vst.msk [vmem:[#allocation3 + $0x68] sm:$0xff] %vm365, 0.0
          %396 = vst.msk [vmem:[#allocation3 + $0x70] sm:$0xff] %vm365, 0.0
          %397 = vst.msk [vmem:[#allocation3 + $0x78] sm:$0xff] %vm365, 0.0
        $region77: #{rnn_model_forward.10} parent=68 // pred_fallthru
          _
        %v398 = vld [vmem:[%s348] sm:$0xf]
        %v399 = vld [vmem:[%s348 + $0x4] sm:$0xf]
        %v400 = vld [vmem:[%s348 + $0x8] sm:$0xf]
        %v401 = vld [vmem:[%s348 + $0xc] sm:$0xf]
        %v402 = vld [vmem:[%s348 + $0x10] sm:$0xf]
        %v403 = vld [vmem:[%s348 + $0x14] sm:$0xf]
        %v404 = vld [vmem:[%s348 + $0x18] sm:$0xf]
        %v405 = vld [vmem:[%s348 + $0x1c] sm:$0xf]
        %v406 = vld [vmem:[%s348 + $0x20] sm:$0xf]
        %v407 = vld [vmem:[%s348 + $0x24] sm:$0xf]
        %v408 = vld [vmem:[%s348 + $0x28] sm:$0xf]
        %v409 = vld [vmem:[%s348 + $0x2c] sm:$0xf]
        %v410 = vld [vmem:[%s348 + $0x30] sm:$0xf]
        %v411 = vld [vmem:[%s348 + $0x34] sm:$0xf]
        %v412 = vld [vmem:[%s348 + $0x38] sm:$0xf]
        %v413 = vld [vmem:[%s348 + $0x3c] sm:$0xf]
        %v414 = vld [vmem:[%s309] sm:$0xf]
        %v415 = vld [vmem:[%s309 + $0x4] sm:$0xf]
        %v416 = vld [vmem:[%s309 + $0x8] sm:$0xf]
        %v417 = vld [vmem:[%s309 + $0xc] sm:$0xf]
        %v418 = vld [vmem:[%s309 + $0x10] sm:$0xf]
        %v419 = vld [vmem:[%s309 + $0x14] sm:$0xf]
        %v420 = vld [vmem:[%s309 + $0x18] sm:$0xf]
        %v421 = vld [vmem:[%s309 + $0x1c] sm:$0xf]
        %v422 = vld [vmem:[%s309 + $0x20] sm:$0xf]
        %v423 = vld [vmem:[%s309 + $0x24] sm:$0xf]
        %v424 = vld [vmem:[%s309 + $0x28] sm:$0xf]
        %v425 = vld [vmem:[%s309 + $0x2c] sm:$0xf]
        %v426 = vld [vmem:[%s309 + $0x30] sm:$0xf]
        %v427 = vld [vmem:[%s309 + $0x34] sm:$0xf]
        %v428 = vld [vmem:[%s309 + $0x38] sm:$0xf]
        %v429 = vld [vmem:[%s309 + $0x3c] sm:$0xf]
        %v430 = vld [vmem:[%s352] sm:$0x1]
        %v432 = vlaneseq
        %v433 = vshrl.u32 %v432, 7
        %v434 = vsub.s32 0, %v433
        %v435 = vrot.slane %v430, %v434
        %v453 = vunpack.c.l.b16 %v398
        %v454 = vunpack.c.l.b16 %v399
        %v455 = vunpack.c.l.b16 %v400
        %v456 = vunpack.c.l.b16 %v401
        %v457 = vunpack.c.l.b16 %v402
        %v458 = vunpack.c.l.b16 %v403
        %v459 = vunpack.c.l.b16 %v404
        %v460 = vunpack.c.l.b16 %v405
        %v461 = vunpack.c.l.b16 %v406
        %v462 = vunpack.c.l.b16 %v407
        %v463 = vunpack.c.l.b16 %v408
        %v464 = vunpack.c.l.b16 %v409
        %v465 = vunpack.c.l.b16 %v410
        %v466 = vunpack.c.l.b16 %v411
        %v467 = vunpack.c.l.b16 %v412
        %v468 = vunpack.c.l.b16 %v413
        %v469 = vpack.c.b16 %v454, %v453
        %v470 = vpack.c.b16 %v456, %v455
        %v471 = vpack.c.b16 %v458, %v457
        %v472 = vpack.c.b16 %v460, %v459
        %v473 = vpack.c.b16 %v462, %v461
        %v474 = vpack.c.b16 %v464, %v463
        %v475 = vpack.c.b16 %v466, %v465
        %v476 = vpack.c.b16 %v468, %v467
        %v501 = vunpack.c.l.b16 %v414
        %v502 = vunpack.c.l.b16 %v415
        %v503 = vunpack.c.l.b16 %v416
        %v504 = vunpack.c.l.b16 %v417
        %v505 = vunpack.c.l.b16 %v418
        %v506 = vunpack.c.l.b16 %v419
        %v507 = vunpack.c.l.b16 %v420
        %v508 = vunpack.c.l.b16 %v421
        %v509 = vunpack.c.l.b16 %v422
        %v510 = vunpack.c.l.b16 %v423
        %v511 = vunpack.c.l.b16 %v424
        %v512 = vunpack.c.l.b16 %v425
        %v513 = vunpack.c.l.b16 %v426
        %v514 = vunpack.c.l.b16 %v427
        %v515 = vunpack.c.l.b16 %v428
        %v516 = vunpack.c.l.b16 %v429
        %v517 = vpack.c.b16 %v502, %v501
        %v518 = vpack.c.b16 %v504, %v503
        %v519 = vpack.c.b16 %v506, %v505
        %v520 = vpack.c.b16 %v508, %v507
        %v521 = vpack.c.b16 %v510, %v509
        %v522 = vpack.c.b16 %v512, %v511
        %v523 = vpack.c.b16 %v514, %v513
        %v524 = vpack.c.b16 %v516, %v515
        %533 = vmatprep.subr.bf16.mxu0 0
        %534 = vmatpush1.bf16.msra.mxu0 %v524
        %535 = vmatprep.subr.bf16.mxu0 0
        %536 = vmatpush1.bf16.msra.mxu0 %v523
        %537 = vmatprep.subr.bf16.mxu0 0
        %538 = vmatpush1.bf16.msra.mxu0 %v522
        %539 = vmatprep.subr.bf16.mxu0 0
        %540 = vmatpush1.bf16.msra.mxu0 %v521
        %541 = vmatprep.subr.bf16.mxu0 0
        %542 = vmatpush1.bf16.msra.mxu0 %v520
        %543 = vmatprep.subr.bf16.mxu0 0
        %544 = vmatpush1.bf16.msra.mxu0 %v519
        %545 = vmatprep.subr.bf16.mxu0 0
        %546 = vmatpush1.bf16.msra.mxu0 %v518
        %547 = vmatprep.subr.bf16.mxu0 0
        %548 = vmatpush1.bf16.msra.mxu0 %v517
        %549 = vmatprep.subr.bf16.mxu0 0
        %550 = vmatpush2.bf16.msra.mxu0 0
        %551 = vmatprep.subr.bf16.mxu0 0
        %552 = vmatpush2.bf16.msra.mxu0 0
        %553 = vmatprep.subr.bf16.mxu0 0
        %554 = vmatpush2.bf16.msra.mxu0 0
        %555 = vmatprep.subr.bf16.mxu0 0
        %556 = vmatpush2.bf16.msra.mxu0 0
        %557 = vmatprep.subr.bf16.mxu0 0
        %558 = vmatpush2.bf16.msra.mxu0 0
        %559 = vmatprep.subr.bf16.mxu0 0
        %560 = vmatpush2.bf16.msra.mxu0 0
        %561 = vmatprep.subr.bf16.mxu0 0
        %562 = vmatpush2.bf16.msra.mxu0 0
        %563 = vmatprep.subr.bf16.mxu0 0
        %564 = vmatpush2.bf16.msra.mxu0 0
        %565 = vmatprep.mubr.bf16.mxu0 0
        %566 = vmatmul.mubr.bf16.gmra.mxu0 %v469
        %v567 = vpop.f32.mrf.mxu0
        %v568 = vadd.f32 %v435, %v567
        %v569 = vpop.f32.mrf.mxu0
        %v570 = vpop.f32.mrf.mxu0
        %v571 = vadd.f32 %v435, %v570
        %v572 = vpop.f32.mrf.mxu0
        %573 = vmatprep.mubr.bf16.mxu0 0
        %574 = vmatmul.mubr.bf16.gmra.mxu0 %v470
        %v575 = vpop.f32.mrf.mxu0
        %v576 = vadd.f32 %v435, %v575
        %v577 = vpop.f32.mrf.mxu0
        %v578 = vpop.f32.mrf.mxu0
        %v579 = vadd.f32 %v435, %v578
        %v580 = vpop.f32.mrf.mxu0
        %581 = vmatprep.mubr.bf16.mxu0 0
        %582 = vmatmul.mubr.bf16.gmra.mxu0 %v471
        %v583 = vpop.f32.mrf.mxu0
        %v584 = vadd.f32 %v435, %v583
        %v585 = vpop.f32.mrf.mxu0
        %v586 = vpop.f32.mrf.mxu0
        %v587 = vadd.f32 %v435, %v586
        %v588 = vpop.f32.mrf.mxu0
        %589 = vmatprep.mubr.bf16.mxu0 0
        %590 = vmatmul.mubr.bf16.gmra.mxu0 %v472
        %v591 = vpop.f32.mrf.mxu0
        %v592 = vadd.f32 %v435, %v591
        %v593 = vpop.f32.mrf.mxu0
        %v594 = vpop.f32.mrf.mxu0
        %v595 = vadd.f32 %v435, %v594
        %v596 = vpop.f32.mrf.mxu0
        %597 = vmatprep.mubr.bf16.mxu0 0
        %598 = vmatmul.mubr.bf16.gmra.mxu0 %v473
        %v599 = vpop.f32.mrf.mxu0
        %v600 = vadd.f32 %v435, %v599
        %v601 = vpop.f32.mrf.mxu0
        %v602 = vpop.f32.mrf.mxu0
        %v603 = vadd.f32 %v435, %v602
        %v604 = vpop.f32.mrf.mxu0
        %605 = vmatprep.mubr.bf16.mxu0 0
        %606 = vmatmul.mubr.bf16.gmra.mxu0 %v474
        %v607 = vpop.f32.mrf.mxu0
        %v608 = vadd.f32 %v435, %v607
        %v609 = vpop.f32.mrf.mxu0
        %v610 = vpop.f32.mrf.mxu0
        %v611 = vadd.f32 %v435, %v610
        %v612 = vpop.f32.mrf.mxu0
        %613 = vmatprep.mubr.bf16.mxu0 0
        %614 = vmatmul.mubr.bf16.gmra.mxu0 %v475
        %v615 = vpop.f32.mrf.mxu0
        %v616 = vadd.f32 %v435, %v615
        %v617 = vpop.f32.mrf.mxu0
        %v618 = vpop.f32.mrf.mxu0
        %v619 = vadd.f32 %v435, %v618
        %v620 = vpop.f32.mrf.mxu0
        %621 = vmatprep.mubr.bf16.mxu0 0
        %622 = vmatmul.mubr.bf16.gmra.mxu0 %v476
        %v623 = vpop.f32.mrf.mxu0
        %v624 = vadd.f32 %v435, %v623
        %v625 = vpop.f32.mrf.mxu0
        %v626 = vpop.f32.mrf.mxu0
        %v627 = vadd.f32 %v435, %v626
        %v628 = vpop.f32.mrf.mxu0
        %629 = vdwg.mxu0
        %v630 = vpack.c.bf16 %v571, %v568
        %v631 = vpack.c.bf16 %v579, %v576
        %v632 = vpack.c.bf16 %v587, %v584
        %v633 = vpack.c.bf16 %v595, %v592
        %v634 = vpack.c.bf16 %v603, %v600
        %v635 = vpack.c.bf16 %v611, %v608
        %v636 = vpack.c.bf16 %v619, %v616
        %v637 = vpack.c.bf16 %v627, %v624
        %v646 = vunpack.c.l.b16 %v630
        %v647 = vunpack.c.h.b16 %v630
        %v648 = vunpack.c.l.b16 %v631
        %v649 = vunpack.c.h.b16 %v631
        %v650 = vunpack.c.l.b16 %v632
        %v651 = vunpack.c.h.b16 %v632
        %v652 = vunpack.c.l.b16 %v633
        %v653 = vunpack.c.h.b16 %v633
        %v654 = vunpack.c.l.b16 %v634
        %v655 = vunpack.c.h.b16 %v634
        %v656 = vunpack.c.l.b16 %v635
        %v657 = vunpack.c.h.b16 %v635
        %v658 = vunpack.c.l.b16 %v636
        %v659 = vunpack.c.h.b16 %v636
        %v660 = vunpack.c.l.b16 %v637
        %v661 = vunpack.c.h.b16 %v637
        %v662 = vpack.c.b16 %v646, %v646
        %v663 = vpack.c.b16 %v647, %v647
        %v664 = vpack.c.b16 %v648, %v648
        %v665 = vpack.c.b16 %v649, %v649
        %v666 = vpack.c.b16 %v650, %v650
        %v667 = vpack.c.b16 %v651, %v651
        %v668 = vpack.c.b16 %v652, %v652
        %v669 = vpack.c.b16 %v653, %v653
        %v670 = vpack.c.b16 %v654, %v654
        %v671 = vpack.c.b16 %v655, %v655
        %v672 = vpack.c.b16 %v656, %v656
        %v673 = vpack.c.b16 %v657, %v657
        %v674 = vpack.c.b16 %v658, %v658
        %v675 = vpack.c.b16 %v659, %v659
        %v676 = vpack.c.b16 %v660, %v660
        %v677 = vpack.c.b16 %v661, %v661
        %694 = vst [vmem:[%s336] sm:$0xf] %v662
        %695 = vst [vmem:[%s336 + $0x4] sm:$0xf] %v663
        %696 = vst [vmem:[%s336 + $0x8] sm:$0xf] %v664
        %697 = vst [vmem:[%s336 + $0xc] sm:$0xf] %v665
        %698 = vst [vmem:[%s336 + $0x10] sm:$0xf] %v666
        %699 = vst [vmem:[%s336 + $0x14] sm:$0xf] %v667
        %700 = vst [vmem:[%s336 + $0x18] sm:$0xf] %v668
        %701 = vst [vmem:[%s336 + $0x1c] sm:$0xf] %v669
        %702 = vst [vmem:[%s336 + $0x20] sm:$0xf] %v670
        %703 = vst [vmem:[%s336 + $0x24] sm:$0xf] %v671
        %704 = vst [vmem:[%s336 + $0x28] sm:$0xf] %v672
        %705 = vst [vmem:[%s336 + $0x2c] sm:$0xf] %v673
        %706 = vst [vmem:[%s336 + $0x30] sm:$0xf] %v674
        %707 = vst [vmem:[%s336 + $0x34] sm:$0xf] %v675
        %708 = vst [vmem:[%s336 + $0x38] sm:$0xf] %v676
        %709 = vst [vmem:[%s336 + $0x3c] sm:$0xf] %v677
        %v710 = vunpack.c.l.bf16 %v630
        %v711 = vunpack.c.h.bf16 %v630
        %v712 = vunpack.c.l.bf16 %v631
        %v713 = vunpack.c.h.bf16 %v631
        %v714 = vunpack.c.l.bf16 %v632
        %v715 = vunpack.c.h.bf16 %v632
        %v716 = vunpack.c.l.bf16 %v633
        %v717 = vunpack.c.h.bf16 %v633
        %v718 = vunpack.c.l.bf16 %v634
        %v719 = vunpack.c.h.bf16 %v634
        %v720 = vunpack.c.l.bf16 %v635
        %v721 = vunpack.c.h.bf16 %v635
        %v722 = vunpack.c.l.bf16 %v636
        %v723 = vunpack.c.h.bf16 %v636
        %v724 = vunpack.c.l.bf16 %v637
        %v725 = vunpack.c.h.bf16 %v637
        %v726 = vld [vmem:[#allocation2] sm:$0xff]
        %v727 = vld [vmem:[#allocation2 + $0x8] sm:$0xff]
        %v728 = vld [vmem:[#allocation2 + $0x10] sm:$0xff]
        %v729 = vld [vmem:[#allocation2 + $0x18] sm:$0xff]
        %v730 = vld [vmem:[#allocation2 + $0x20] sm:$0xff]
        %v731 = vld [vmem:[#allocation2 + $0x28] sm:$0xff]
        %v732 = vld [vmem:[#allocation2 + $0x30] sm:$0xff]
        %v733 = vld [vmem:[#allocation2 + $0x38] sm:$0xff]
        %v734 = vld [vmem:[#allocation2 + $0x40] sm:$0xff]
        %v735 = vld [vmem:[#allocation2 + $0x48] sm:$0xff]
        %v736 = vld [vmem:[#allocation2 + $0x50] sm:$0xff]
        %v737 = vld [vmem:[#allocation2 + $0x58] sm:$0xff]
        %v738 = vld [vmem:[#allocation2 + $0x60] sm:$0xff]
        %v739 = vld [vmem:[#allocation2 + $0x68] sm:$0xff]
        %v740 = vld [vmem:[#allocation2 + $0x70] sm:$0xff]
        %v741 = vld [vmem:[#allocation2 + $0x78] sm:$0xff]
        %742 = vmax.xlane.f32.xlu0 %v710
        %v743 = vpop.xlane.xlu0 %742
        %744 = vmax.xlane.f32.xlu0 %v711
        %v745 = vpop.xlane.xlu0 %744
        %746 = vmax.xlane.f32.xlu0 %v712
        %v747 = vpop.xlane.xlu0 %746
        %748 = vmax.xlane.f32.xlu0 %v713
        %v749 = vpop.xlane.xlu0 %748
        %750 = vmax.xlane.f32.xlu0 %v714
        %v751 = vpop.xlane.xlu0 %750
        %752 = vmax.xlane.f32.xlu0 %v715
        %v753 = vpop.xlane.xlu0 %752
        %754 = vmax.xlane.f32.xlu0 %v716
        %v755 = vpop.xlane.xlu0 %754
        %756 = vmax.xlane.f32.xlu0 %v717
        %v757 = vpop.xlane.xlu0 %756
        %758 = vmax.xlane.f32.xlu0 %v718
        %v759 = vpop.xlane.xlu0 %758
        %760 = vmax.xlane.f32.xlu0 %v719
        %v761 = vpop.xlane.xlu0 %760
        %762 = vmax.xlane.f32.xlu0 %v720
        %v763 = vpop.xlane.xlu0 %762
        %764 = vmax.xlane.f32.xlu0 %v721
        %v765 = vpop.xlane.xlu0 %764
        %766 = vmax.xlane.f32.xlu0 %v722
        %v767 = vpop.xlane.xlu0 %766
        %768 = vmax.xlane.f32.xlu0 %v723
        %v769 = vpop.xlane.xlu0 %768
        %770 = vmax.xlane.f32.xlu0 %v724
        %v771 = vpop.xlane.xlu0 %770
        %772 = vmax.xlane.f32.xlu0 %v725
        %v773 = vpop.xlane.xlu0 %772
        %v774 = vmax.f32 %v726, %v743
        %v775 = vmax.f32 %v727, %v745
        %v776 = vmax.f32 %v728, %v747
        %v777 = vmax.f32 %v729, %v749
        %v778 = vmax.f32 %v730, %v751
        %v779 = vmax.f32 %v731, %v753
        %v780 = vmax.f32 %v732, %v755
        %v781 = vmax.f32 %v733, %v757
        %v782 = vmax.f32 %v734, %v759
        %v783 = vmax.f32 %v735, %v761
        %v784 = vmax.f32 %v736, %v763
        %v785 = vmax.f32 %v737, %v765
        %v786 = vmax.f32 %v738, %v767
        %v787 = vmax.f32 %v739, %v769
        %v788 = vmax.f32 %v740, %v771
        %v789 = vmax.f32 %v741, %v773
        %v790 = vld [vmem:[#allocation3] sm:$0xff]
        %v791 = vld [vmem:[#allocation3 + $0x8] sm:$0xff]
        %v792 = vld [vmem:[#allocation3 + $0x10] sm:$0xff]
        %v793 = vld [vmem:[#allocation3 + $0x18] sm:$0xff]
        %v794 = vld [vmem:[#allocation3 + $0x20] sm:$0xff]
        %v795 = vld [vmem:[#allocation3 + $0x28] sm:$0xff]
        %v796 = vld [vmem:[#allocation3 + $0x30] sm:$0xff]
        %v797 = vld [vmem:[#allocation3 + $0x38] sm:$0xff]
        %v798 = vld [vmem:[#allocation3 + $0x40] sm:$0xff]
        %v799 = vld [vmem:[#allocation3 + $0x48] sm:$0xff]
        %v800 = vld [vmem:[#allocation3 + $0x50] sm:$0xff]
        %v801 = vld [vmem:[#allocation3 + $0x58] sm:$0xff]
        %v802 = vld [vmem:[#allocation3 + $0x60] sm:$0xff]
        %v803 = vld [vmem:[#allocation3 + $0x68] sm:$0xff]
        %v804 = vld [vmem:[#allocation3 + $0x70] sm:$0xff]
        %v805 = vld [vmem:[#allocation3 + $0x78] sm:$0xff]
        %v806 = vsub.f32 %v726, %v774
        %v807 = vsub.f32 %v727, %v775
        %v808 = vsub.f32 %v728, %v776
        %v809 = vsub.f32 %v729, %v777
        %v810 = vsub.f32 %v730, %v778
        %v811 = vsub.f32 %v731, %v779
        %v812 = vsub.f32 %v732, %v780
        %v813 = vsub.f32 %v733, %v781
        %v814 = vsub.f32 %v734, %v782
        %v815 = vsub.f32 %v735, %v783
        %v816 = vsub.f32 %v736, %v784
        %v817 = vsub.f32 %v737, %v785
        %v818 = vsub.f32 %v738, %v786
        %v819 = vsub.f32 %v739, %v787
        %v820 = vsub.f32 %v740, %v788
        %v821 = vsub.f32 %v741, %v789
        %v822 = vmul.f32 %v806, 1.442695
        %v823 = vpow.pop %v822
        %v824 = vmul.f32 %v807, 1.442695
        %v825 = vpow.pop %v824
        %v826 = vmul.f32 %v808, 1.442695
        %v827 = vpow.pop %v826
        %v828 = vmul.f32 %v809, 1.442695
        %v829 = vpow.pop %v828
        %v830 = vmul.f32 %v810, 1.442695
        %v831 = vpow.pop %v830
        %v832 = vmul.f32 %v811, 1.442695
        %v833 = vpow.pop %v832
        %v834 = vmul.f32 %v812, 1.442695
        %v835 = vpow.pop %v834
        %v836 = vmul.f32 %v813, 1.442695
        %v837 = vpow.pop %v836
        %v838 = vmul.f32 %v814, 1.442695
        %v839 = vpow.pop %v838
        %v840 = vmul.f32 %v815, 1.442695
        %v841 = vpow.pop %v840
        %v842 = vmul.f32 %v816, 1.442695
        %v843 = vpow.pop %v842
        %v844 = vmul.f32 %v817, 1.442695
        %v845 = vpow.pop %v844
        %v846 = vmul.f32 %v818, 1.442695
        %v847 = vpow.pop %v846
        %v848 = vmul.f32 %v819, 1.442695
        %v849 = vpow.pop %v848
        %v850 = vmul.f32 %v820, 1.442695
        %v851 = vpow.pop %v850
        %v852 = vmul.f32 %v821, 1.442695
        %v853 = vpow.pop %v852
        %v854 = vmul.f32 %v790, %v823
        %v855 = vmul.f32 %v791, %v825
        %v856 = vmul.f32 %v792, %v827
        %v857 = vmul.f32 %v793, %v829
        %v858 = vmul.f32 %v794, %v831
        %v859 = vmul.f32 %v795, %v833
        %v860 = vmul.f32 %v796, %v835
        %v861 = vmul.f32 %v797, %v837
        %v862 = vmul.f32 %v798, %v839
        %v863 = vmul.f32 %v799, %v841
        %v864 = vmul.f32 %v800, %v843
        %v865 = vmul.f32 %v801, %v845
        %v866 = vmul.f32 %v802, %v847
        %v867 = vmul.f32 %v803, %v849
        %v868 = vmul.f32 %v804, %v851
        %v869 = vmul.f32 %v805, %v853
        %871 = vset.pattern.permute.xlu0 0
        %872 = vperm.xlu0 %871, %v774
        %v873 = vpop.permute.xlu0 %872
        %876 = vset.pattern.permute.xlu0 0
        %877 = vperm.xlu0 %876, %v775
        %v878 = vpop.permute.xlu0 %877
        %881 = vset.pattern.permute.xlu0 0
        %882 = vperm.xlu0 %881, %v776
        %v883 = vpop.permute.xlu0 %882
        %886 = vset.pattern.permute.xlu0 0
        %887 = vperm.xlu0 %886, %v777
        %v888 = vpop.permute.xlu0 %887
        %891 = vset.pattern.permute.xlu0 0
        %892 = vperm.xlu0 %891, %v778
        %v893 = vpop.permute.xlu0 %892
        %896 = vset.pattern.permute.xlu0 0
        %897 = vperm.xlu0 %896, %v779
        %v898 = vpop.permute.xlu0 %897
        %901 = vset.pattern.permute.xlu0 0
        %902 = vperm.xlu0 %901, %v780
        %v903 = vpop.permute.xlu0 %902
        %906 = vset.pattern.permute.xlu0 0
        %907 = vperm.xlu0 %906, %v781
        %v908 = vpop.permute.xlu0 %907
        %911 = vset.pattern.permute.xlu0 0
        %912 = vperm.xlu0 %911, %v782
        %v913 = vpop.permute.xlu0 %912
        %916 = vset.pattern.permute.xlu0 0
        %917 = vperm.xlu0 %916, %v783
        %v918 = vpop.permute.xlu0 %917
        %921 = vset.pattern.permute.xlu0 0
        %922 = vperm.xlu0 %921, %v784
        %v923 = vpop.permute.xlu0 %922
        %926 = vset.pattern.permute.xlu0 0
        %927 = vperm.xlu0 %926, %v785
        %v928 = vpop.permute.xlu0 %927
        %931 = vset.pattern.permute.xlu0 0
        %932 = vperm.xlu0 %931, %v786
        %v933 = vpop.permute.xlu0 %932
        %936 = vset.pattern.permute.xlu0 0
        %937 = vperm.xlu0 %936, %v787
        %v938 = vpop.permute.xlu0 %937
        %941 = vset.pattern.permute.xlu0 0
        %942 = vperm.xlu0 %941, %v788
        %v943 = vpop.permute.xlu0 %942
        %946 = vset.pattern.permute.xlu0 0
        %947 = vperm.xlu0 %946, %v789
        %v948 = vpop.permute.xlu0 %947
        %v950 = vsub.f32 %v710, %v873
        %v951 = vsub.f32 %v711, %v878
        %v952 = vsub.f32 %v712, %v883
        %v953 = vsub.f32 %v713, %v888
        %v954 = vsub.f32 %v714, %v893
        %v955 = vsub.f32 %v715, %v898
        %v956 = vsub.f32 %v716, %v903
        %v957 = vsub.f32 %v717, %v908
        %v958 = vsub.f32 %v718, %v913
        %v959 = vsub.f32 %v719, %v918
        %v960 = vsub.f32 %v720, %v923
        %v961 = vsub.f32 %v721, %v928
        %v962 = vsub.f32 %v722, %v933
        %v963 = vsub.f32 %v723, %v938
        %v964 = vsub.f32 %v724, %v943
        %v965 = vsub.f32 %v725, %v948
        %v966 = vmul.f32 %v950, 1.442695
        %v967 = vpow.pop %v966
        %v968 = vmul.f32 %v951, 1.442695
        %v969 = vpow.pop %v968
        %v970 = vmul.f32 %v952, 1.442695
        %v971 = vpow.pop %v970
        %v972 = vmul.f32 %v953, 1.442695
        %v973 = vpow.pop %v972
        %v974 = vmul.f32 %v954, 1.442695
        %v975 = vpow.pop %v974
        %v976 = vmul.f32 %v955, 1.442695
        %v977 = vpow.pop %v976
        %v978 = vmul.f32 %v956, 1.442695
        %v979 = vpow.pop %v978
        %v980 = vmul.f32 %v957, 1.442695
        %v981 = vpow.pop %v980
        %v982 = vmul.f32 %v958, 1.442695
        %v983 = vpow.pop %v982
        %v984 = vmul.f32 %v959, 1.442695
        %v985 = vpow.pop %v984
        %v986 = vmul.f32 %v960, 1.442695
        %v987 = vpow.pop %v986
        %v988 = vmul.f32 %v961, 1.442695
        %v989 = vpow.pop %v988
        %v990 = vmul.f32 %v962, 1.442695
        %v991 = vpow.pop %v990
        %v992 = vmul.f32 %v963, 1.442695
        %v993 = vpow.pop %v992
        %v994 = vmul.f32 %v964, 1.442695
        %v995 = vpow.pop %v994
        %v996 = vmul.f32 %v965, 1.442695
        %v997 = vpow.pop %v996
        %998 = vadd.xlane.f32.xlu0 %v967
        %v999 = vpop.xlane.xlu0 %998
        %1000 = vadd.xlane.f32.xlu0 %v969
        %v1001 = vpop.xlane.xlu0 %1000
        %1002 = vadd.xlane.f32.xlu0 %v971
        %v1003 = vpop.xlane.xlu0 %1002
        %1004 = vadd.xlane.f32.xlu0 %v973
        %v1005 = vpop.xlane.xlu0 %1004
        %1006 = vadd.xlane.f32.xlu0 %v975
        %v1007 = vpop.xlane.xlu0 %1006
        %1008 = vadd.xlane.f32.xlu0 %v977
        %v1009 = vpop.xlane.xlu0 %1008
        %1010 = vadd.xlane.f32.xlu0 %v979
        %v1011 = vpop.xlane.xlu0 %1010
        %1012 = vadd.xlane.f32.xlu0 %v981
        %v1013 = vpop.xlane.xlu0 %1012
        %1014 = vadd.xlane.f32.xlu0 %v983
        %v1015 = vpop.xlane.xlu0 %1014
        %1016 = vadd.xlane.f32.xlu0 %v985
        %v1017 = vpop.xlane.xlu0 %1016
        %1018 = vadd.xlane.f32.xlu0 %v987
        %v1019 = vpop.xlane.xlu0 %1018
        %1020 = vadd.xlane.f32.xlu0 %v989
        %v1021 = vpop.xlane.xlu0 %1020
        %1022 = vadd.xlane.f32.xlu0 %v991
        %v1023 = vpop.xlane.xlu0 %1022
        %1024 = vadd.xlane.f32.xlu0 %v993
        %v1025 = vpop.xlane.xlu0 %1024
        %1026 = vadd.xlane.f32.xlu0 %v995
        %v1027 = vpop.xlane.xlu0 %1026
        %1028 = vadd.xlane.f32.xlu0 %v997
        %v1029 = vpop.xlane.xlu0 %1028
        %v1030 = vadd.f32 %v854, %v999
        %v1031 = vadd.f32 %v855, %v1001
        %v1032 = vadd.f32 %v856, %v1003
        %v1033 = vadd.f32 %v857, %v1005
        %v1034 = vadd.f32 %v858, %v1007
        %v1035 = vadd.f32 %v859, %v1009
        %v1036 = vadd.f32 %v860, %v1011
        %v1037 = vadd.f32 %v861, %v1013
        %v1038 = vadd.f32 %v862, %v1015
        %v1039 = vadd.f32 %v863, %v1017
        %v1040 = vadd.f32 %v864, %v1019
        %v1041 = vadd.f32 %v865, %v1021
        %v1042 = vadd.f32 %v866, %v1023
        %v1043 = vadd.f32 %v867, %v1025
        %v1044 = vadd.f32 %v868, %v1027
        %v1045 = vadd.f32 %v869, %v1029
        %vm1046 = vcmask 7168
        %1047 = vst.msk [vmem:[#allocation3] sm:$0xff] %vm1046, %v1030
        %1048 = vst.msk [vmem:[#allocation3 + $0x8] sm:$0xff] %vm1046, %v1031
        %1049 = vst.msk [vmem:[#allocation3 + $0x10] sm:$0xff] %vm1046, %v1032
        %1050 = vst.msk [vmem:[#allocation3 + $0x18] sm:$0xff] %vm1046, %v1033
        %1051 = vst.msk [vmem:[#allocation3 + $0x20] sm:$0xff] %vm1046, %v1034
        %1052 = vst.msk [vmem:[#allocation3 + $0x28] sm:$0xff] %vm1046, %v1035
        %1053 = vst.msk [vmem:[#allocation3 + $0x30] sm:$0xff] %vm1046, %v1036
        %1054 = vst.msk [vmem:[#allocation3 + $0x38] sm:$0xff] %vm1046, %v1037
        %1055 = vst.msk [vmem:[#allocation3 + $0x40] sm:$0xff] %vm1046, %v1038
        %1056 = vst.msk [vmem:[#allocation3 + $0x48] sm:$0xff] %vm1046, %v1039
        %1057 = vst.msk [vmem:[#allocation3 + $0x50] sm:$0xff] %vm1046, %v1040
        %1058 = vst.msk [vmem:[#allocation3 + $0x58] sm:$0xff] %vm1046, %v1041
        %1059 = vst.msk [vmem:[#allocation3 + $0x60] sm:$0xff] %vm1046, %v1042
        %1060 = vst.msk [vmem:[#allocation3 + $0x68] sm:$0xff] %vm1046, %v1043
        %1061 = vst.msk [vmem:[#allocation3 + $0x70] sm:$0xff] %vm1046, %v1044
        %1062 = vst.msk [vmem:[#allocation3 + $0x78] sm:$0xff] %vm1046, %v1045
        %1063 = vst.msk [vmem:[#allocation2] sm:$0xff] %vm1046, %v774
        %1064 = vst.msk [vmem:[#allocation2 + $0x8] sm:$0xff] %vm1046, %v775
        %1065 = vst.msk [vmem:[#allocation2 + $0x10] sm:$0xff] %vm1046, %v776
        %1066 = vst.msk [vmem:[#allocation2 + $0x18] sm:$0xff] %vm1046, %v777
        %1067 = vst.msk [vmem:[#allocation2 + $0x20] sm:$0xff] %vm1046, %v778
        %1068 = vst.msk [vmem:[#allocation2 + $0x28] sm:$0xff] %vm1046, %v779
        %1069 = vst.msk [vmem:[#allocation2 + $0x30] sm:$0xff] %vm1046, %v780
        %1070 = vst.msk [vmem:[#allocation2 + $0x38] sm:$0xff] %vm1046, %v781
        %1071 = vst.msk [vmem:[#allocation2 + $0x40] sm:$0xff] %vm1046, %v782
        %1072 = vst.msk [vmem:[#allocation2 + $0x48] sm:$0xff] %vm1046, %v783
        %1073 = vst.msk [vmem:[#allocation2 + $0x50] sm:$0xff] %vm1046, %v784
        %1074 = vst.msk [vmem:[#allocation2 + $0x58] sm:$0xff] %vm1046, %v785
        %1075 = vst.msk [vmem:[#allocation2 + $0x60] sm:$0xff] %vm1046, %v786
        %1076 = vst.msk [vmem:[#allocation2 + $0x68] sm:$0xff] %vm1046, %v787
        %1077 = vst.msk [vmem:[#allocation2 + $0x70] sm:$0xff] %vm1046, %v788
        %1078 = vst.msk [vmem:[#allocation2 + $0x78] sm:$0xff] %vm1046, %v789
        %p1079 = scmp.eq.s32.totalorder %s21, 1
        // Predicated region
        $region78: #{rnn_model_forward.10} parent=68 // pred_check
          %p1080 = pneg %p1079
        $region79: #{rnn_model_forward.10} parent=68 // pred_check_branch
          %1082 = sbr.rel (%p1080) target = $region81
        $region80: #{rnn_model_forward.10} parent=68 // pred_region
          %v1083 = vld [vmem:[#allocation3] sm:$0xff]
          %v1084 = vld [vmem:[#allocation3 + $0x8] sm:$0xff]
          %v1085 = vld [vmem:[#allocation3 + $0x10] sm:$0xff]
          %v1086 = vld [vmem:[#allocation3 + $0x18] sm:$0xff]
          %v1087 = vld [vmem:[#allocation3 + $0x20] sm:$0xff]
          %v1088 = vld [vmem:[#allocation3 + $0x28] sm:$0xff]
          %v1089 = vld [vmem:[#allocation3 + $0x30] sm:$0xff]
          %v1090 = vld [vmem:[#allocation3 + $0x38] sm:$0xff]
          %v1091 = vld [vmem:[#allocation3 + $0x40] sm:$0xff]
          %v1092 = vld [vmem:[#allocation3 + $0x48] sm:$0xff]
          %v1093 = vld [vmem:[#allocation3 + $0x50] sm:$0xff]
          %v1094 = vld [vmem:[#allocation3 + $0x58] sm:$0xff]
          %v1095 = vld [vmem:[#allocation3 + $0x60] sm:$0xff]
          %v1096 = vld [vmem:[#allocation3 + $0x68] sm:$0xff]
          %v1097 = vld [vmem:[#allocation3 + $0x70] sm:$0xff]
          %v1098 = vld [vmem:[#allocation3 + $0x78] sm:$0xff]
          %v1099 = vlog2.pop %v1083
          %v1100 = vmul.f32 %v1099, 0.6931472
          %v1101 = vlog2.pop %v1084
          %v1102 = vmul.f32 %v1101, 0.6931472
          %v1103 = vlog2.pop %v1085
          %v1104 = vmul.f32 %v1103, 0.6931472
          %v1105 = vlog2.pop %v1086
          %v1106 = vmul.f32 %v1105, 0.6931472
          %v1107 = vlog2.pop %v1087
          %v1108 = vmul.f32 %v1107, 0.6931472
          %v1109 = vlog2.pop %v1088
          %v1110 = vmul.f32 %v1109, 0.6931472
          %v1111 = vlog2.pop %v1089
          %v1112 = vmul.f32 %v1111, 0.6931472
          %v1113 = vlog2.pop %v1090
          %v1114 = vmul.f32 %v1113, 0.6931472
          %v1115 = vlog2.pop %v1091
          %v1116 = vmul.f32 %v1115, 0.6931472
          %v1117 = vlog2.pop %v1092
          %v1118 = vmul.f32 %v1117, 0.6931472
          %v1119 = vlog2.pop %v1093
          %v1120 = vmul.f32 %v1119, 0.6931472
          %v1121 = vlog2.pop %v1094
          %v1122 = vmul.f32 %v1121, 0.6931472
          %v1123 = vlog2.pop %v1095
          %v1124 = vmul.f32 %v1123, 0.6931472
          %v1125 = vlog2.pop %v1096
          %v1126 = vmul.f32 %v1125, 0.6931472
          %v1127 = vlog2.pop %v1097
          %v1128 = vmul.f32 %v1127, 0.6931472
          %v1129 = vlog2.pop %v1098
          %v1130 = vmul.f32 %v1129, 0.6931472
          %v1131 = vadd.f32 %v774, %v1100
          %v1132 = vadd.f32 %v775, %v1102
          %v1133 = vadd.f32 %v776, %v1104
          %v1134 = vadd.f32 %v777, %v1106
          %v1135 = vadd.f32 %v778, %v1108
          %v1136 = vadd.f32 %v779, %v1110
          %v1137 = vadd.f32 %v780, %v1112
          %v1138 = vadd.f32 %v781, %v1114
          %v1139 = vadd.f32 %v782, %v1116
          %v1140 = vadd.f32 %v783, %v1118
          %v1141 = vadd.f32 %v784, %v1120
          %v1142 = vadd.f32 %v785, %v1122
          %v1143 = vadd.f32 %v786, %v1124
          %v1144 = vadd.f32 %v787, %v1126
          %v1145 = vadd.f32 %v788, %v1128
          %v1146 = vadd.f32 %v789, %v1130
          %1147 = vst.msk [vmem:[%s358] sm:$0xff] %vm1046, %v1131
          %1148 = vst.msk [vmem:[%s358 + $0x8] sm:$0xff] %vm1046, %v1132
          %1149 = vst.msk [vmem:[%s358 + $0x10] sm:$0xff] %vm1046, %v1133
          %1150 = vst.msk [vmem:[%s358 + $0x18] sm:$0xff] %vm1046, %v1134
          %1151 = vst.msk [vmem:[%s358 + $0x20] sm:$0xff] %vm1046, %v1135
          %1152 = vst.msk [vmem:[%s358 + $0x28] sm:$0xff] %vm1046, %v1136
          %1153 = vst.msk [vmem:[%s358 + $0x30] sm:$0xff] %vm1046, %v1137
          %1154 = vst.msk [vmem:[%s358 + $0x38] sm:$0xff] %vm1046, %v1138
          %1155 = vst.msk [vmem:[%s358 + $0x40] sm:$0xff] %vm1046, %v1139
          %1156 = vst.msk [vmem:[%s358 + $0x48] sm:$0xff] %vm1046, %v1140
          %1157 = vst.msk [vmem:[%s358 + $0x50] sm:$0xff] %vm1046, %v1141
          %1158 = vst.msk [vmem:[%s358 + $0x58] sm:$0xff] %vm1046, %v1142
          %1159 = vst.msk [vmem:[%s358 + $0x60] sm:$0xff] %vm1046, %v1143
          %1160 = vst.msk [vmem:[%s358 + $0x68] sm:$0xff] %vm1046, %v1144
          %1161 = vst.msk [vmem:[%s358 + $0x70] sm:$0xff] %vm1046, %v1145
          %1162 = vst.msk [vmem:[%s358 + $0x78] sm:$0xff] %vm1046, %v1146
        $region81: #{rnn_model_forward.10} parent=68 // pred_fallthru
          _
        %s1163 = sand.u32 %s116, 1
        %s1164 = sand.u32 %s116, 1
        %s1165 = smul.addr %s1164, 64
        %s1166 = scalar_lea.vmem [#allocation5], %s1165
        %s1167 = smul.u32 16, %s20
        %p1168 = scmp.lt.s32.totalorder %s1167, 15
        %s1169 = scalar_select %p1168, %s1167, 15
        %s1170 = smul.addr %s1169, 8
        %s1171 = scalar_lea.vmem %s4, %s1170
        // Predicated region
        $region82: #{rnn_model_forward.10} parent=68 // pred_check
          %p1172 = pneg %p126
        $region83: #{rnn_model_forward.10} parent=68 // pred_check_branch
          %1174 = sbr.rel (%p1172) target = $region85
        $region84: #{rnn_model_forward.10} parent=68 // pred_region
          %s1175 = smul.u32 16, %s20
          %s1176 = smul.addr %s1175, 2
          %s1177 = sadd.s32 %s21, %s1176
          %s1178 = smul.addr %s1177, 4
          %s1179 = scalar_lea.vmem %s3, %s1178
          // Predicated region
          $region86: #{rnn_model_forward.10} parent=84 // pred_check
            _
          $region87: #{rnn_model_forward.10} parent=84 // pred_check_branch
            %1181 = sbr.rel (0) target = $region89
          $region88: #{rnn_model_forward.10} parent=84 // pred_region
            // Predicated region
            $region90: #{rnn_model_forward.10} parent=88 // pred_check
              _
            $region91: #{rnn_model_forward.10} parent=88 // pred_check_branch
              %1183 = sbr.rel target = $region93
            $region92: #{rnn_model_forward.10} parent=88 // pred_region
              // Predicated region
              $region105: #{rnn_model_forward.10} parent=92 // pred_check
                _
              $region106: #{rnn_model_forward.10} parent=92 // pred_check_branch
                %1229 = sbr.rel (0) target = $region108
              $region107: #{rnn_model_forward.10} parent=92 // pred_region
                loop: start=0, step=1, limit=1
                $region109: #{rnn_model_forward.10} parent=107 // loop_pre_header
                  _
                $region110: #{rnn_model_forward.10} parent=107 // loop_header
                  %s1231 = sphi 0, %s1235
                  %p1232 = scmp.ge.s32.totalorder %s1231, 1
                  %s1236 = sphi %s1166, %s1166
                  %s1237 = sphi %s1179, %s1179
                $region111: #{rnn_model_forward.10} parent=107 // loop_header_branch
                  %1234 = sbr.rel (%p1232) target = $region115
                $region112: #{rnn_model_forward.10} parent=107 // loop_body
                  _
                $region113: #{rnn_model_forward.10} parent=107 // loop_footer
                  %s1235 = sadd.s32 1, %s1231
                $region114: #{rnn_model_forward.10} parent=107 // loop_footer_branch
                  %1230 = sbr.rel target = $region110
                $region115: #{rnn_model_forward.10} parent=107 // loop_exit
                  _
                %s1239 = ssub.s32 16, 1
                loop: start=0, step=1, limit=1
                $region116: #{rnn_model_forward.10} parent=107 // loop_pre_header
                  _
                $region117: #{rnn_model_forward.10} parent=107 // loop_header
                  %s1241 = sphi 0, %s1245
                  %p1242 = scmp.ge.s32.totalorder %s1241, 1
                  %s1246 = sphi %s1166, %s1166
                  %s1247 = sphi %s1179, %s1179
                $region118: #{rnn_model_forward.10} parent=107 // loop_header_branch
                  %1244 = sbr.rel (%p1242) target = $region122
                $region119: #{rnn_model_forward.10} parent=107 // loop_body
                  %v1248 = vld [vmem:[%s1246] sm:%s1239]
                  %1249 = vst [vmem:[%s1247] sm:%s1239] %v1248
                  %v1250 = vld [vmem:[%s1246 + $0x4] sm:%s1239]
                  %1251 = vst [vmem:[%s1247 + $0x8] sm:%s1239] %v1250
                  %v1252 = vld [vmem:[%s1246 + $0x8] sm:%s1239]
                  %1253 = vst [vmem:[%s1247 + $0x10] sm:%s1239] %v1252
                  %v1254 = vld [vmem:[%s1246 + $0xc] sm:%s1239]
                  %1255 = vst [vmem:[%s1247 + $0x18] sm:%s1239] %v1254
                  %v1256 = vld [vmem:[%s1246 + $0x10] sm:%s1239]
                  %1257 = vst [vmem:[%s1247 + $0x20] sm:%s1239] %v1256
                  %v1258 = vld [vmem:[%s1246 + $0x14] sm:%s1239]
                  %1259 = vst [vmem:[%s1247 + $0x28] sm:%s1239] %v1258
                  %v1260 = vld [vmem:[%s1246 + $0x18] sm:%s1239]
                  %1261 = vst [vmem:[%s1247 + $0x30] sm:%s1239] %v1260
                  %v1262 = vld [vmem:[%s1246 + $0x1c] sm:%s1239]
                  %1263 = vst [vmem:[%s1247 + $0x38] sm:%s1239] %v1262
                  %v1264 = vld [vmem:[%s1246 + $0x20] sm:%s1239]
                  %1265 = vst [vmem:[%s1247 + $0x40] sm:%s1239] %v1264
                  %v1266 = vld [vmem:[%s1246 + $0x24] sm:%s1239]
                  %1267 = vst [vmem:[%s1247 + $0x48] sm:%s1239] %v1266
                  %v1268 = vld [vmem:[%s1246 + $0x28] sm:%s1239]
                  %1269 = vst [vmem:[%s1247 + $0x50] sm:%s1239] %v1268
                  %v1270 = vld [vmem:[%s1246 + $0x2c] sm:%s1239]
                  %1271 = vst [vmem:[%s1247 + $0x58] sm:%s1239] %v1270
                  %v1272 = vld [vmem:[%s1246 + $0x30] sm:%s1239]
                  %1273 = vst [vmem:[%s1247 + $0x60] sm:%s1239] %v1272
                  %v1274 = vld [vmem:[%s1246 + $0x34] sm:%s1239]
                  %1275 = vst [vmem:[%s1247 + $0x68] sm:%s1239] %v1274
                  %v1276 = vld [vmem:[%s1246 + $0x38] sm:%s1239]
                  %1277 = vst [vmem:[%s1247 + $0x70] sm:%s1239] %v1276
                  %v1278 = vld [vmem:[%s1246 + $0x3c] sm:%s1239]
                  %1279 = vst [vmem:[%s1247 + $0x78] sm:%s1239] %v1278
                $region120: #{rnn_model_forward.10} parent=107 // loop_footer
                  %s1245 = sadd.s32 1, %s1241
                $region121: #{rnn_model_forward.10} parent=107 // loop_footer_branch
                  %1240 = sbr.rel target = $region117
                $region122: #{rnn_model_forward.10} parent=107 // loop_exit
                  _
              $region108: #{rnn_model_forward.10} parent=92 // pred_fallthru
                _
            $region93: #{rnn_model_forward.10} parent=88 // pred_fallthru
              _
            // Predicated region
            $region94: #{rnn_model_forward.10} parent=88 // pred_check
              _
            $region95: #{rnn_model_forward.10} parent=88 // pred_check_branch
              %1185 = sbr.rel (0) target = $region97
            $region96: #{rnn_model_forward.10} parent=88 // pred_region
              %s1187 = ssub.s32 16, 1
              loop: start=0, step=1, limit=1
              $region98: #{rnn_model_forward.10} parent=96 // loop_pre_header
                _
              $region99: #{rnn_model_forward.10} parent=96 // loop_header
                %s1189 = sphi 0, %s1193
                %p1190 = scmp.ge.s32.totalorder %s1189, 1
                %s1194 = sphi %s1166, %s1166
                %s1195 = sphi %s1179, %s1179
              $region100: #{rnn_model_forward.10} parent=96 // loop_header_branch
                %1192 = sbr.rel (%p1190) target = $region104
              $region101: #{rnn_model_forward.10} parent=96 // loop_body
                %v1196 = vld [vmem:[%s1194] sm:%s1187]
                %1197 = vst [vmem:[%s1195] sm:%s1187] %v1196
                %v1198 = vld [vmem:[%s1194 + $0x4] sm:%s1187]
                %1199 = vst [vmem:[%s1195 + $0x8] sm:%s1187] %v1198
                %v1200 = vld [vmem:[%s1194 + $0x8] sm:%s1187]
                %1201 = vst [vmem:[%s1195 + $0x10] sm:%s1187] %v1200
                %v1202 = vld [vmem:[%s1194 + $0xc] sm:%s1187]
                %1203 = vst [vmem:[%s1195 + $0x18] sm:%s1187] %v1202
                %v1204 = vld [vmem:[%s1194 + $0x10] sm:%s1187]
                %1205 = vst [vmem:[%s1195 + $0x20] sm:%s1187] %v1204
                %v1206 = vld [vmem:[%s1194 + $0x14] sm:%s1187]
                %1207 = vst [vmem:[%s1195 + $0x28] sm:%s1187] %v1206
                %v1208 = vld [vmem:[%s1194 + $0x18] sm:%s1187]
                %1209 = vst [vmem:[%s1195 + $0x30] sm:%s1187] %v1208
                %v1210 = vld [vmem:[%s1194 + $0x1c] sm:%s1187]
                %1211 = vst [vmem:[%s1195 + $0x38] sm:%s1187] %v1210
                %v1212 = vld [vmem:[%s1194 + $0x20] sm:%s1187]
                %1213 = vst [vmem:[%s1195 + $0x40] sm:%s1187] %v1212
                %v1214 = vld [vmem:[%s1194 + $0x24] sm:%s1187]
                %1215 = vst [vmem:[%s1195 + $0x48] sm:%s1187] %v1214
                %v1216 = vld [vmem:[%s1194 + $0x28] sm:%s1187]
                %1217 = vst [vmem:[%s1195 + $0x50] sm:%s1187] %v1216
                %v1218 = vld [vmem:[%s1194 + $0x2c] sm:%s1187]
                %1219 = vst [vmem:[%s1195 + $0x58] sm:%s1187] %v1218
                %v1220 = vld [vmem:[%s1194 + $0x30] sm:%s1187]
                %1221 = vst [vmem:[%s1195 + $0x60] sm:%s1187] %v1220
                %v1222 = vld [vmem:[%s1194 + $0x34] sm:%s1187]
                %1223 = vst [vmem:[%s1195 + $0x68] sm:%s1187] %v1222
                %v1224 = vld [vmem:[%s1194 + $0x38] sm:%s1187]
                %1225 = vst [vmem:[%s1195 + $0x70] sm:%s1187] %v1224
                %v1226 = vld [vmem:[%s1194 + $0x3c] sm:%s1187]
                %1227 = vst [vmem:[%s1195 + $0x78] sm:%s1187] %v1226
              $region102: #{rnn_model_forward.10} parent=96 // loop_footer
                %s1193 = sadd.s32 1, %s1189
              $region103: #{rnn_model_forward.10} parent=96 // loop_footer_branch
                %1188 = sbr.rel target = $region99
              $region104: #{rnn_model_forward.10} parent=96 // loop_exit
                _
            $region97: #{rnn_model_forward.10} parent=88 // pred_fallthru
              _
          $region89: #{rnn_model_forward.10} parent=84 // pred_fallthru
            _
          %1280 = vnop
        $region85: #{rnn_model_forward.10} parent=68 // pred_fallthru
          _
        // Predicated region
        $region123: #{rnn_model_forward.10} parent=68 // pred_check
          %p1281 = pneg %p152
        $region124: #{rnn_model_forward.10} parent=68 // pred_check_branch
          %1283 = sbr.rel (%p1281) target = $region126
        $region125: #{rnn_model_forward.10} parent=68 // pred_region
          %s1284 = smul.u32 16, %s20
        $region126: #{rnn_model_forward.10} parent=68 // pred_fallthru
          _
        // Predicated region
        $region127: #{rnn_model_forward.10} parent=68 // pred_check
          %p1285 = pneg %p152
        $region128: #{rnn_model_forward.10} parent=68 // pred_check_branch
          %1287 = sbr.rel (%p1285) target = $region130
        $region129: #{rnn_model_forward.10} parent=68 // pred_region
          %s1288 = smul.u32 16, %s20
          %p1289 = scmp.lt.s32.totalorder %s1288, 15
          %s1290 = scalar_select %p1289, %s1288, 15
          %s1291 = smul.addr %s1290, 8
          %s1292 = scalar_lea.vmem %s4, %s1291
        $region130: #{rnn_model_forward.10} parent=68 // pred_fallthru
          _
      $region69: #{rnn_model_forward.10} parent=5 // pred_fallthru
        _
      %p1293 = scmp.le.s32.totalorder 2, %s11
      // Predicated region
      $region131: #{rnn_model_forward.10} parent=5 // pred_check
        %p1294 = pneg %p1293
      $region132: #{rnn_model_forward.10} parent=5 // pred_check_branch
        %1296 = sbr.rel (%p1294) target = $region134
      $region133: #{rnn_model_forward.10} parent=5 // pred_region
        %s1297 = ssub.s32 %s11, 2
        // Predicated region
        $region135: #{rnn_model_forward.10} parent=133 // pred_check
          %p1298 = pneg %p132
        $region136: #{rnn_model_forward.10} parent=133 // pred_check_branch
          %1300 = sbr.rel (%p1298) target = $region138
        $region137: #{rnn_model_forward.10} parent=133 // pred_region
          %s1301 = sand.u32 %s117, 1
          %s1302 = sand.u32 %s117, 1
          %s1303 = smul.addr %s1302, 64
          %s1304 = scalar_lea.vmem [#allocation5], %s1303
        $region138: #{rnn_model_forward.10} parent=133 // pred_fallthru
          _
      $region134: #{rnn_model_forward.10} parent=5 // pred_fallthru
        _
    $region6: #{rnn_model_forward.10} parent=1 // loop_footer
      %s15 = sadd.s32 1, %s11
    $region7: #{rnn_model_forward.10} parent=1 // loop_footer_branch
      %10 = sbr.rel target = $region3
    $region8: #{rnn_model_forward.10} parent=1 // loop_exit
      _

</llo_original>
